<compile_context>
chip_gen: v7x
topology: tpu7x:2x2x1
jax: 0.10.0
libtpu: 0.0.40
codegen_flags: <defaults>
</compile_context>

<pallas_src>
import jax
import jax.numpy as jnp
from jax.experimental import pallas as pl
from jax.experimental.pallas import tpu as pltpu


# ----------------------------- model config ---------------------------------
STATE_DIM = 8
CONTROL_DIM = 4
HIDDEN_DIMS = (32, 32)
NUM_TIME_INTERVAL = 8
DT = 0.1
ALPHA = 0.5      # config.alpha (not trained here)
KAPPA = 1.0      # config.kappa (not trained here)

_RUN_COST_SCALE = DT * KAPPA * 0.5   # folded compile-time constant

_W_ROWS = 144    # bf16 weight-slab rows (16-row-aligned sections)
_F_ROWS = 24     # f32 constants-slab rows


# ------------------------------- kernel --------------------------------------
def fbsde_kernel(dw_ref, w_ref, f_ref, scal_out, traj_out, ctrl_out):
    bsp = dw_ref.shape[1]
    h0d, h1d = HIDDEN_DIMS
    S, C = STATE_DIM, CONTROL_DIM

    # Loop-invariant bf16 matmul weights (static slab slices, loaded once).
    wih0 = w_ref[0:S, :]            # (S,  4H0)  i/f/o cols pre-scaled by 0.5
    whh0 = w_ref[16:48, :]          # (H0, 4H0)
    wih1 = w_ref[48:80, :]          # (H0, 4H1)
    whh1 = w_ref[80:112, :]         # (H1, 4H1)
    whead = w_ref[112:144, :]       # (H1, 128): [Wvx^T|Wvxx^T|u-proj|xu-proj|0pad]

    # f32 constants.
    a_ext = f_ref[0:8, 0:S]         # I + DT*A^T   (identity folded)
    b0 = f_ref[8:9, :]              # (1, 4H0)     i/f/o pre-scaled by 0.5
    b1 = f_ref[9:10, :]             # (1, 4H1)
    bhead = f_ref[10:11, :]         # (1, 128)     head bias (zero-padded)

    # State init: broadcast instead of ones * param (no VPU multiplies).
    x = jnp.broadcast_to(f_ref[11:12, 0:S], (bsp, S))
    V = jnp.broadcast_to(f_ref[12:13, 0:1], (bsp, 1))
    h0 = jnp.broadcast_to(f_ref[13:14, 0:h0d], (bsp, h0d))
    c0 = jnp.broadcast_to(f_ref[14:15, 0:h0d], (bsp, h0d))
    h1 = jnp.broadcast_to(f_ref[15:16, 0:h1d], (bsp, h1d))
    c1 = jnp.broadcast_to(f_ref[16:17, 0:h1d], (bsp, h1d))

    def cell(x_in, h, c, wih, whh, b, hidden):
        # Split dots (no lane concat): the h@Whh matmul does not wait on x_in.
        gates = (jnp.dot(x_in.astype(jnp.bfloat16), wih,
                         preferred_element_type=jnp.float32)
                 + jnp.dot(h.astype(jnp.bfloat16), whh,
                           preferred_element_type=jnp.float32)
                 + b)
        # Single full-width EUP pass: i/f/o columns hold z/2, so
        # sigmoid(z) = 0.5*tanh(z/2) + 0.5; the g column holds z for tanh(z).
        th = jnp.tanh(gates)
        i = 0.5 * th[:, 0 * hidden:1 * hidden] + 0.5
        f = 0.5 * th[:, 1 * hidden:2 * hidden] + 0.5
        g = th[:, 2 * hidden:3 * hidden]
        o = 0.5 * th[:, 3 * hidden:4 * hidden] + 0.5
        c_new = f * c + i * g
        h_new = o * jnp.tanh(c_new)
        return h_new, c_new

    def lstm_layer(x_in, h0, c0, h1, c1):
        h0n, c0n = cell(x_in, h0, c0, wih0, whh0, b0, h0d)
        h1n, c1n = cell(h0n, h1, c1, wih1, whh1, b1, h1d)
        head = jnp.dot(h1n.astype(jnp.bfloat16), whead,
                       preferred_element_type=jnp.float32) + bhead
        return head, h0n, c0n, h1n, c1n

    traj_out[0] = x

    # Static time loop (NUM_TIME_INTERVAL is a compile-time constant).
    for t in range(NUM_TIME_INTERVAL):
        head, h0, c0, h1, c1 = lstm_layer(x, h0, c0, h1, c1)
        vx = head[:, 0:S]
        u = head[:, 2 * S:2 * S + C]           # = -alpha * Vx @ B   (folded)
        xu = head[:, 2 * S + C:3 * S + C]      # = u @ (DT * B^T)    (folded)

        dw_t = dw_ref[t]

        # TODO(synk): ad_stoch_search (sampling-based Hamiltonian minimization)
        # has no clean Pallas equivalent; deterministic greedy surrogate
        # u = -alpha * Vx @ B is folded into the head matmul above.
        # TODO(synk): dynamics.value_and_dynamics_prop is external; simple
        # linear-Gaussian Euler surrogate with quadratic running cost.
        V = V + _RUN_COST_SCALE * jnp.sum(u * u, axis=-1, keepdims=True) \
              + jnp.sum(vx * dw_t, axis=-1, keepdims=True)
        x = jnp.dot(x, a_ext, preferred_element_type=jnp.float32) + xu + dw_t

        traj_out[t + 1] = x
        ctrl_out[t] = u

    head, _, _, _, _ = lstm_layer(x, h0, c0, h1, c1)
    vx = head[:, 0:S]
    vxx = head[:, S:2 * S]

    # Packed per-batch output: [x | Vx | Vxx_col | V]  -> single store / DMA.
    scal_out[...] = jnp.concatenate([x, vx, vxx, V], axis=-1)


# ------------------------------ parameters -----------------------------------
def init_params(key):
    """Deterministic parameter init mirroring the PyTorch module shapes."""
    keys = jax.random.split(key, 16)
    params = {}

    def uni(k, shape, bound):
        return jax.random.uniform(k, shape, jnp.float32, -bound, bound)

    h0d, h1d = HIDDEN_DIMS
    s0 = 1.0 / jnp.sqrt(h0d)
    params["wih0"] = uni(keys[0], (4 * h0d, STATE_DIM), s0)
    params["whh0"] = uni(keys[1], (4 * h0d, h0d), s0)
    params["bih0"] = uni(keys[2], (4 * h0d,), s0)
    params["bhh0"] = uni(keys[3], (4 * h0d,), s0)

    s1 = 1.0 / jnp.sqrt(h1d)
    params["wih1"] = uni(keys[4], (4 * h1d, h0d), s1)
    params["whh1"] = uni(keys[5], (4 * h1d, h1d), s1)
    params["bih1"] = uni(keys[6], (4 * h1d,), s1)
    params["bhh1"] = uni(keys[7], (4 * h1d,), s1)

    sf = 1.0 / jnp.sqrt(h1d)
    params["wvx"] = uni(keys[8], (STATE_DIM, h1d), sf)
    params["bvx"] = uni(keys[9], (STATE_DIM,), sf)
    params["wvxx"] = uni(keys[10], (STATE_DIM, h1d), sf)
    params["bvxx"] = uni(keys[11], (STATE_DIM,), sf)

    params["v_init"] = jax.random.uniform(keys[12], (1, 1), jnp.float32)
    params["h0_init"] = jnp.zeros((1, h0d), jnp.float32)
    params["c0_init"] = jnp.zeros((1, h0d), jnp.float32)
    params["h1_init"] = jnp.zeros((1, h1d), jnp.float32)
    params["c1_init"] = jnp.zeros((1, h1d), jnp.float32)

    params["x0"] = jax.random.normal(keys[13], (1, STATE_DIM), jnp.float32)
    params["A"] = 0.1 * jax.random.normal(keys[14], (STATE_DIM, STATE_DIM),
                                          jnp.float32)
    params["B"] = 0.1 * jax.random.normal(keys[15], (STATE_DIM, CONTROL_DIM),
                                          jnp.float32)
    return params


def _pack_params(params):
    """Fold constants into weights and pack everything into two slabs."""
    h0d, h1d = HIDDEN_DIMS
    S, C = STATE_DIM, CONTROL_DIM

    def gate_scale(hidden):
        # sigmoid(z) = 0.5*(1 + tanh(z/2)): pre-scale i/f/o gate columns by 0.5.
        return jnp.concatenate([
            jnp.full((2 * hidden,), 0.5, jnp.float32),
            jnp.ones((hidden,), jnp.float32),
            jnp.full((hidden,), 0.5, jnp.float32)])

    s0 = gate_scale(h0d)
    wih0_t = params["wih0"].T * s0[None, :]
    whh0_t = params["whh0"].T * s0[None, :]
    b0 = (params["bih0"] + params["bhh0"]) * s0

    s1 = gate_scale(h1d)
    wih1_t = params["wih1"].T * s1[None, :]
    whh1_t = params["whh1"].T * s1[None, :]
    b1 = (params["bih1"] + params["bhh1"]) * s1

    # Head with control / dynamics projections folded in.
    bneg = (-ALPHA) * params["B"]          # (S, C): u = Vx @ bneg
    b_dt = DT * params["B"].T              # (C, S): xu = u @ b_dt
    wvx_t = params["wvx"].T                # (H1, S)
    wvxx_t = params["wvxx"].T              # (H1, S)
    wu = wvx_t @ bneg                      # (H1, C)
    wxu = wu @ b_dt                        # (H1, S)
    whead = jnp.concatenate([wvx_t, wvxx_t, wu, wxu], axis=1)   # (H1, 3S+C)

    bu = params["bvx"] @ bneg
    bxu = bu @ b_dt
    bhead = jnp.concatenate([params["bvx"], params["bvxx"], bu, bxu])

    a_ext = jnp.eye(S, dtype=jnp.float32) + DT * params["A"].T  # identity folded

    def pad_rc(a, rows, cols=128):
        return jnp.pad(a, ((0, rows - a.shape[0]), (0, cols - a.shape[1])))

    def row(a):
        a = jnp.reshape(a.astype(jnp.float32), (1, -1))
        return jnp.pad(a, ((0, 0), (0, 128 - a.shape[1])))

    # bf16 matmul-weight slab; sections on 16-row (bf16 tile) boundaries.
    w_slab = jnp.concatenate([
        pad_rc(wih0_t, 16),     # rows   0: 16  (first S rows valid)
        pad_rc(whh0_t, 32),     # rows  16: 48
        pad_rc(wih1_t, 32),     # rows  48: 80
        pad_rc(whh1_t, 32),     # rows  80:112
        pad_rc(whead, 32),      # rows 112:144  (first 3S+C cols valid)
    ], axis=0).astype(jnp.bfloat16)                              # (144, 128)

    # f32 constants slab.
    f_slab = jnp.concatenate([
        pad_rc(a_ext, 8),            # rows 0:8
        row(b0),                     # row 8
        row(b1),                     # row 9
        row(bhead),                  # row 10
        row(params["x0"]),           # row 11
        row(params["v_init"]),       # row 12
        row(params["h0_init"]),      # row 13
        row(params["c0_init"]),      # row 14
        row(params["h1_init"]),      # row 15
        row(params["c1_init"]),      # row 16
    ], axis=0)
    f_slab = jnp.pad(f_slab, ((0, _F_ROWS - f_slab.shape[0]), (0, 0)))
    return w_slab, f_slab


# ------------------------------- wrapper --------------------------------------
@jax.jit
def fbsde_forward(dw, params):
    """dw: (bs, state_dim, T) float32, PyTorch convention."""
    bs = dw.shape[0]
    T = dw.shape[2]
    S, C = STATE_DIM, CONTROL_DIM

    # glue: lane-dense time steps, padded batch, fused / pre-scaled weights
    dw_t = jnp.transpose(dw, (2, 0, 1)).astype(jnp.float32)   # (T, bs, S)
    bsp = ((bs + 7) // 8) * 8                                 # sublane multiple
    if bsp != bs:
        dw_t = jnp.pad(dw_t, ((0, 0), (0, bsp - bs), (0, 0)))

    w_slab, f_slab = _pack_params(params)

    vmem = pl.BlockSpec(memory_space=pltpu.MemorySpace.VMEM)
    out_shape = (
        jax.ShapeDtypeStruct((bsp, 3 * S + 1), jnp.float32),         # [x|Vx|Vxx|V]
        jax.ShapeDtypeStruct((T + 1, bsp, S), jnp.float32),          # traj
        jax.ShapeDtypeStruct((T, bsp, C), jnp.float32),              # controls
    )

    # TODO(synk): at production batch sizes add a batch grid axis with
    # dimension_semantics=("parallel",) (uses v7x's 2nd TensorCore) and flip
    # to a batch-on-lanes layout; it is pointless at bs <= 8.
    scal, traj, ctrl = pl.pallas_call(
        fbsde_kernel,
        out_shape=out_shape,
        in_specs=[vmem, vmem, vmem],
        out_specs=(vmem, vmem, vmem),
    )(dw_t, w_slab, f_slab)

    x = scal[:bs, 0:S]
    Vx = scal[:bs, S:2 * S]
    Vxx = scal[:bs, 2 * S:3 * S]
    V = scal[:bs, 3 * S:3 * S + 1]
    return x, V, Vx, Vxx, traj[:, :bs, :], ctrl[:, :bs, :]


if __name__ == "__main__":
    key = jax.random.PRNGKey(0)
    pkey, dkey = jax.random.split(key)
    params = init_params(pkey)

    bs = 2
    dw = 0.05 * jax.random.normal(
        dkey, (bs, STATE_DIM, NUM_TIME_INTERVAL), jnp.float32)

    x, V, Vx, Vxx_col, traj, controls = fbsde_forward(dw, params)
    jax.block_until_ready((x, V, Vx, Vxx_col, traj, controls))

    assert x.shape == (bs, STATE_DIM)
    assert V.shape == (bs, 1)
    assert Vx.shape == (bs, STATE_DIM)
    assert Vxx_col.shape == (bs, STATE_DIM)
    assert traj.shape == (NUM_TIME_INTERVAL + 1, bs, STATE_DIM)
    assert controls.shape == (NUM_TIME_INTERVAL, bs, CONTROL_DIM)
    assert bool(jnp.all(jnp.isfinite(x))) and bool(jnp.all(jnp.isfinite(V)))

    print("KERNEL_OK")
</pallas_src>

<mosaic_0001>
module attributes {stable_mosaic.version = 11 : i64} {
  func.func @fbsde_kernel(%arg0: memref<8x8x8xf32, #tpu.memory_space<vmem>>, %arg1: memref<144x128xbf16, #tpu.memory_space<vmem>>, %arg2: memref<24x128xf32, #tpu.memory_space<vmem>>, %arg3: memref<8x25xf32, #tpu.memory_space<vmem>>, %arg4: memref<9x8x8xf32, #tpu.memory_space<vmem>>, %arg5: memref<8x8x4xf32, #tpu.memory_space<vmem>>) attributes {dimension_semantics = [], scalar_prefetch = 0 : i64, scratch_operands = 0 : i64, tpu.core_type = #tpu.core_type<tc>} {
    %c0 = arith.constant 0 : index
    %c0_0 = arith.constant 0 : index
    %0 = vector.load %arg1[%c0, %c0_0] : memref<144x128xbf16, #tpu.memory_space<vmem>>, vector<8x128xbf16>
    %c16 = arith.constant 16 : index
    %c0_1 = arith.constant 0 : index
    %1 = vector.load %arg1[%c16, %c0_1] : memref<144x128xbf16, #tpu.memory_space<vmem>>, vector<32x128xbf16>
    %c48 = arith.constant 48 : index
    %c0_2 = arith.constant 0 : index
    %2 = vector.load %arg1[%c48, %c0_2] : memref<144x128xbf16, #tpu.memory_space<vmem>>, vector<32x128xbf16>
    %c80 = arith.constant 80 : index
    %c0_3 = arith.constant 0 : index
    %3 = vector.load %arg1[%c80, %c0_3] : memref<144x128xbf16, #tpu.memory_space<vmem>>, vector<32x128xbf16>
    %c112 = arith.constant 112 : index
    %c0_4 = arith.constant 0 : index
    %4 = vector.load %arg1[%c112, %c0_4] : memref<144x128xbf16, #tpu.memory_space<vmem>>, vector<32x128xbf16>
    %c0_5 = arith.constant 0 : index
    %c0_6 = arith.constant 0 : index
    %5 = vector.load %arg2[%c0_5, %c0_6] : memref<24x128xf32, #tpu.memory_space<vmem>>, vector<8x8xf32>
    %c8 = arith.constant 8 : index
    %c0_7 = arith.constant 0 : index
    %6 = vector.load %arg2[%c8, %c0_7] : memref<24x128xf32, #tpu.memory_space<vmem>>, vector<1x128xf32>
    %c9 = arith.constant 9 : index
    %c0_8 = arith.constant 0 : index
    %7 = vector.load %arg2[%c9, %c0_8] : memref<24x128xf32, #tpu.memory_space<vmem>>, vector<1x128xf32>
    %c10 = arith.constant 10 : index
    %c0_9 = arith.constant 0 : index
    %8 = vector.load %arg2[%c10, %c0_9] : memref<24x128xf32, #tpu.memory_space<vmem>>, vector<1x128xf32>
    %c11 = arith.constant 11 : index
    %c0_10 = arith.constant 0 : index
    %9 = vector.load %arg2[%c11, %c0_10] : memref<24x128xf32, #tpu.memory_space<vmem>>, vector<1x8xf32>
    %10 = vector.shape_cast %9 : vector<1x8xf32> to vector<1x8xf32>
    %11 = vector.broadcast %10 : vector<1x8xf32> to vector<8x8xf32>
    %c12 = arith.constant 12 : index
    %c0_11 = arith.constant 0 : index
    %12 = vector.load %arg2[%c12, %c0_11] : memref<24x128xf32, #tpu.memory_space<vmem>>, vector<1x1xf32>
    %13 = vector.shape_cast %12 : vector<1x1xf32> to vector<1x1xf32>
    %14 = vector.broadcast %13 : vector<1x1xf32> to vector<8x1xf32>
    %c13 = arith.constant 13 : index
    %c0_12 = arith.constant 0 : index
    %15 = vector.load %arg2[%c13, %c0_12] : memref<24x128xf32, #tpu.memory_space<vmem>>, vector<1x32xf32>
    %16 = vector.shape_cast %15 : vector<1x32xf32> to vector<1x32xf32>
    %17 = vector.broadcast %16 : vector<1x32xf32> to vector<8x32xf32>
    %c14 = arith.constant 14 : index
    %c0_13 = arith.constant 0 : index
    %18 = vector.load %arg2[%c14, %c0_13] : memref<24x128xf32, #tpu.memory_space<vmem>>, vector<1x32xf32>
    %19 = vector.shape_cast %18 : vector<1x32xf32> to vector<1x32xf32>
    %20 = vector.broadcast %19 : vector<1x32xf32> to vector<8x32xf32>
    %c15 = arith.constant 15 : index
    %c0_14 = arith.constant 0 : index
    %21 = vector.load %arg2[%c15, %c0_14] : memref<24x128xf32, #tpu.memory_space<vmem>>, vector<1x32xf32>
    %22 = vector.shape_cast %21 : vector<1x32xf32> to vector<1x32xf32>
    %23 = vector.broadcast %22 : vector<1x32xf32> to vector<8x32xf32>
    %c16_15 = arith.constant 16 : index
    %c0_16 = arith.constant 0 : index
    %24 = vector.load %arg2[%c16_15, %c0_16] : memref<24x128xf32, #tpu.memory_space<vmem>>, vector<1x32xf32>
    %25 = vector.shape_cast %24 : vector<1x32xf32> to vector<1x32xf32>
    %26 = vector.broadcast %25 : vector<1x32xf32> to vector<8x32xf32>
    %c0_17 = arith.constant 0 : index
    %c0_18 = arith.constant 0 : index
    %c0_19 = arith.constant 0 : index
    %27 = vector.load %arg4[%c0_17, %c0_18, %c0_19] : memref<9x8x8xf32, #tpu.memory_space<vmem>>, vector<1x8x8xf32>
    %28 = vector.shape_cast %27 : vector<1x8x8xf32> to vector<8x8xf32>
    %29 = vector.shape_cast %11 : vector<8x8xf32> to vector<1x8x8xf32>
    tpu.vector_store %arg4[%c0_17, %c0_18, %c0_19], %29 {strides = array<i32>} : memref<9x8x8xf32, #tpu.memory_space<vmem>>, vector<1x8x8xf32>,
    %30 = arith.truncf %11 : vector<8x8xf32> to vector<8x8xbf16>
    %cst = arith.constant dense<0.000000e+00> : vector<8x128xf32>
    %31 = tpu.matmul %30, %0, %cst {dimension_numbers = #tpu.dot_dimension_numbers<[1], [0], [0], [1], [0, 0, 1, 1], [], []>} : vector<8x8xbf16>, vector<8x128xbf16>, vector<8x128xf32> -> vector<8x128xf32>
    %32 = arith.truncf %17 : vector<8x32xf32> to vector<8x32xbf16>
    %cst_20 = arith.constant dense<0.000000e+00> : vector<8x128xf32>
    %33 = tpu.matmul %32, %1, %cst_20 {dimension_numbers = #tpu.dot_dimension_numbers<[1], [0], [0], [1], [0, 0, 1, 1], [], []>} : vector<8x32xbf16>, vector<32x128xbf16>, vector<8x128xf32> -> vector<8x128xf32>
    %34 = arith.addf %31, %33 : vector<8x128xf32>
    %35 = vector.broadcast %6 : vector<1x128xf32> to vector<8x128xf32>
    %36 = arith.addf %34, %35 : vector<8x128xf32>
    %37 = math.tanh %36 : vector<8x128xf32>
    %38 = vector.extract_strided_slice %37 {offsets = [0, 0], sizes = [8, 32], strides = [1, 1]} : vector<8x128xf32> to vector<8x32xf32>
    %cst_21 = arith.constant 5.000000e-01 : f32
    %39 = vector.broadcast %cst_21 : f32 to vector<8x32xf32>
    %40 = arith.mulf %39, %38 : vector<8x32xf32>
    %cst_22 = arith.constant 5.000000e-01 : f32
    %41 = vector.broadcast %cst_22 : f32 to vector<8x32xf32>
    %42 = arith.addf %40, %41 : vector<8x32xf32>
    %43 = vector.extract_strided_slice %37 {offsets = [0, 32], sizes = [8, 32], strides = [1, 1]} : vector<8x128xf32> to vector<8x32xf32>
    %cst_23 = arith.constant 5.000000e-01 : f32
    %44 = vector.broadcast %cst_23 : f32 to vector<8x32xf32>
    %45 = arith.mulf %44, %43 : vector<8x32xf32>
    %cst_24 = arith.constant 5.000000e-01 : f32
    %46 = vector.broadcast %cst_24 : f32 to vector<8x32xf32>
    %47 = arith.addf %45, %46 : vector<8x32xf32>
    %48 = vector.extract_strided_slice %37 {offsets = [0, 64], sizes = [8, 32], strides = [1, 1]} : vector<8x128xf32> to vector<8x32xf32>
    %49 = vector.extract_strided_slice %37 {offsets = [0, 96], sizes = [8, 32], strides = [1, 1]} : vector<8x128xf32> to vector<8x32xf32>
    %cst_25 = arith.constant 5.000000e-01 : f32
    %50 = vector.broadcast %cst_25 : f32 to vector<8x32xf32>
    %51 = arith.mulf %50, %49 : vector<8x32xf32>
    %cst_26 = arith.constant 5.000000e-01 : f32
    %52 = vector.broadcast %cst_26 : f32 to vector<8x32xf32>
    %53 = arith.addf %51, %52 : vector<8x32xf32>
    %54 = arith.mulf %47, %20 : vector<8x32xf32>
    %55 = arith.mulf %42, %48 : vector<8x32xf32>
    %56 = arith.addf %54, %55 : vector<8x32xf32>
    %57 = math.tanh %56 : vector<8x32xf32>
    %58 = arith.mulf %53, %57 : vector<8x32xf32>
    %59 = arith.truncf %58 : vector<8x32xf32> to vector<8x32xbf16>
    %cst_27 = arith.constant dense<0.000000e+00> : vector<8x128xf32>
    %60 = tpu.matmul %59, %2, %cst_27 {dimension_numbers = #tpu.dot_dimension_numbers<[1], [0], [0], [1], [0, 0, 1, 1], [], []>} : vector<8x32xbf16>, vector<32x128xbf16>, vector<8x128xf32> -> vector<8x128xf32>
    %61 = arith.truncf %23 : vector<8x32xf32> to vector<8x32xbf16>
    %cst_28 = arith.constant dense<0.000000e+00> : vector<8x128xf32>
    %62 = tpu.matmul %61, %3, %cst_28 {dimension_numbers = #tpu.dot_dimension_numbers<[1], [0], [0], [1], [0, 0, 1, 1], [], []>} : vector<8x32xbf16>, vector<32x128xbf16>, vector<8x128xf32> -> vector<8x128xf32>
    %63 = arith.addf %60, %62 : vector<8x128xf32>
    %64 = vector.broadcast %7 : vector<1x128xf32> to vector<8x128xf32>
    %65 = arith.addf %63, %64 : vector<8x128xf32>
    %66 = math.tanh %65 : vector<8x128xf32>
    %67 = vector.extract_strided_slice %66 {offsets = [0, 0], sizes = [8, 32], strides = [1, 1]} : vector<8x128xf32> to vector<8x32xf32>
    %cst_29 = arith.constant 5.000000e-01 : f32
    %68 = vector.broadcast %cst_29 : f32 to vector<8x32xf32>
    %69 = arith.mulf %68, %67 : vector<8x32xf32>
    %cst_30 = arith.constant 5.000000e-01 : f32
    %70 = vector.broadcast %cst_30 : f32 to vector<8x32xf32>
    %71 = arith.addf %69, %70 : vector<8x32xf32>
    %72 = vector.extract_strided_slice %66 {offsets = [0, 32], sizes = [8, 32], strides = [1, 1]} : vector<8x128xf32> to vector<8x32xf32>
    %cst_31 = arith.constant 5.000000e-01 : f32
    %73 = vector.broadcast %cst_31 : f32 to vector<8x32xf32>
    %74 = arith.mulf %73, %72 : vector<8x32xf32>
    %cst_32 = arith.constant 5.000000e-01 : f32
    %75 = vector.broadcast %cst_32 : f32 to vector<8x32xf32>
    %76 = arith.addf %74, %75 : vector<8x32xf32>
    %77 = vector.extract_strided_slice %66 {offsets = [0, 64], sizes = [8, 32], strides = [1, 1]} : vector<8x128xf32> to vector<8x32xf32>
    %78 = vector.extract_strided_slice %66 {offsets = [0, 96], sizes = [8, 32], strides = [1, 1]} : vector<8x128xf32> to vector<8x32xf32>
    %cst_33 = arith.constant 5.000000e-01 : f32
    %79 = vector.broadcast %cst_33 : f32 to vector<8x32xf32>
    %80 = arith.mulf %79, %78 : vector<8x32xf32>
    %cst_34 = arith.constant 5.000000e-01 : f32
    %81 = vector.broadcast %cst_34 : f32 to vector<8x32xf32>
    %82 = arith.addf %80, %81 : vector<8x32xf32>
    %83 = arith.mulf %76, %26 : vector<8x32xf32>
    %84 = arith.mulf %71, %77 : vector<8x32xf32>
    %85 = arith.addf %83, %84 : vector<8x32xf32>
    %86 = math.tanh %85 : vector<8x32xf32>
    %87 = arith.mulf %82, %86 : vector<8x32xf32>
    %88 = arith.truncf %87 : vector<8x32xf32> to vector<8x32xbf16>
    %cst_35 = arith.constant dense<0.000000e+00> : vector<8x128xf32>
    %89 = tpu.matmul %88, %4, %cst_35 {dimension_numbers = #tpu.dot_dimension_numbers<[1], [0], [0], [1], [0, 0, 1, 1], [], []>} : vector<8x32xbf16>, vector<32x128xbf16>, vector<8x128xf32> -> vector<8x128xf32>
    %90 = vector.broadcast %8 : vector<1x128xf32> to vector<8x128xf32>
    %91 = arith.addf %89, %90 : vector<8x128xf32>
    %92 = vector.extract_strided_slice %91 {offsets = [0, 0], sizes = [8, 8], strides = [1, 1]} : vector<8x128xf32> to vector<8x8xf32>
    %93 = vector.extract_strided_slice %91 {offsets = [0, 16], sizes = [8, 4], strides = [1, 1]} : vector<8x128xf32> to vector<8x4xf32>
    %94 = vector.extract_strided_slice %91 {offsets = [0, 20], sizes = [8, 8], strides = [1, 1]} : vector<8x128xf32> to vector<8x8xf32>
    %c0_36 = arith.constant 0 : index
    %c0_37 = arith.constant 0 : index
    %c0_38 = arith.constant 0 : index
    %95 = vector.load %arg0[%c0_36, %c0_37, %c0_38] : memref<8x8x8xf32, #tpu.memory_space<vmem>>, vector<1x8x8xf32>
    %96 = vector.shape_cast %95 : vector<1x8x8xf32> to vector<8x8xf32>
    %97 = arith.mulf %93, %93 : vector<8x4xf32>
    %cst_39 = arith.constant dense<0.000000e+00> : vector<8xf32>
    %98 = vector.multi_reduction <add>, %97, %cst_39 [1] : vector<8x4xf32> to vector<8xf32>
    %99 = vector.shape_cast %98 : vector<8xf32> to vector<8x1xf32>
    %cst_40 = arith.constant 5.000000e-02 : f32
    %100 = vector.broadcast %cst_40 : f32 to vector<8x1xf32>
    %101 = arith.mulf %100, %99 : vector<8x1xf32>
    %102 = arith.addf %14, %101 : vector<8x1xf32>
    %103 = arith.mulf %92, %96 : vector<8x8xf32>
    %cst_41 = arith.constant dense<0.000000e+00> : vector<8xf32>
    %104 = vector.multi_reduction <add>, %103, %cst_41 [1] : vector<8x8xf32> to vector<8xf32>
    %105 = vector.shape_cast %104 : vector<8xf32> to vector<8x1xf32>
    %106 = arith.addf %102, %105 : vector<8x1xf32>
    %cst_42 = arith.constant dense<0.000000e+00> : vector<8x8xf32>
    %107 = tpu.matmul %11, %5, %cst_42 {dimension_numbers = #tpu.dot_dimension_numbers<[1], [0], [0], [1], [0, 0, 1, 1], [], []>} : vector<8x8xf32>, vector<8x8xf32>, vector<8x8xf32> -> vector<8x8xf32>
    %108 = arith.addf %107, %94 : vector<8x8xf32>
    %109 = arith.addf %108, %96 : vector<8x8xf32>
    %c1 = arith.constant 1 : index
    %c0_43 = arith.constant 0 : index
    %c0_44 = arith.constant 0 : index
    %110 = vector.load %arg4[%c1, %c0_43, %c0_44] : memref<9x8x8xf32, #tpu.memory_space<vmem>>, vector<1x8x8xf32>
    %111 = vector.shape_cast %110 : vector<1x8x8xf32> to vector<8x8xf32>
    %112 = vector.shape_cast %109 : vector<8x8xf32> to vector<1x8x8xf32>
    tpu.vector_store %arg4[%c1, %c0_43, %c0_44], %112 {strides = array<i32>} : memref<9x8x8xf32, #tpu.memory_space<vmem>>, vector<1x8x8xf32>,
    %c0_45 = arith.constant 0 : index
    %c0_46 = arith.constant 0 : index
    %c0_47 = arith.constant 0 : index
    %113 = vector.load %arg5[%c0_45, %c0_46, %c0_47] : memref<8x8x4xf32, #tpu.memory_space<vmem>>, vector<1x8x4xf32>
    %114 = vector.shape_cast %113 : vector<1x8x4xf32> to vector<8x4xf32>
    %115 = vector.shape_cast %93 : vector<8x4xf32> to vector<1x8x4xf32>
    tpu.vector_store %arg5[%c0_45, %c0_46, %c0_47], %115 {strides = array<i32>} : memref<8x8x4xf32, #tpu.memory_space<vmem>>, vector<1x8x4xf32>,
    %116 = arith.truncf %109 : vector<8x8xf32> to vector<8x8xbf16>
    %cst_48 = arith.constant dense<0.000000e+00> : vector<8x128xf32>
    %117 = tpu.matmul %116, %0, %cst_48 {dimension_numbers = #tpu.dot_dimension_numbers<[1], [0], [0], [1], [0, 0, 1, 1], [], []>} : vector<8x8xbf16>, vector<8x128xbf16>, vector<8x128xf32> -> vector<8x128xf32>
    %118 = arith.truncf %58 : vector<8x32xf32> to vector<8x32xbf16>
    %cst_49 = arith.constant dense<0.000000e+00> : vector<8x128xf32>
    %119 = tpu.matmul %118, %1, %cst_49 {dimension_numbers = #tpu.dot_dimension_numbers<[1], [0], [0], [1], [0, 0, 1, 1], [], []>} : vector<8x32xbf16>, vector<32x128xbf16>, vector<8x128xf32> -> vector<8x128xf32>
    %120 = arith.addf %117, %119 : vector<8x128xf32>
    %121 = vector.broadcast %6 : vector<1x128xf32> to vector<8x128xf32>
    %122 = arith.addf %120, %121 : vector<8x128xf32>
    %123 = math.tanh %122 : vector<8x128xf32>
    %124 = vector.extract_strided_slice %123 {offsets = [0, 0], sizes = [8, 32], strides = [1, 1]} : vector<8x128xf32> to vector<8x32xf32>
    %cst_50 = arith.constant 5.000000e-01 : f32
    %125 = vector.broadcast %cst_50 : f32 to vector<8x32xf32>
    %126 = arith.mulf %125, %124 : vector<8x32xf32>
    %cst_51 = arith.constant 5.000000e-01 : f32
    %127 = vector.broadcast %cst_51 : f32 to vector<8x32xf32>
    %128 = arith.addf %126, %127 : vector<8x32xf32>
    %129 = vector.extract_strided_slice %123 {offsets = [0, 32], sizes = [8, 32], strides = [1, 1]} : vector<8x128xf32> to vector<8x32xf32>
    %cst_52 = arith.constant 5.000000e-01 : f32
    %130 = vector.broadcast %cst_52 : f32 to vector<8x32xf32>
    %131 = arith.mulf %130, %129 : vector<8x32xf32>
    %cst_53 = arith.constant 5.000000e-01 : f32
    %132 = vector.broadcast %cst_53 : f32 to vector<8x32xf32>
    %133 = arith.addf %131, %132 : vector<8x32xf32>
    %134 = vector.extract_strided_slice %123 {offsets = [0, 64], sizes = [8, 32], strides = [1, 1]} : vector<8x128xf32> to vector<8x32xf32>
    %135 = vector.extract_strided_slice %123 {offsets = [0, 96], sizes = [8, 32], strides = [1, 1]} : vector<8x128xf32> to vector<8x32xf32>
    %cst_54 = arith.constant 5.000000e-01 : f32
    %136 = vector.broadcast %cst_54 : f32 to vector<8x32xf32>
    %137 = arith.mulf %136, %135 : vector<8x32xf32>
    %cst_55 = arith.constant 5.000000e-01 : f32
    %138 = vector.broadcast %cst_55 : f32 to vector<8x32xf32>
    %139 = arith.addf %137, %138 : vector<8x32xf32>
    %140 = arith.mulf %133, %56 : vector<8x32xf32>
    %141 = arith.mulf %128, %134 : vector<8x32xf32>
    %142 = arith.addf %140, %141 : vector<8x32xf32>
    %143 = math.tanh %142 : vector<8x32xf32>
    %144 = arith.mulf %139, %143 : vector<8x32xf32>
    %145 = arith.truncf %144 : vector<8x32xf32> to vector<8x32xbf16>
    %cst_56 = arith.constant dense<0.000000e+00> : vector<8x128xf32>
    %146 = tpu.matmul %145, %2, %cst_56 {dimension_numbers = #tpu.dot_dimension_numbers<[1], [0], [0], [1], [0, 0, 1, 1], [], []>} : vector<8x32xbf16>, vector<32x128xbf16>, vector<8x128xf32> -> vector<8x128xf32>
    %147 = arith.truncf %87 : vector<8x32xf32> to vector<8x32xbf16>
    %cst_57 = arith.constant dense<0.000000e+00> : vector<8x128xf32>
    %148 = tpu.matmul %147, %3, %cst_57 {dimension_numbers = #tpu.dot_dimension_numbers<[1], [0], [0], [1], [0, 0, 1, 1], [], []>} : vector<8x32xbf16>, vector<32x128xbf16>, vector<8x128xf32> -> vector<8x128xf32>
    %149 = arith.addf %146, %148 : vector<8x128xf32>
    %150 = vector.broadcast %7 : vector<1x128xf32> to vector<8x128xf32>
    %151 = arith.addf %149, %150 : vector<8x128xf32>
    %152 = math.tanh %151 : vector<8x128xf32>
    %153 = vector.extract_strided_slice %152 {offsets = [0, 0], sizes = [8, 32], strides = [1, 1]} : vector<8x128xf32> to vector<8x32xf32>
    %cst_58 = arith.constant 5.000000e-01 : f32
    %154 = vector.broadcast %cst_58 : f32 to vector<8x32xf32>
    %155 = arith.mulf %154, %153 : vector<8x32xf32>
    %cst_59 = arith.constant 5.000000e-01 : f32
    %156 = vector.broadcast %cst_59 : f32 to vector<8x32xf32>
    %157 = arith.addf %155, %156 : vector<8x32xf32>
    %158 = vector.extract_strided_slice %152 {offsets = [0, 32], sizes = [8, 32], strides = [1, 1]} : vector<8x128xf32> to vector<8x32xf32>
    %cst_60 = arith.constant 5.000000e-01 : f32
    %159 = vector.broadcast %cst_60 : f32 to vector<8x32xf32>
    %160 = arith.mulf %159, %158 : vector<8x32xf32>
    %cst_61 = arith.constant 5.000000e-01 : f32
    %161 = vector.broadcast %cst_61 : f32 to vector<8x32xf32>
    %162 = arith.addf %160, %161 : vector<8x32xf32>
    %163 = vector.extract_strided_slice %152 {offsets = [0, 64], sizes = [8, 32], strides = [1, 1]} : vector<8x128xf32> to vector<8x32xf32>
    %164 = vector.extract_strided_slice %152 {offsets = [0, 96], sizes = [8, 32], strides = [1, 1]} : vector<8x128xf32> to vector<8x32xf32>
    %cst_62 = arith.constant 5.000000e-01 : f32
    %165 = vector.broadcast %cst_62 : f32 to vector<8x32xf32>
    %166 = arith.mulf %165, %164 : vector<8x32xf32>
    %cst_63 = arith.constant 5.000000e-01 : f32
    %167 = vector.broadcast %cst_63 : f32 to vector<8x32xf32>
    %168 = arith.addf %166, %167 : vector<8x32xf32>
    %169 = arith.mulf %162, %85 : vector<8x32xf32>
    %170 = arith.mulf %157, %163 : vector<8x32xf32>
    %171 = arith.addf %169, %170 : vector<8x32xf32>
    %172 = math.tanh %171 : vector<8x32xf32>
    %173 = arith.mulf %168, %172 : vector<8x32xf32>
    %174 = arith.truncf %173 : vector<8x32xf32> to vector<8x32xbf16>
    %cst_64 = arith.constant dense<0.000000e+00> : vector<8x128xf32>
    %175 = tpu.matmul %174, %4, %cst_64 {dimension_numbers = #tpu.dot_dimension_numbers<[1], [0], [0], [1], [0, 0, 1, 1], [], []>} : vector<8x32xbf16>, vector<32x128xbf16>, vector<8x128xf32> -> vector<8x128xf32>
    %176 = vector.broadcast %8 : vector<1x128xf32> to vector<8x128xf32>
    %177 = arith.addf %175, %176 : vector<8x128xf32>
    %178 = vector.extract_strided_slice %177 {offsets = [0, 0], sizes = [8, 8], strides = [1, 1]} : vector<8x128xf32> to vector<8x8xf32>
    %179 = vector.extract_strided_slice %177 {offsets = [0, 16], sizes = [8, 4], strides = [1, 1]} : vector<8x128xf32> to vector<8x4xf32>
    %180 = vector.extract_strided_slice %177 {offsets = [0, 20], sizes = [8, 8], strides = [1, 1]} : vector<8x128xf32> to vector<8x8xf32>
    %c1_65 = arith.constant 1 : index
    %c0_66 = arith.constant 0 : index
    %c0_67 = arith.constant 0 : index
    %181 = vector.load %arg0[%c1_65, %c0_66, %c0_67] : memref<8x8x8xf32, #tpu.memory_space<vmem>>, vector<1x8x8xf32>
    %182 = vector.shape_cast %181 : vector<1x8x8xf32> to vector<8x8xf32>
    %183 = arith.mulf %179, %179 : vector<8x4xf32>
    %cst_68 = arith.constant dense<0.000000e+00> : vector<8xf32>
    %184 = vector.multi_reduction <add>, %183, %cst_68 [1] : vector<8x4xf32> to vector<8xf32>
    %185 = vector.shape_cast %184 : vector<8xf32> to vector<8x1xf32>
    %cst_69 = arith.constant 5.000000e-02 : f32
    %186 = vector.broadcast %cst_69 : f32 to vector<8x1xf32>
    %187 = arith.mulf %186, %185 : vector<8x1xf32>
    %188 = arith.addf %106, %187 : vector<8x1xf32>
    %189 = arith.mulf %178, %182 : vector<8x8xf32>
    %cst_70 = arith.constant dense<0.000000e+00> : vector<8xf32>
    %190 = vector.multi_reduction <add>, %189, %cst_70 [1] : vector<8x8xf32> to vector<8xf32>
    %191 = vector.shape_cast %190 : vector<8xf32> to vector<8x1xf32>
    %192 = arith.addf %188, %191 : vector<8x1xf32>
    %cst_71 = arith.constant dense<0.000000e+00> : vector<8x8xf32>
    %193 = tpu.matmul %109, %5, %cst_71 {dimension_numbers = #tpu.dot_dimension_numbers<[1], [0], [0], [1], [0, 0, 1, 1], [], []>} : vector<8x8xf32>, vector<8x8xf32>, vector<8x8xf32> -> vector<8x8xf32>
    %194 = arith.addf %193, %180 : vector<8x8xf32>
    %195 = arith.addf %194, %182 : vector<8x8xf32>
    %c2 = arith.constant 2 : index
    %c0_72 = arith.constant 0 : index
    %c0_73 = arith.constant 0 : index
    %196 = vector.load %arg4[%c2, %c0_72, %c0_73] : memref<9x8x8xf32, #tpu.memory_space<vmem>>, vector<1x8x8xf32>
    %197 = vector.shape_cast %196 : vector<1x8x8xf32> to vector<8x8xf32>
    %198 = vector.shape_cast %195 : vector<8x8xf32> to vector<1x8x8xf32>
    tpu.vector_store %arg4[%c2, %c0_72, %c0_73], %198 {strides = array<i32>} : memref<9x8x8xf32, #tpu.memory_space<vmem>>, vector<1x8x8xf32>,
    %c1_74 = arith.constant 1 : index
    %c0_75 = arith.constant 0 : index
    %c0_76 = arith.constant 0 : index
    %199 = vector.load %arg5[%c1_74, %c0_75, %c0_76] : memref<8x8x4xf32, #tpu.memory_space<vmem>>, vector<1x8x4xf32>
    %200 = vector.shape_cast %199 : vector<1x8x4xf32> to vector<8x4xf32>
    %201 = vector.shape_cast %179 : vector<8x4xf32> to vector<1x8x4xf32>
    tpu.vector_store %arg5[%c1_74, %c0_75, %c0_76], %201 {strides = array<i32>} : memref<8x8x4xf32, #tpu.memory_space<vmem>>, vector<1x8x4xf32>,
    %202 = arith.truncf %195 : vector<8x8xf32> to vector<8x8xbf16>
    %cst_77 = arith.constant dense<0.000000e+00> : vector<8x128xf32>
    %203 = tpu.matmul %202, %0, %cst_77 {dimension_numbers = #tpu.dot_dimension_numbers<[1], [0], [0], [1], [0, 0, 1, 1], [], []>} : vector<8x8xbf16>, vector<8x128xbf16>, vector<8x128xf32> -> vector<8x128xf32>
    %204 = arith.truncf %144 : vector<8x32xf32> to vector<8x32xbf16>
    %cst_78 = arith.constant dense<0.000000e+00> : vector<8x128xf32>
    %205 = tpu.matmul %204, %1, %cst_78 {dimension_numbers = #tpu.dot_dimension_numbers<[1], [0], [0], [1], [0, 0, 1, 1], [], []>} : vector<8x32xbf16>, vector<32x128xbf16>, vector<8x128xf32> -> vector<8x128xf32>
    %206 = arith.addf %203, %205 : vector<8x128xf32>
    %207 = vector.broadcast %6 : vector<1x128xf32> to vector<8x128xf32>
    %208 = arith.addf %206, %207 : vector<8x128xf32>
    %209 = math.tanh %208 : vector<8x128xf32>
    %210 = vector.extract_strided_slice %209 {offsets = [0, 0], sizes = [8, 32], strides = [1, 1]} : vector<8x128xf32> to vector<8x32xf32>
    %cst_79 = arith.constant 5.000000e-01 : f32
    %211 = vector.broadcast %cst_79 : f32 to vector<8x32xf32>
    %212 = arith.mulf %211, %210 : vector<8x32xf32>
    %cst_80 = arith.constant 5.000000e-01 : f32
    %213 = vector.broadcast %cst_80 : f32 to vector<8x32xf32>
    %214 = arith.addf %212, %213 : vector<8x32xf32>
    %215 = vector.extract_strided_slice %209 {offsets = [0, 32], sizes = [8, 32], strides = [1, 1]} : vector<8x128xf32> to vector<8x32xf32>
    %cst_81 = arith.constant 5.000000e-01 : f32
    %216 = vector.broadcast %cst_81 : f32 to vector<8x32xf32>
    %217 = arith.mulf %216, %215 : vector<8x32xf32>
    %cst_82 = arith.constant 5.000000e-01 : f32
    %218 = vector.broadcast %cst_82 : f32 to vector<8x32xf32>
    %219 = arith.addf %217, %218 : vector<8x32xf32>
    %220 = vector.extract_strided_slice %209 {offsets = [0, 64], sizes = [8, 32], strides = [1, 1]} : vector<8x128xf32> to vector<8x32xf32>
    %221 = vector.extract_strided_slice %209 {offsets = [0, 96], sizes = [8, 32], strides = [1, 1]} : vector<8x128xf32> to vector<8x32xf32>
    %cst_83 = arith.constant 5.000000e-01 : f32
    %222 = vector.broadcast %cst_83 : f32 to vector<8x32xf32>
    %223 = arith.mulf %222, %221 : vector<8x32xf32>
    %cst_84 = arith.constant 5.000000e-01 : f32
    %224 = vector.broadcast %cst_84 : f32 to vector<8x32xf32>
    %225 = arith.addf %223, %224 : vector<8x32xf32>
    %226 = arith.mulf %219, %142 : vector<8x32xf32>
    %227 = arith.mulf %214, %220 : vector<8x32xf32>
    %228 = arith.addf %226, %227 : vector<8x32xf32>
    %229 = math.tanh %228 : vector<8x32xf32>
    %230 = arith.mulf %225, %229 : vector<8x32xf32>
    %231 = arith.truncf %230 : vector<8x32xf32> to vector<8x32xbf16>
    %cst_85 = arith.constant dense<0.000000e+00> : vector<8x128xf32>
    %232 = tpu.matmul %231, %2, %cst_85 {dimension_numbers = #tpu.dot_dimension_numbers<[1], [0], [0], [1], [0, 0, 1, 1], [], []>} : vector<8x32xbf16>, vector<32x128xbf16>, vector<8x128xf32> -> vector<8x128xf32>
    %233 = arith.truncf %173 : vector<8x32xf32> to vector<8x32xbf16>
    %cst_86 = arith.constant dense<0.000000e+00> : vector<8x128xf32>
    %234 = tpu.matmul %233, %3, %cst_86 {dimension_numbers = #tpu.dot_dimension_numbers<[1], [0], [0], [1], [0, 0, 1, 1], [], []>} : vector<8x32xbf16>, vector<32x128xbf16>, vector<8x128xf32> -> vector<8x128xf32>
    %235 = arith.addf %232, %234 : vector<8x128xf32>
    %236 = vector.broadcast %7 : vector<1x128xf32> to vector<8x128xf32>
    %237 = arith.addf %235, %236 : vector<8x128xf32>
    %238 = math.tanh %237 : vector<8x128xf32>
    %239 = vector.extract_strided_slice %238 {offsets = [0, 0], sizes = [8, 32], strides = [1, 1]} : vector<8x128xf32> to vector<8x32xf32>
    %cst_87 = arith.constant 5.000000e-01 : f32
    %240 = vector.broadcast %cst_87 : f32 to vector<8x32xf32>
    %241 = arith.mulf %240, %239 : vector<8x32xf32>
    %cst_88 = arith.constant 5.000000e-01 : f32
    %242 = vector.broadcast %cst_88 : f32 to vector<8x32xf32>
    %243 = arith.addf %241, %242 : vector<8x32xf32>
    %244 = vector.extract_strided_slice %238 {offsets = [0, 32], sizes = [8, 32], strides = [1, 1]} : vector<8x128xf32> to vector<8x32xf32>
    %cst_89 = arith.constant 5.000000e-01 : f32
    %245 = vector.broadcast %cst_89 : f32 to vector<8x32xf32>
    %246 = arith.mulf %245, %244 : vector<8x32xf32>
    %cst_90 = arith.constant 5.000000e-01 : f32
    %247 = vector.broadcast %cst_90 : f32 to vector<8x32xf32>
    %248 = arith.addf %246, %247 : vector<8x32xf32>
    %249 = vector.extract_strided_slice %238 {offsets = [0, 64], sizes = [8, 32], strides = [1, 1]} : vector<8x128xf32> to vector<8x32xf32>
    %250 = vector.extract_strided_slice %238 {offsets = [0, 96], sizes = [8, 32], strides = [1, 1]} : vector<8x128xf32> to vector<8x32xf32>
    %cst_91 = arith.constant 5.000000e-01 : f32
    %251 = vector.broadcast %cst_91 : f32 to vector<8x32xf32>
    %252 = arith.mulf %251, %250 : vector<8x32xf32>
    %cst_92 = arith.constant 5.000000e-01 : f32
    %253 = vector.broadcast %cst_92 : f32 to vector<8x32xf32>
    %254 = arith.addf %252, %253 : vector<8x32xf32>
    %255 = arith.mulf %248, %171 : vector<8x32xf32>
    %256 = arith.mulf %243, %249 : vector<8x32xf32>
    %257 = arith.addf %255, %256 : vector<8x32xf32>
    %258 = math.tanh %257 : vector<8x32xf32>
    %259 = arith.mulf %254, %258 : vector<8x32xf32>
    %260 = arith.truncf %259 : vector<8x32xf32> to vector<8x32xbf16>
    %cst_93 = arith.constant dense<0.000000e+00> : vector<8x128xf32>
    %261 = tpu.matmul %260, %4, %cst_93 {dimension_numbers = #tpu.dot_dimension_numbers<[1], [0], [0], [1], [0, 0, 1, 1], [], []>} : vector<8x32xbf16>, vector<32x128xbf16>, vector<8x128xf32> -> vector<8x128xf32>
    %262 = vector.broadcast %8 : vector<1x128xf32> to vector<8x128xf32>
    %263 = arith.addf %261, %262 : vector<8x128xf32>
    %264 = vector.extract_strided_slice %263 {offsets = [0, 0], sizes = [8, 8], strides = [1, 1]} : vector<8x128xf32> to vector<8x8xf32>
    %265 = vector.extract_strided_slice %263 {offsets = [0, 16], sizes = [8, 4], strides = [1, 1]} : vector<8x128xf32> to vector<8x4xf32>
    %266 = vector.extract_strided_slice %263 {offsets = [0, 20], sizes = [8, 8], strides = [1, 1]} : vector<8x128xf32> to vector<8x8xf32>
    %c2_94 = arith.constant 2 : index
    %c0_95 = arith.constant 0 : index
    %c0_96 = arith.constant 0 : index
    %267 = vector.load %arg0[%c2_94, %c0_95, %c0_96] : memref<8x8x8xf32, #tpu.memory_space<vmem>>, vector<1x8x8xf32>
    %268 = vector.shape_cast %267 : vector<1x8x8xf32> to vector<8x8xf32>
    %269 = arith.mulf %265, %265 : vector<8x4xf32>
    %cst_97 = arith.constant dense<0.000000e+00> : vector<8xf32>
    %270 = vector.multi_reduction <add>, %269, %cst_97 [1] : vector<8x4xf32> to vector<8xf32>
    %271 = vector.shape_cast %270 : vector<8xf32> to vector<8x1xf32>
    %cst_98 = arith.constant 5.000000e-02 : f32
    %272 = vector.broadcast %cst_98 : f32 to vector<8x1xf32>
    %273 = arith.mulf %272, %271 : vector<8x1xf32>
    %274 = arith.addf %192, %273 : vector<8x1xf32>
    %275 = arith.mulf %264, %268 : vector<8x8xf32>
    %cst_99 = arith.constant dense<0.000000e+00> : vector<8xf32>
    %276 = vector.multi_reduction <add>, %275, %cst_99 [1] : vector<8x8xf32> to vector<8xf32>
    %277 = vector.shape_cast %276 : vector<8xf32> to vector<8x1xf32>
    %278 = arith.addf %274, %277 : vector<8x1xf32>
    %cst_100 = arith.constant dense<0.000000e+00> : vector<8x8xf32>
    %279 = tpu.matmul %195, %5, %cst_100 {dimension_numbers = #tpu.dot_dimension_numbers<[1], [0], [0], [1], [0, 0, 1, 1], [], []>} : vector<8x8xf32>, vector<8x8xf32>, vector<8x8xf32> -> vector<8x8xf32>
    %280 = arith.addf %279, %266 : vector<8x8xf32>
    %281 = arith.addf %280, %268 : vector<8x8xf32>
    %c3 = arith.constant 3 : index
    %c0_101 = arith.constant 0 : index
    %c0_102 = arith.constant 0 : index
    %282 = vector.load %arg4[%c3, %c0_101, %c0_102] : memref<9x8x8xf32, #tpu.memory_space<vmem>>, vector<1x8x8xf32>
    %283 = vector.shape_cast %282 : vector<1x8x8xf32> to vector<8x8xf32>
    %284 = vector.shape_cast %281 : vector<8x8xf32> to vector<1x8x8xf32>
    tpu.vector_store %arg4[%c3, %c0_101, %c0_102], %284 {strides = array<i32>} : memref<9x8x8xf32, #tpu.memory_space<vmem>>, vector<1x8x8xf32>,
    %c2_103 = arith.constant 2 : index
    %c0_104 = arith.constant 0 : index
    %c0_105 = arith.constant 0 : index
    %285 = vector.load %arg5[%c2_103, %c0_104, %c0_105] : memref<8x8x4xf32, #tpu.memory_space<vmem>>, vector<1x8x4xf32>
    %286 = vector.shape_cast %285 : vector<1x8x4xf32> to vector<8x4xf32>
    %287 = vector.shape_cast %265 : vector<8x4xf32> to vector<1x8x4xf32>
    tpu.vector_store %arg5[%c2_103, %c0_104, %c0_105], %287 {strides = array<i32>} : memref<8x8x4xf32, #tpu.memory_space<vmem>>, vector<1x8x4xf32>,
    %288 = arith.truncf %281 : vector<8x8xf32> to vector<8x8xbf16>
    %cst_106 = arith.constant dense<0.000000e+00> : vector<8x128xf32>
    %289 = tpu.matmul %288, %0, %cst_106 {dimension_numbers = #tpu.dot_dimension_numbers<[1], [0], [0], [1], [0, 0, 1, 1], [], []>} : vector<8x8xbf16>, vector<8x128xbf16>, vector<8x128xf32> -> vector<8x128xf32>
    %290 = arith.truncf %230 : vector<8x32xf32> to vector<8x32xbf16>
    %cst_107 = arith.constant dense<0.000000e+00> : vector<8x128xf32>
    %291 = tpu.matmul %290, %1, %cst_107 {dimension_numbers = #tpu.dot_dimension_numbers<[1], [0], [0], [1], [0, 0, 1, 1], [], []>} : vector<8x32xbf16>, vector<32x128xbf16>, vector<8x128xf32> -> vector<8x128xf32>
    %292 = arith.addf %289, %291 : vector<8x128xf32>
    %293 = vector.broadcast %6 : vector<1x128xf32> to vector<8x128xf32>
    %294 = arith.addf %292, %293 : vector<8x128xf32>
    %295 = math.tanh %294 : vector<8x128xf32>
    %296 = vector.extract_strided_slice %295 {offsets = [0, 0], sizes = [8, 32], strides = [1, 1]} : vector<8x128xf32> to vector<8x32xf32>
    %cst_108 = arith.constant 5.000000e-01 : f32
    %297 = vector.broadcast %cst_108 : f32 to vector<8x32xf32>
    %298 = arith.mulf %297, %296 : vector<8x32xf32>
    %cst_109 = arith.constant 5.000000e-01 : f32
    %299 = vector.broadcast %cst_109 : f32 to vector<8x32xf32>
    %300 = arith.addf %298, %299 : vector<8x32xf32>
    %301 = vector.extract_strided_slice %295 {offsets = [0, 32], sizes = [8, 32], strides = [1, 1]} : vector<8x128xf32> to vector<8x32xf32>
    %cst_110 = arith.constant 5.000000e-01 : f32
    %302 = vector.broadcast %cst_110 : f32 to vector<8x32xf32>
    %303 = arith.mulf %302, %301 : vector<8x32xf32>
    %cst_111 = arith.constant 5.000000e-01 : f32
    %304 = vector.broadcast %cst_111 : f32 to vector<8x32xf32>
    %305 = arith.addf %303, %304 : vector<8x32xf32>
    %306 = vector.extract_strided_slice %295 {offsets = [0, 64], sizes = [8, 32], strides = [1, 1]} : vector<8x128xf32> to vector<8x32xf32>
    %307 = vector.extract_strided_slice %295 {offsets = [0, 96], sizes = [8, 32], strides = [1, 1]} : vector<8x128xf32> to vector<8x32xf32>
    %cst_112 = arith.constant 5.000000e-01 : f32
    %308 = vector.broadcast %cst_112 : f32 to vector<8x32xf32>
    %309 = arith.mulf %308, %307 : vector<8x32xf32>
    %cst_113 = arith.constant 5.000000e-01 : f32
    %310 = vector.broadcast %cst_113 : f32 to vector<8x32xf32>
    %311 = arith.addf %309, %310 : vector<8x32xf32>
    %312 = arith.mulf %305, %228 : vector<8x32xf32>
    %313 = arith.mulf %300, %306 : vector<8x32xf32>
    %314 = arith.addf %312, %313 : vector<8x32xf32>
    %315 = math.tanh %314 : vector<8x32xf32>
    %316 = arith.mulf %311, %315 : vector<8x32xf32>
    %317 = arith.truncf %316 : vector<8x32xf32> to vector<8x32xbf16>
    %cst_114 = arith.constant dense<0.000000e+00> : vector<8x128xf32>
    %318 = tpu.matmul %317, %2, %cst_114 {dimension_numbers = #tpu.dot_dimension_numbers<[1], [0], [0], [1], [0, 0, 1, 1], [], []>} : vector<8x32xbf16>, vector<32x128xbf16>, vector<8x128xf32> -> vector<8x128xf32>
    %319 = arith.truncf %259 : vector<8x32xf32> to vector<8x32xbf16>
    %cst_115 = arith.constant dense<0.000000e+00> : vector<8x128xf32>
    %320 = tpu.matmul %319, %3, %cst_115 {dimension_numbers = #tpu.dot_dimension_numbers<[1], [0], [0], [1], [0, 0, 1, 1], [], []>} : vector<8x32xbf16>, vector<32x128xbf16>, vector<8x128xf32> -> vector<8x128xf32>
    %321 = arith.addf %318, %320 : vector<8x128xf32>
    %322 = vector.broadcast %7 : vector<1x128xf32> to vector<8x128xf32>
    %323 = arith.addf %321, %322 : vector<8x128xf32>
    %324 = math.tanh %323 : vector<8x128xf32>
    %325 = vector.extract_strided_slice %324 {offsets = [0, 0], sizes = [8, 32], strides = [1, 1]} : vector<8x128xf32> to vector<8x32xf32>
    %cst_116 = arith.constant 5.000000e-01 : f32
    %326 = vector.broadcast %cst_116 : f32 to vector<8x32xf32>
    %327 = arith.mulf %326, %325 : vector<8x32xf32>
    %cst_117 = arith.constant 5.000000e-01 : f32
    %328 = vector.broadcast %cst_117 : f32 to vector<8x32xf32>
    %329 = arith.addf %327, %328 : vector<8x32xf32>
    %330 = vector.extract_strided_slice %324 {offsets = [0, 32], sizes = [8, 32], strides = [1, 1]} : vector<8x128xf32> to vector<8x32xf32>
    %cst_118 = arith.constant 5.000000e-01 : f32
    %331 = vector.broadcast %cst_118 : f32 to vector<8x32xf32>
    %332 = arith.mulf %331, %330 : vector<8x32xf32>
    %cst_119 = arith.constant 5.000000e-01 : f32
    %333 = vector.broadcast %cst_119 : f32 to vector<8x32xf32>
    %334 = arith.addf %332, %333 : vector<8x32xf32>
    %335 = vector.extract_strided_slice %324 {offsets = [0, 64], sizes = [8, 32], strides = [1, 1]} : vector<8x128xf32> to vector<8x32xf32>
    %336 = vector.extract_strided_slice %324 {offsets = [0, 96], sizes = [8, 32], strides = [1, 1]} : vector<8x128xf32> to vector<8x32xf32>
    %cst_120 = arith.constant 5.000000e-01 : f32
    %337 = vector.broadcast %cst_120 : f32 to vector<8x32xf32>
    %338 = arith.mulf %337, %336 : vector<8x32xf32>
    %cst_121 = arith.constant 5.000000e-01 : f32
    %339 = vector.broadcast %cst_121 : f32 to vector<8x32xf32>
    %340 = arith.addf %338, %339 : vector<8x32xf32>
    %341 = arith.mulf %334, %257 : vector<8x32xf32>
    %342 = arith.mulf %329, %335 : vector<8x32xf32>
    %343 = arith.addf %341, %342 : vector<8x32xf32>
    %344 = math.tanh %343 : vector<8x32xf32>
    %345 = arith.mulf %340, %344 : vector<8x32xf32>
    %346 = arith.truncf %345 : vector<8x32xf32> to vector<8x32xbf16>
    %cst_122 = arith.constant dense<0.000000e+00> : vector<8x128xf32>
    %347 = tpu.matmul %346, %4, %cst_122 {dimension_numbers = #tpu.dot_dimension_numbers<[1], [0], [0], [1], [0, 0, 1, 1], [], []>} : vector<8x32xbf16>, vector<32x128xbf16>, vector<8x128xf32> -> vector<8x128xf32>
    %348 = vector.broadcast %8 : vector<1x128xf32> to vector<8x128xf32>
    %349 = arith.addf %347, %348 : vector<8x128xf32>
    %350 = vector.extract_strided_slice %349 {offsets = [0, 0], sizes = [8, 8], strides = [1, 1]} : vector<8x128xf32> to vector<8x8xf32>
    %351 = vector.extract_strided_slice %349 {offsets = [0, 16], sizes = [8, 4], strides = [1, 1]} : vector<8x128xf32> to vector<8x4xf32>
    %352 = vector.extract_strided_slice %349 {offsets = [0, 20], sizes = [8, 8], strides = [1, 1]} : vector<8x128xf32> to vector<8x8xf32>
    %c3_123 = arith.constant 3 : index
    %c0_124 = arith.constant 0 : index
    %c0_125 = arith.constant 0 : index
    %353 = vector.load %arg0[%c3_123, %c0_124, %c0_125] : memref<8x8x8xf32, #tpu.memory_space<vmem>>, vector<1x8x8xf32>
    %354 = vector.shape_cast %353 : vector<1x8x8xf32> to vector<8x8xf32>
    %355 = arith.mulf %351, %351 : vector<8x4xf32>
    %cst_126 = arith.constant dense<0.000000e+00> : vector<8xf32>
    %356 = vector.multi_reduction <add>, %355, %cst_126 [1] : vector<8x4xf32> to vector<8xf32>
    %357 = vector.shape_cast %356 : vector<8xf32> to vector<8x1xf32>
    %cst_127 = arith.constant 5.000000e-02 : f32
    %358 = vector.broadcast %cst_127 : f32 to vector<8x1xf32>
    %359 = arith.mulf %358, %357 : vector<8x1xf32>
    %360 = arith.addf %278, %359 : vector<8x1xf32>
    %361 = arith.mulf %350, %354 : vector<8x8xf32>
    %cst_128 = arith.constant dense<0.000000e+00> : vector<8xf32>
    %362 = vector.multi_reduction <add>, %361, %cst_128 [1] : vector<8x8xf32> to vector<8xf32>
    %363 = vector.shape_cast %362 : vector<8xf32> to vector<8x1xf32>
    %364 = arith.addf %360, %363 : vector<8x1xf32>
    %cst_129 = arith.constant dense<0.000000e+00> : vector<8x8xf32>
    %365 = tpu.matmul %281, %5, %cst_129 {dimension_numbers = #tpu.dot_dimension_numbers<[1], [0], [0], [1], [0, 0, 1, 1], [], []>} : vector<8x8xf32>, vector<8x8xf32>, vector<8x8xf32> -> vector<8x8xf32>
    %366 = arith.addf %365, %352 : vector<8x8xf32>
    %367 = arith.addf %366, %354 : vector<8x8xf32>
    %c4 = arith.constant 4 : index
    %c0_130 = arith.constant 0 : index
    %c0_131 = arith.constant 0 : index
    %368 = vector.load %arg4[%c4, %c0_130, %c0_131] : memref<9x8x8xf32, #tpu.memory_space<vmem>>, vector<1x8x8xf32>
    %369 = vector.shape_cast %368 : vector<1x8x8xf32> to vector<8x8xf32>
    %370 = vector.shape_cast %367 : vector<8x8xf32> to vector<1x8x8xf32>
    tpu.vector_store %arg4[%c4, %c0_130, %c0_131], %370 {strides = array<i32>} : memref<9x8x8xf32, #tpu.memory_space<vmem>>, vector<1x8x8xf32>,
    %c3_132 = arith.constant 3 : index
    %c0_133 = arith.constant 0 : index
    %c0_134 = arith.constant 0 : index
    %371 = vector.load %arg5[%c3_132, %c0_133, %c0_134] : memref<8x8x4xf32, #tpu.memory_space<vmem>>, vector<1x8x4xf32>
    %372 = vector.shape_cast %371 : vector<1x8x4xf32> to vector<8x4xf32>
    %373 = vector.shape_cast %351 : vector<8x4xf32> to vector<1x8x4xf32>
    tpu.vector_store %arg5[%c3_132, %c0_133, %c0_134], %373 {strides = array<i32>} : memref<8x8x4xf32, #tpu.memory_space<vmem>>, vector<1x8x4xf32>,
    %374 = arith.truncf %367 : vector<8x8xf32> to vector<8x8xbf16>
    %cst_135 = arith.constant dense<0.000000e+00> : vector<8x128xf32>
    %375 = tpu.matmul %374, %0, %cst_135 {dimension_numbers = #tpu.dot_dimension_numbers<[1], [0], [0], [1], [0, 0, 1, 1], [], []>} : vector<8x8xbf16>, vector<8x128xbf16>, vector<8x128xf32> -> vector<8x128xf32>
    %376 = arith.truncf %316 : vector<8x32xf32> to vector<8x32xbf16>
    %cst_136 = arith.constant dense<0.000000e+00> : vector<8x128xf32>
    %377 = tpu.matmul %376, %1, %cst_136 {dimension_numbers = #tpu.dot_dimension_numbers<[1], [0], [0], [1], [0, 0, 1, 1], [], []>} : vector<8x32xbf16>, vector<32x128xbf16>, vector<8x128xf32> -> vector<8x128xf32>
    %378 = arith.addf %375, %377 : vector<8x128xf32>
    %379 = vector.broadcast %6 : vector<1x128xf32> to vector<8x128xf32>
    %380 = arith.addf %378, %379 : vector<8x128xf32>
    %381 = math.tanh %380 : vector<8x128xf32>
    %382 = vector.extract_strided_slice %381 {offsets = [0, 0], sizes = [8, 32], strides = [1, 1]} : vector<8x128xf32> to vector<8x32xf32>
    %cst_137 = arith.constant 5.000000e-01 : f32
    %383 = vector.broadcast %cst_137 : f32 to vector<8x32xf32>
    %384 = arith.mulf %383, %382 : vector<8x32xf32>
    %cst_138 = arith.constant 5.000000e-01 : f32
    %385 = vector.broadcast %cst_138 : f32 to vector<8x32xf32>
    %386 = arith.addf %384, %385 : vector<8x32xf32>
    %387 = vector.extract_strided_slice %381 {offsets = [0, 32], sizes = [8, 32], strides = [1, 1]} : vector<8x128xf32> to vector<8x32xf32>
    %cst_139 = arith.constant 5.000000e-01 : f32
    %388 = vector.broadcast %cst_139 : f32 to vector<8x32xf32>
    %389 = arith.mulf %388, %387 : vector<8x32xf32>
    %cst_140 = arith.constant 5.000000e-01 : f32
    %390 = vector.broadcast %cst_140 : f32 to vector<8x32xf32>
    %391 = arith.addf %389, %390 : vector<8x32xf32>
    %392 = vector.extract_strided_slice %381 {offsets = [0, 64], sizes = [8, 32], strides = [1, 1]} : vector<8x128xf32> to vector<8x32xf32>
    %393 = vector.extract_strided_slice %381 {offsets = [0, 96], sizes = [8, 32], strides = [1, 1]} : vector<8x128xf32> to vector<8x32xf32>
    %cst_141 = arith.constant 5.000000e-01 : f32
    %394 = vector.broadcast %cst_141 : f32 to vector<8x32xf32>
    %395 = arith.mulf %394, %393 : vector<8x32xf32>
    %cst_142 = arith.constant 5.000000e-01 : f32
    %396 = vector.broadcast %cst_142 : f32 to vector<8x32xf32>
    %397 = arith.addf %395, %396 : vector<8x32xf32>
    %398 = arith.mulf %391, %314 : vector<8x32xf32>
    %399 = arith.mulf %386, %392 : vector<8x32xf32>
    %400 = arith.addf %398, %399 : vector<8x32xf32>
    %401 = math.tanh %400 : vector<8x32xf32>
    %402 = arith.mulf %397, %401 : vector<8x32xf32>
    %403 = arith.truncf %402 : vector<8x32xf32> to vector<8x32xbf16>
    %cst_143 = arith.constant dense<0.000000e+00> : vector<8x128xf32>
    %404 = tpu.matmul %403, %2, %cst_143 {dimension_numbers = #tpu.dot_dimension_numbers<[1], [0], [0], [1], [0, 0, 1, 1], [], []>} : vector<8x32xbf16>, vector<32x128xbf16>, vector<8x128xf32> -> vector<8x128xf32>
    %405 = arith.truncf %345 : vector<8x32xf32> to vector<8x32xbf16>
    %cst_144 = arith.constant dense<0.000000e+00> : vector<8x128xf32>
    %406 = tpu.matmul %405, %3, %cst_144 {dimension_numbers = #tpu.dot_dimension_numbers<[1], [0], [0], [1], [0, 0, 1, 1], [], []>} : vector<8x32xbf16>, vector<32x128xbf16>, vector<8x128xf32> -> vector<8x128xf32>
    %407 = arith.addf %404, %406 : vector<8x128xf32>
    %408 = vector.broadcast %7 : vector<1x128xf32> to vector<8x128xf32>
    %409 = arith.addf %407, %408 : vector<8x128xf32>
    %410 = math.tanh %409 : vector<8x128xf32>
    %411 = vector.extract_strided_slice %410 {offsets = [0, 0], sizes = [8, 32], strides = [1, 1]} : vector<8x128xf32> to vector<8x32xf32>
    %cst_145 = arith.constant 5.000000e-01 : f32
    %412 = vector.broadcast %cst_145 : f32 to vector<8x32xf32>
    %413 = arith.mulf %412, %411 : vector<8x32xf32>
    %cst_146 = arith.constant 5.000000e-01 : f32
    %414 = vector.broadcast %cst_146 : f32 to vector<8x32xf32>
    %415 = arith.addf %413, %414 : vector<8x32xf32>
    %416 = vector.extract_strided_slice %410 {offsets = [0, 32], sizes = [8, 32], strides = [1, 1]} : vector<8x128xf32> to vector<8x32xf32>
    %cst_147 = arith.constant 5.000000e-01 : f32
    %417 = vector.broadcast %cst_147 : f32 to vector<8x32xf32>
    %418 = arith.mulf %417, %416 : vector<8x32xf32>
    %cst_148 = arith.constant 5.000000e-01 : f32
    %419 = vector.broadcast %cst_148 : f32 to vector<8x32xf32>
    %420 = arith.addf %418, %419 : vector<8x32xf32>
    %421 = vector.extract_strided_slice %410 {offsets = [0, 64], sizes = [8, 32], strides = [1, 1]} : vector<8x128xf32> to vector<8x32xf32>
    %422 = vector.extract_strided_slice %410 {offsets = [0, 96], sizes = [8, 32], strides = [1, 1]} : vector<8x128xf32> to vector<8x32xf32>
    %cst_149 = arith.constant 5.000000e-01 : f32
    %423 = vector.broadcast %cst_149 : f32 to vector<8x32xf32>
    %424 = arith.mulf %423, %422 : vector<8x32xf32>
    %cst_150 = arith.constant 5.000000e-01 : f32
    %425 = vector.broadcast %cst_150 : f32 to vector<8x32xf32>
    %426 = arith.addf %424, %425 : vector<8x32xf32>
    %427 = arith.mulf %420, %343 : vector<8x32xf32>
    %428 = arith.mulf %415, %421 : vector<8x32xf32>
    %429 = arith.addf %427, %428 : vector<8x32xf32>
    %430 = math.tanh %429 : vector<8x32xf32>
    %431 = arith.mulf %426, %430 : vector<8x32xf32>
    %432 = arith.truncf %431 : vector<8x32xf32> to vector<8x32xbf16>
    %cst_151 = arith.constant dense<0.000000e+00> : vector<8x128xf32>
    %433 = tpu.matmul %432, %4, %cst_151 {dimension_numbers = #tpu.dot_dimension_numbers<[1], [0], [0], [1], [0, 0, 1, 1], [], []>} : vector<8x32xbf16>, vector<32x128xbf16>, vector<8x128xf32> -> vector<8x128xf32>
    %434 = vector.broadcast %8 : vector<1x128xf32> to vector<8x128xf32>
    %435 = arith.addf %433, %434 : vector<8x128xf32>
    %436 = vector.extract_strided_slice %435 {offsets = [0, 0], sizes = [8, 8], strides = [1, 1]} : vector<8x128xf32> to vector<8x8xf32>
    %437 = vector.extract_strided_slice %435 {offsets = [0, 16], sizes = [8, 4], strides = [1, 1]} : vector<8x128xf32> to vector<8x4xf32>
    %438 = vector.extract_strided_slice %435 {offsets = [0, 20], sizes = [8, 8], strides = [1, 1]} : vector<8x128xf32> to vector<8x8xf32>
    %c4_152 = arith.constant 4 : index
    %c0_153 = arith.constant 0 : index
    %c0_154 = arith.constant 0 : index
    %439 = vector.load %arg0[%c4_152, %c0_153, %c0_154] : memref<8x8x8xf32, #tpu.memory_space<vmem>>, vector<1x8x8xf32>
    %440 = vector.shape_cast %439 : vector<1x8x8xf32> to vector<8x8xf32>
    %441 = arith.mulf %437, %437 : vector<8x4xf32>
    %cst_155 = arith.constant dense<0.000000e+00> : vector<8xf32>
    %442 = vector.multi_reduction <add>, %441, %cst_155 [1] : vector<8x4xf32> to vector<8xf32>
    %443 = vector.shape_cast %442 : vector<8xf32> to vector<8x1xf32>
    %cst_156 = arith.constant 5.000000e-02 : f32
    %444 = vector.broadcast %cst_156 : f32 to vector<8x1xf32>
    %445 = arith.mulf %444, %443 : vector<8x1xf32>
    %446 = arith.addf %364, %445 : vector<8x1xf32>
    %447 = arith.mulf %436, %440 : vector<8x8xf32>
    %cst_157 = arith.constant dense<0.000000e+00> : vector<8xf32>
    %448 = vector.multi_reduction <add>, %447, %cst_157 [1] : vector<8x8xf32> to vector<8xf32>
    %449 = vector.shape_cast %448 : vector<8xf32> to vector<8x1xf32>
    %450 = arith.addf %446, %449 : vector<8x1xf32>
    %cst_158 = arith.constant dense<0.000000e+00> : vector<8x8xf32>
    %451 = tpu.matmul %367, %5, %cst_158 {dimension_numbers = #tpu.dot_dimension_numbers<[1], [0], [0], [1], [0, 0, 1, 1], [], []>} : vector<8x8xf32>, vector<8x8xf32>, vector<8x8xf32> -> vector<8x8xf32>
    %452 = arith.addf %451, %438 : vector<8x8xf32>
    %453 = arith.addf %452, %440 : vector<8x8xf32>
    %c5 = arith.constant 5 : index
    %c0_159 = arith.constant 0 : index
    %c0_160 = arith.constant 0 : index
    %454 = vector.load %arg4[%c5, %c0_159, %c0_160] : memref<9x8x8xf32, #tpu.memory_space<vmem>>, vector<1x8x8xf32>
    %455 = vector.shape_cast %454 : vector<1x8x8xf32> to vector<8x8xf32>
    %456 = vector.shape_cast %453 : vector<8x8xf32> to vector<1x8x8xf32>
    tpu.vector_store %arg4[%c5, %c0_159, %c0_160], %456 {strides = array<i32>} : memref<9x8x8xf32, #tpu.memory_space<vmem>>, vector<1x8x8xf32>,
    %c4_161 = arith.constant 4 : index
    %c0_162 = arith.constant 0 : index
    %c0_163 = arith.constant 0 : index
    %457 = vector.load %arg5[%c4_161, %c0_162, %c0_163] : memref<8x8x4xf32, #tpu.memory_space<vmem>>, vector<1x8x4xf32>
    %458 = vector.shape_cast %457 : vector<1x8x4xf32> to vector<8x4xf32>
    %459 = vector.shape_cast %437 : vector<8x4xf32> to vector<1x8x4xf32>
    tpu.vector_store %arg5[%c4_161, %c0_162, %c0_163], %459 {strides = array<i32>} : memref<8x8x4xf32, #tpu.memory_space<vmem>>, vector<1x8x4xf32>,
    %460 = arith.truncf %453 : vector<8x8xf32> to vector<8x8xbf16>
    %cst_164 = arith.constant dense<0.000000e+00> : vector<8x128xf32>
    %461 = tpu.matmul %460, %0, %cst_164 {dimension_numbers = #tpu.dot_dimension_numbers<[1], [0], [0], [1], [0, 0, 1, 1], [], []>} : vector<8x8xbf16>, vector<8x128xbf16>, vector<8x128xf32> -> vector<8x128xf32>
    %462 = arith.truncf %402 : vector<8x32xf32> to vector<8x32xbf16>
    %cst_165 = arith.constant dense<0.000000e+00> : vector<8x128xf32>
    %463 = tpu.matmul %462, %1, %cst_165 {dimension_numbers = #tpu.dot_dimension_numbers<[1], [0], [0], [1], [0, 0, 1, 1], [], []>} : vector<8x32xbf16>, vector<32x128xbf16>, vector<8x128xf32> -> vector<8x128xf32>
    %464 = arith.addf %461, %463 : vector<8x128xf32>
    %465 = vector.broadcast %6 : vector<1x128xf32> to vector<8x128xf32>
    %466 = arith.addf %464, %465 : vector<8x128xf32>
    %467 = math.tanh %466 : vector<8x128xf32>
    %468 = vector.extract_strided_slice %467 {offsets = [0, 0], sizes = [8, 32], strides = [1, 1]} : vector<8x128xf32> to vector<8x32xf32>
    %cst_166 = arith.constant 5.000000e-01 : f32
    %469 = vector.broadcast %cst_166 : f32 to vector<8x32xf32>
    %470 = arith.mulf %469, %468 : vector<8x32xf32>
    %cst_167 = arith.constant 5.000000e-01 : f32
    %471 = vector.broadcast %cst_167 : f32 to vector<8x32xf32>
    %472 = arith.addf %470, %471 : vector<8x32xf32>
    %473 = vector.extract_strided_slice %467 {offsets = [0, 32], sizes = [8, 32], strides = [1, 1]} : vector<8x128xf32> to vector<8x32xf32>
    %cst_168 = arith.constant 5.000000e-01 : f32
    %474 = vector.broadcast %cst_168 : f32 to vector<8x32xf32>
    %475 = arith.mulf %474, %473 : vector<8x32xf32>
    %cst_169 = arith.constant 5.000000e-01 : f32
    %476 = vector.broadcast %cst_169 : f32 to vector<8x32xf32>
    %477 = arith.addf %475, %476 : vector<8x32xf32>
    %478 = vector.extract_strided_slice %467 {offsets = [0, 64], sizes = [8, 32], strides = [1, 1]} : vector<8x128xf32> to vector<8x32xf32>
    %479 = vector.extract_strided_slice %467 {offsets = [0, 96], sizes = [8, 32], strides = [1, 1]} : vector<8x128xf32> to vector<8x32xf32>
    %cst_170 = arith.constant 5.000000e-01 : f32
    %480 = vector.broadcast %cst_170 : f32 to vector<8x32xf32>
    %481 = arith.mulf %480, %479 : vector<8x32xf32>
    %cst_171 = arith.constant 5.000000e-01 : f32
    %482 = vector.broadcast %cst_171 : f32 to vector<8x32xf32>
    %483 = arith.addf %481, %482 : vector<8x32xf32>
    %484 = arith.mulf %477, %400 : vector<8x32xf32>
    %485 = arith.mulf %472, %478 : vector<8x32xf32>
    %486 = arith.addf %484, %485 : vector<8x32xf32>
    %487 = math.tanh %486 : vector<8x32xf32>
    %488 = arith.mulf %483, %487 : vector<8x32xf32>
    %489 = arith.truncf %488 : vector<8x32xf32> to vector<8x32xbf16>
    %cst_172 = arith.constant dense<0.000000e+00> : vector<8x128xf32>
    %490 = tpu.matmul %489, %2, %cst_172 {dimension_numbers = #tpu.dot_dimension_numbers<[1], [0], [0], [1], [0, 0, 1, 1], [], []>} : vector<8x32xbf16>, vector<32x128xbf16>, vector<8x128xf32> -> vector<8x128xf32>
    %491 = arith.truncf %431 : vector<8x32xf32> to vector<8x32xbf16>
    %cst_173 = arith.constant dense<0.000000e+00> : vector<8x128xf32>
    %492 = tpu.matmul %491, %3, %cst_173 {dimension_numbers = #tpu.dot_dimension_numbers<[1], [0], [0], [1], [0, 0, 1, 1], [], []>} : vector<8x32xbf16>, vector<32x128xbf16>, vector<8x128xf32> -> vector<8x128xf32>
    %493 = arith.addf %490, %492 : vector<8x128xf32>
    %494 = vector.broadcast %7 : vector<1x128xf32> to vector<8x128xf32>
    %495 = arith.addf %493, %494 : vector<8x128xf32>
    %496 = math.tanh %495 : vector<8x128xf32>
    %497 = vector.extract_strided_slice %496 {offsets = [0, 0], sizes = [8, 32], strides = [1, 1]} : vector<8x128xf32> to vector<8x32xf32>
    %cst_174 = arith.constant 5.000000e-01 : f32
    %498 = vector.broadcast %cst_174 : f32 to vector<8x32xf32>
    %499 = arith.mulf %498, %497 : vector<8x32xf32>
    %cst_175 = arith.constant 5.000000e-01 : f32
    %500 = vector.broadcast %cst_175 : f32 to vector<8x32xf32>
    %501 = arith.addf %499, %500 : vector<8x32xf32>
    %502 = vector.extract_strided_slice %496 {offsets = [0, 32], sizes = [8, 32], strides = [1, 1]} : vector<8x128xf32> to vector<8x32xf32>
    %cst_176 = arith.constant 5.000000e-01 : f32
    %503 = vector.broadcast %cst_176 : f32 to vector<8x32xf32>
    %504 = arith.mulf %503, %502 : vector<8x32xf32>
    %cst_177 = arith.constant 5.000000e-01 : f32
    %505 = vector.broadcast %cst_177 : f32 to vector<8x32xf32>
    %506 = arith.addf %504, %505 : vector<8x32xf32>
    %507 = vector.extract_strided_slice %496 {offsets = [0, 64], sizes = [8, 32], strides = [1, 1]} : vector<8x128xf32> to vector<8x32xf32>
    %508 = vector.extract_strided_slice %496 {offsets = [0, 96], sizes = [8, 32], strides = [1, 1]} : vector<8x128xf32> to vector<8x32xf32>
    %cst_178 = arith.constant 5.000000e-01 : f32
    %509 = vector.broadcast %cst_178 : f32 to vector<8x32xf32>
    %510 = arith.mulf %509, %508 : vector<8x32xf32>
    %cst_179 = arith.constant 5.000000e-01 : f32
    %511 = vector.broadcast %cst_179 : f32 to vector<8x32xf32>
    %512 = arith.addf %510, %511 : vector<8x32xf32>
    %513 = arith.mulf %506, %429 : vector<8x32xf32>
    %514 = arith.mulf %501, %507 : vector<8x32xf32>
    %515 = arith.addf %513, %514 : vector<8x32xf32>
    %516 = math.tanh %515 : vector<8x32xf32>
    %517 = arith.mulf %512, %516 : vector<8x32xf32>
    %518 = arith.truncf %517 : vector<8x32xf32> to vector<8x32xbf16>
    %cst_180 = arith.constant dense<0.000000e+00> : vector<8x128xf32>
    %519 = tpu.matmul %518, %4, %cst_180 {dimension_numbers = #tpu.dot_dimension_numbers<[1], [0], [0], [1], [0, 0, 1, 1], [], []>} : vector<8x32xbf16>, vector<32x128xbf16>, vector<8x128xf32> -> vector<8x128xf32>
    %520 = vector.broadcast %8 : vector<1x128xf32> to vector<8x128xf32>
    %521 = arith.addf %519, %520 : vector<8x128xf32>
    %522 = vector.extract_strided_slice %521 {offsets = [0, 0], sizes = [8, 8], strides = [1, 1]} : vector<8x128xf32> to vector<8x8xf32>
    %523 = vector.extract_strided_slice %521 {offsets = [0, 16], sizes = [8, 4], strides = [1, 1]} : vector<8x128xf32> to vector<8x4xf32>
    %524 = vector.extract_strided_slice %521 {offsets = [0, 20], sizes = [8, 8], strides = [1, 1]} : vector<8x128xf32> to vector<8x8xf32>
    %c5_181 = arith.constant 5 : index
    %c0_182 = arith.constant 0 : index
    %c0_183 = arith.constant 0 : index
    %525 = vector.load %arg0[%c5_181, %c0_182, %c0_183] : memref<8x8x8xf32, #tpu.memory_space<vmem>>, vector<1x8x8xf32>
    %526 = vector.shape_cast %525 : vector<1x8x8xf32> to vector<8x8xf32>
    %527 = arith.mulf %523, %523 : vector<8x4xf32>
    %cst_184 = arith.constant dense<0.000000e+00> : vector<8xf32>
    %528 = vector.multi_reduction <add>, %527, %cst_184 [1] : vector<8x4xf32> to vector<8xf32>
    %529 = vector.shape_cast %528 : vector<8xf32> to vector<8x1xf32>
    %cst_185 = arith.constant 5.000000e-02 : f32
    %530 = vector.broadcast %cst_185 : f32 to vector<8x1xf32>
    %531 = arith.mulf %530, %529 : vector<8x1xf32>
    %532 = arith.addf %450, %531 : vector<8x1xf32>
    %533 = arith.mulf %522, %526 : vector<8x8xf32>
    %cst_186 = arith.constant dense<0.000000e+00> : vector<8xf32>
    %534 = vector.multi_reduction <add>, %533, %cst_186 [1] : vector<8x8xf32> to vector<8xf32>
    %535 = vector.shape_cast %534 : vector<8xf32> to vector<8x1xf32>
    %536 = arith.addf %532, %535 : vector<8x1xf32>
    %cst_187 = arith.constant dense<0.000000e+00> : vector<8x8xf32>
    %537 = tpu.matmul %453, %5, %cst_187 {dimension_numbers = #tpu.dot_dimension_numbers<[1], [0], [0], [1], [0, 0, 1, 1], [], []>} : vector<8x8xf32>, vector<8x8xf32>, vector<8x8xf32> -> vector<8x8xf32>
    %538 = arith.addf %537, %524 : vector<8x8xf32>
    %539 = arith.addf %538, %526 : vector<8x8xf32>
    %c6 = arith.constant 6 : index
    %c0_188 = arith.constant 0 : index
    %c0_189 = arith.constant 0 : index
    %540 = vector.load %arg4[%c6, %c0_188, %c0_189] : memref<9x8x8xf32, #tpu.memory_space<vmem>>, vector<1x8x8xf32>
    %541 = vector.shape_cast %540 : vector<1x8x8xf32> to vector<8x8xf32>
    %542 = vector.shape_cast %539 : vector<8x8xf32> to vector<1x8x8xf32>
    tpu.vector_store %arg4[%c6, %c0_188, %c0_189], %542 {strides = array<i32>} : memref<9x8x8xf32, #tpu.memory_space<vmem>>, vector<1x8x8xf32>,
    %c5_190 = arith.constant 5 : index
    %c0_191 = arith.constant 0 : index
    %c0_192 = arith.constant 0 : index
    %543 = vector.load %arg5[%c5_190, %c0_191, %c0_192] : memref<8x8x4xf32, #tpu.memory_space<vmem>>, vector<1x8x4xf32>
    %544 = vector.shape_cast %543 : vector<1x8x4xf32> to vector<8x4xf32>
    %545 = vector.shape_cast %523 : vector<8x4xf32> to vector<1x8x4xf32>
    tpu.vector_store %arg5[%c5_190, %c0_191, %c0_192], %545 {strides = array<i32>} : memref<8x8x4xf32, #tpu.memory_space<vmem>>, vector<1x8x4xf32>,
    %546 = arith.truncf %539 : vector<8x8xf32> to vector<8x8xbf16>
    %cst_193 = arith.constant dense<0.000000e+00> : vector<8x128xf32>
    %547 = tpu.matmul %546, %0, %cst_193 {dimension_numbers = #tpu.dot_dimension_numbers<[1], [0], [0], [1], [0, 0, 1, 1], [], []>} : vector<8x8xbf16>, vector<8x128xbf16>, vector<8x128xf32> -> vector<8x128xf32>
    %548 = arith.truncf %488 : vector<8x32xf32> to vector<8x32xbf16>
    %cst_194 = arith.constant dense<0.000000e+00> : vector<8x128xf32>
    %549 = tpu.matmul %548, %1, %cst_194 {dimension_numbers = #tpu.dot_dimension_numbers<[1], [0], [0], [1], [0, 0, 1, 1], [], []>} : vector<8x32xbf16>, vector<32x128xbf16>, vector<8x128xf32> -> vector<8x128xf32>
    %550 = arith.addf %547, %549 : vector<8x128xf32>
    %551 = vector.broadcast %6 : vector<1x128xf32> to vector<8x128xf32>
    %552 = arith.addf %550, %551 : vector<8x128xf32>
    %553 = math.tanh %552 : vector<8x128xf32>
    %554 = vector.extract_strided_slice %553 {offsets = [0, 0], sizes = [8, 32], strides = [1, 1]} : vector<8x128xf32> to vector<8x32xf32>
    %cst_195 = arith.constant 5.000000e-01 : f32
    %555 = vector.broadcast %cst_195 : f32 to vector<8x32xf32>
    %556 = arith.mulf %555, %554 : vector<8x32xf32>
    %cst_196 = arith.constant 5.000000e-01 : f32
    %557 = vector.broadcast %cst_196 : f32 to vector<8x32xf32>
    %558 = arith.addf %556, %557 : vector<8x32xf32>
    %559 = vector.extract_strided_slice %553 {offsets = [0, 32], sizes = [8, 32], strides = [1, 1]} : vector<8x128xf32> to vector<8x32xf32>
    %cst_197 = arith.constant 5.000000e-01 : f32
    %560 = vector.broadcast %cst_197 : f32 to vector<8x32xf32>
    %561 = arith.mulf %560, %559 : vector<8x32xf32>
    %cst_198 = arith.constant 5.000000e-01 : f32
    %562 = vector.broadcast %cst_198 : f32 to vector<8x32xf32>
    %563 = arith.addf %561, %562 : vector<8x32xf32>
    %564 = vector.extract_strided_slice %553 {offsets = [0, 64], sizes = [8, 32], strides = [1, 1]} : vector<8x128xf32> to vector<8x32xf32>
    %565 = vector.extract_strided_slice %553 {offsets = [0, 96], sizes = [8, 32], strides = [1, 1]} : vector<8x128xf32> to vector<8x32xf32>
    %cst_199 = arith.constant 5.000000e-01 : f32
    %566 = vector.broadcast %cst_199 : f32 to vector<8x32xf32>
    %567 = arith.mulf %566, %565 : vector<8x32xf32>
    %cst_200 = arith.constant 5.000000e-01 : f32
    %568 = vector.broadcast %cst_200 : f32 to vector<8x32xf32>
    %569 = arith.addf %567, %568 : vector<8x32xf32>
    %570 = arith.mulf %563, %486 : vector<8x32xf32>
    %571 = arith.mulf %558, %564 : vector<8x32xf32>
    %572 = arith.addf %570, %571 : vector<8x32xf32>
    %573 = math.tanh %572 : vector<8x32xf32>
    %574 = arith.mulf %569, %573 : vector<8x32xf32>
    %575 = arith.truncf %574 : vector<8x32xf32> to vector<8x32xbf16>
    %cst_201 = arith.constant dense<0.000000e+00> : vector<8x128xf32>
    %576 = tpu.matmul %575, %2, %cst_201 {dimension_numbers = #tpu.dot_dimension_numbers<[1], [0], [0], [1], [0, 0, 1, 1], [], []>} : vector<8x32xbf16>, vector<32x128xbf16>, vector<8x128xf32> -> vector<8x128xf32>
    %577 = arith.truncf %517 : vector<8x32xf32> to vector<8x32xbf16>
    %cst_202 = arith.constant dense<0.000000e+00> : vector<8x128xf32>
    %578 = tpu.matmul %577, %3, %cst_202 {dimension_numbers = #tpu.dot_dimension_numbers<[1], [0], [0], [1], [0, 0, 1, 1], [], []>} : vector<8x32xbf16>, vector<32x128xbf16>, vector<8x128xf32> -> vector<8x128xf32>
    %579 = arith.addf %576, %578 : vector<8x128xf32>
    %580 = vector.broadcast %7 : vector<1x128xf32> to vector<8x128xf32>
    %581 = arith.addf %579, %580 : vector<8x128xf32>
    %582 = math.tanh %581 : vector<8x128xf32>
    %583 = vector.extract_strided_slice %582 {offsets = [0, 0], sizes = [8, 32], strides = [1, 1]} : vector<8x128xf32> to vector<8x32xf32>
    %cst_203 = arith.constant 5.000000e-01 : f32
    %584 = vector.broadcast %cst_203 : f32 to vector<8x32xf32>
    %585 = arith.mulf %584, %583 : vector<8x32xf32>
    %cst_204 = arith.constant 5.000000e-01 : f32
    %586 = vector.broadcast %cst_204 : f32 to vector<8x32xf32>
    %587 = arith.addf %585, %586 : vector<8x32xf32>
    %588 = vector.extract_strided_slice %582 {offsets = [0, 32], sizes = [8, 32], strides = [1, 1]} : vector<8x128xf32> to vector<8x32xf32>
    %cst_205 = arith.constant 5.000000e-01 : f32
    %589 = vector.broadcast %cst_205 : f32 to vector<8x32xf32>
    %590 = arith.mulf %589, %588 : vector<8x32xf32>
    %cst_206 = arith.constant 5.000000e-01 : f32
    %591 = vector.broadcast %cst_206 : f32 to vector<8x32xf32>
    %592 = arith.addf %590, %591 : vector<8x32xf32>
    %593 = vector.extract_strided_slice %582 {offsets = [0, 64], sizes = [8, 32], strides = [1, 1]} : vector<8x128xf32> to vector<8x32xf32>
    %594 = vector.extract_strided_slice %582 {offsets = [0, 96], sizes = [8, 32], strides = [1, 1]} : vector<8x128xf32> to vector<8x32xf32>
    %cst_207 = arith.constant 5.000000e-01 : f32
    %595 = vector.broadcast %cst_207 : f32 to vector<8x32xf32>
    %596 = arith.mulf %595, %594 : vector<8x32xf32>
    %cst_208 = arith.constant 5.000000e-01 : f32
    %597 = vector.broadcast %cst_208 : f32 to vector<8x32xf32>
    %598 = arith.addf %596, %597 : vector<8x32xf32>
    %599 = arith.mulf %592, %515 : vector<8x32xf32>
    %600 = arith.mulf %587, %593 : vector<8x32xf32>
    %601 = arith.addf %599, %600 : vector<8x32xf32>
    %602 = math.tanh %601 : vector<8x32xf32>
    %603 = arith.mulf %598, %602 : vector<8x32xf32>
    %604 = arith.truncf %603 : vector<8x32xf32> to vector<8x32xbf16>
    %cst_209 = arith.constant dense<0.000000e+00> : vector<8x128xf32>
    %605 = tpu.matmul %604, %4, %cst_209 {dimension_numbers = #tpu.dot_dimension_numbers<[1], [0], [0], [1], [0, 0, 1, 1], [], []>} : vector<8x32xbf16>, vector<32x128xbf16>, vector<8x128xf32> -> vector<8x128xf32>
    %606 = vector.broadcast %8 : vector<1x128xf32> to vector<8x128xf32>
    %607 = arith.addf %605, %606 : vector<8x128xf32>
    %608 = vector.extract_strided_slice %607 {offsets = [0, 0], sizes = [8, 8], strides = [1, 1]} : vector<8x128xf32> to vector<8x8xf32>
    %609 = vector.extract_strided_slice %607 {offsets = [0, 16], sizes = [8, 4], strides = [1, 1]} : vector<8x128xf32> to vector<8x4xf32>
    %610 = vector.extract_strided_slice %607 {offsets = [0, 20], sizes = [8, 8], strides = [1, 1]} : vector<8x128xf32> to vector<8x8xf32>
    %c6_210 = arith.constant 6 : index
    %c0_211 = arith.constant 0 : index
    %c0_212 = arith.constant 0 : index
    %611 = vector.load %arg0[%c6_210, %c0_211, %c0_212] : memref<8x8x8xf32, #tpu.memory_space<vmem>>, vector<1x8x8xf32>
    %612 = vector.shape_cast %611 : vector<1x8x8xf32> to vector<8x8xf32>
    %613 = arith.mulf %609, %609 : vector<8x4xf32>
    %cst_213 = arith.constant dense<0.000000e+00> : vector<8xf32>
    %614 = vector.multi_reduction <add>, %613, %cst_213 [1] : vector<8x4xf32> to vector<8xf32>
    %615 = vector.shape_cast %614 : vector<8xf32> to vector<8x1xf32>
    %cst_214 = arith.constant 5.000000e-02 : f32
    %616 = vector.broadcast %cst_214 : f32 to vector<8x1xf32>
    %617 = arith.mulf %616, %615 : vector<8x1xf32>
    %618 = arith.addf %536, %617 : vector<8x1xf32>
    %619 = arith.mulf %608, %612 : vector<8x8xf32>
    %cst_215 = arith.constant dense<0.000000e+00> : vector<8xf32>
    %620 = vector.multi_reduction <add>, %619, %cst_215 [1] : vector<8x8xf32> to vector<8xf32>
    %621 = vector.shape_cast %620 : vector<8xf32> to vector<8x1xf32>
    %622 = arith.addf %618, %621 : vector<8x1xf32>
    %cst_216 = arith.constant dense<0.000000e+00> : vector<8x8xf32>
    %623 = tpu.matmul %539, %5, %cst_216 {dimension_numbers = #tpu.dot_dimension_numbers<[1], [0], [0], [1], [0, 0, 1, 1], [], []>} : vector<8x8xf32>, vector<8x8xf32>, vector<8x8xf32> -> vector<8x8xf32>
    %624 = arith.addf %623, %610 : vector<8x8xf32>
    %625 = arith.addf %624, %612 : vector<8x8xf32>
    %c7 = arith.constant 7 : index
    %c0_217 = arith.constant 0 : index
    %c0_218 = arith.constant 0 : index
    %626 = vector.load %arg4[%c7, %c0_217, %c0_218] : memref<9x8x8xf32, #tpu.memory_space<vmem>>, vector<1x8x8xf32>
    %627 = vector.shape_cast %626 : vector<1x8x8xf32> to vector<8x8xf32>
    %628 = vector.shape_cast %625 : vector<8x8xf32> to vector<1x8x8xf32>
    tpu.vector_store %arg4[%c7, %c0_217, %c0_218], %628 {strides = array<i32>} : memref<9x8x8xf32, #tpu.memory_space<vmem>>, vector<1x8x8xf32>,
    %c6_219 = arith.constant 6 : index
    %c0_220 = arith.constant 0 : index
    %c0_221 = arith.constant 0 : index
    %629 = vector.load %arg5[%c6_219, %c0_220, %c0_221] : memref<8x8x4xf32, #tpu.memory_space<vmem>>, vector<1x8x4xf32>
    %630 = vector.shape_cast %629 : vector<1x8x4xf32> to vector<8x4xf32>
    %631 = vector.shape_cast %609 : vector<8x4xf32> to vector<1x8x4xf32>
    tpu.vector_store %arg5[%c6_219, %c0_220, %c0_221], %631 {strides = array<i32>} : memref<8x8x4xf32, #tpu.memory_space<vmem>>, vector<1x8x4xf32>,
    %632 = arith.truncf %625 : vector<8x8xf32> to vector<8x8xbf16>
    %cst_222 = arith.constant dense<0.000000e+00> : vector<8x128xf32>
    %633 = tpu.matmul %632, %0, %cst_222 {dimension_numbers = #tpu.dot_dimension_numbers<[1], [0], [0], [1], [0, 0, 1, 1], [], []>} : vector<8x8xbf16>, vector<8x128xbf16>, vector<8x128xf32> -> vector<8x128xf32>
    %634 = arith.truncf %574 : vector<8x32xf32> to vector<8x32xbf16>
    %cst_223 = arith.constant dense<0.000000e+00> : vector<8x128xf32>
    %635 = tpu.matmul %634, %1, %cst_223 {dimension_numbers = #tpu.dot_dimension_numbers<[1], [0], [0], [1], [0, 0, 1, 1], [], []>} : vector<8x32xbf16>, vector<32x128xbf16>, vector<8x128xf32> -> vector<8x128xf32>
    %636 = arith.addf %633, %635 : vector<8x128xf32>
    %637 = vector.broadcast %6 : vector<1x128xf32> to vector<8x128xf32>
    %638 = arith.addf %636, %637 : vector<8x128xf32>
    %639 = math.tanh %638 : vector<8x128xf32>
    %640 = vector.extract_strided_slice %639 {offsets = [0, 0], sizes = [8, 32], strides = [1, 1]} : vector<8x128xf32> to vector<8x32xf32>
    %cst_224 = arith.constant 5.000000e-01 : f32
    %641 = vector.broadcast %cst_224 : f32 to vector<8x32xf32>
    %642 = arith.mulf %641, %640 : vector<8x32xf32>
    %cst_225 = arith.constant 5.000000e-01 : f32
    %643 = vector.broadcast %cst_225 : f32 to vector<8x32xf32>
    %644 = arith.addf %642, %643 : vector<8x32xf32>
    %645 = vector.extract_strided_slice %639 {offsets = [0, 32], sizes = [8, 32], strides = [1, 1]} : vector<8x128xf32> to vector<8x32xf32>
    %cst_226 = arith.constant 5.000000e-01 : f32
    %646 = vector.broadcast %cst_226 : f32 to vector<8x32xf32>
    %647 = arith.mulf %646, %645 : vector<8x32xf32>
    %cst_227 = arith.constant 5.000000e-01 : f32
    %648 = vector.broadcast %cst_227 : f32 to vector<8x32xf32>
    %649 = arith.addf %647, %648 : vector<8x32xf32>
    %650 = vector.extract_strided_slice %639 {offsets = [0, 64], sizes = [8, 32], strides = [1, 1]} : vector<8x128xf32> to vector<8x32xf32>
    %651 = vector.extract_strided_slice %639 {offsets = [0, 96], sizes = [8, 32], strides = [1, 1]} : vector<8x128xf32> to vector<8x32xf32>
    %cst_228 = arith.constant 5.000000e-01 : f32
    %652 = vector.broadcast %cst_228 : f32 to vector<8x32xf32>
    %653 = arith.mulf %652, %651 : vector<8x32xf32>
    %cst_229 = arith.constant 5.000000e-01 : f32
    %654 = vector.broadcast %cst_229 : f32 to vector<8x32xf32>
    %655 = arith.addf %653, %654 : vector<8x32xf32>
    %656 = arith.mulf %649, %572 : vector<8x32xf32>
    %657 = arith.mulf %644, %650 : vector<8x32xf32>
    %658 = arith.addf %656, %657 : vector<8x32xf32>
    %659 = math.tanh %658 : vector<8x32xf32>
    %660 = arith.mulf %655, %659 : vector<8x32xf32>
    %661 = arith.truncf %660 : vector<8x32xf32> to vector<8x32xbf16>
    %cst_230 = arith.constant dense<0.000000e+00> : vector<8x128xf32>
    %662 = tpu.matmul %661, %2, %cst_230 {dimension_numbers = #tpu.dot_dimension_numbers<[1], [0], [0], [1], [0, 0, 1, 1], [], []>} : vector<8x32xbf16>, vector<32x128xbf16>, vector<8x128xf32> -> vector<8x128xf32>
    %663 = arith.truncf %603 : vector<8x32xf32> to vector<8x32xbf16>
    %cst_231 = arith.constant dense<0.000000e+00> : vector<8x128xf32>
    %664 = tpu.matmul %663, %3, %cst_231 {dimension_numbers = #tpu.dot_dimension_numbers<[1], [0], [0], [1], [0, 0, 1, 1], [], []>} : vector<8x32xbf16>, vector<32x128xbf16>, vector<8x128xf32> -> vector<8x128xf32>
    %665 = arith.addf %662, %664 : vector<8x128xf32>
    %666 = vector.broadcast %7 : vector<1x128xf32> to vector<8x128xf32>
    %667 = arith.addf %665, %666 : vector<8x128xf32>
    %668 = math.tanh %667 : vector<8x128xf32>
    %669 = vector.extract_strided_slice %668 {offsets = [0, 0], sizes = [8, 32], strides = [1, 1]} : vector<8x128xf32> to vector<8x32xf32>
    %cst_232 = arith.constant 5.000000e-01 : f32
    %670 = vector.broadcast %cst_232 : f32 to vector<8x32xf32>
    %671 = arith.mulf %670, %669 : vector<8x32xf32>
    %cst_233 = arith.constant 5.000000e-01 : f32
    %672 = vector.broadcast %cst_233 : f32 to vector<8x32xf32>
    %673 = arith.addf %671, %672 : vector<8x32xf32>
    %674 = vector.extract_strided_slice %668 {offsets = [0, 32], sizes = [8, 32], strides = [1, 1]} : vector<8x128xf32> to vector<8x32xf32>
    %cst_234 = arith.constant 5.000000e-01 : f32
    %675 = vector.broadcast %cst_234 : f32 to vector<8x32xf32>
    %676 = arith.mulf %675, %674 : vector<8x32xf32>
    %cst_235 = arith.constant 5.000000e-01 : f32
    %677 = vector.broadcast %cst_235 : f32 to vector<8x32xf32>
    %678 = arith.addf %676, %677 : vector<8x32xf32>
    %679 = vector.extract_strided_slice %668 {offsets = [0, 64], sizes = [8, 32], strides = [1, 1]} : vector<8x128xf32> to vector<8x32xf32>
    %680 = vector.extract_strided_slice %668 {offsets = [0, 96], sizes = [8, 32], strides = [1, 1]} : vector<8x128xf32> to vector<8x32xf32>
    %cst_236 = arith.constant 5.000000e-01 : f32
    %681 = vector.broadcast %cst_236 : f32 to vector<8x32xf32>
    %682 = arith.mulf %681, %680 : vector<8x32xf32>
    %cst_237 = arith.constant 5.000000e-01 : f32
    %683 = vector.broadcast %cst_237 : f32 to vector<8x32xf32>
    %684 = arith.addf %682, %683 : vector<8x32xf32>
    %685 = arith.mulf %678, %601 : vector<8x32xf32>
    %686 = arith.mulf %673, %679 : vector<8x32xf32>
    %687 = arith.addf %685, %686 : vector<8x32xf32>
    %688 = math.tanh %687 : vector<8x32xf32>
    %689 = arith.mulf %684, %688 : vector<8x32xf32>
    %690 = arith.truncf %689 : vector<8x32xf32> to vector<8x32xbf16>
    %cst_238 = arith.constant dense<0.000000e+00> : vector<8x128xf32>
    %691 = tpu.matmul %690, %4, %cst_238 {dimension_numbers = #tpu.dot_dimension_numbers<[1], [0], [0], [1], [0, 0, 1, 1], [], []>} : vector<8x32xbf16>, vector<32x128xbf16>, vector<8x128xf32> -> vector<8x128xf32>
    %692 = vector.broadcast %8 : vector<1x128xf32> to vector<8x128xf32>
    %693 = arith.addf %691, %692 : vector<8x128xf32>
    %694 = vector.extract_strided_slice %693 {offsets = [0, 0], sizes = [8, 8], strides = [1, 1]} : vector<8x128xf32> to vector<8x8xf32>
    %695 = vector.extract_strided_slice %693 {offsets = [0, 16], sizes = [8, 4], strides = [1, 1]} : vector<8x128xf32> to vector<8x4xf32>
    %696 = vector.extract_strided_slice %693 {offsets = [0, 20], sizes = [8, 8], strides = [1, 1]} : vector<8x128xf32> to vector<8x8xf32>
    %c7_239 = arith.constant 7 : index
    %c0_240 = arith.constant 0 : index
    %c0_241 = arith.constant 0 : index
    %697 = vector.load %arg0[%c7_239, %c0_240, %c0_241] : memref<8x8x8xf32, #tpu.memory_space<vmem>>, vector<1x8x8xf32>
    %698 = vector.shape_cast %697 : vector<1x8x8xf32> to vector<8x8xf32>
    %699 = arith.mulf %695, %695 : vector<8x4xf32>
    %cst_242 = arith.constant dense<0.000000e+00> : vector<8xf32>
    %700 = vector.multi_reduction <add>, %699, %cst_242 [1] : vector<8x4xf32> to vector<8xf32>
    %701 = vector.shape_cast %700 : vector<8xf32> to vector<8x1xf32>
    %cst_243 = arith.constant 5.000000e-02 : f32
    %702 = vector.broadcast %cst_243 : f32 to vector<8x1xf32>
    %703 = arith.mulf %702, %701 : vector<8x1xf32>
    %704 = arith.addf %622, %703 : vector<8x1xf32>
    %705 = arith.mulf %694, %698 : vector<8x8xf32>
    %cst_244 = arith.constant dense<0.000000e+00> : vector<8xf32>
    %706 = vector.multi_reduction <add>, %705, %cst_244 [1] : vector<8x8xf32> to vector<8xf32>
    %707 = vector.shape_cast %706 : vector<8xf32> to vector<8x1xf32>
    %708 = arith.addf %704, %707 : vector<8x1xf32>
    %cst_245 = arith.constant dense<0.000000e+00> : vector<8x8xf32>
    %709 = tpu.matmul %625, %5, %cst_245 {dimension_numbers = #tpu.dot_dimension_numbers<[1], [0], [0], [1], [0, 0, 1, 1], [], []>} : vector<8x8xf32>, vector<8x8xf32>, vector<8x8xf32> -> vector<8x8xf32>
    %710 = arith.addf %709, %696 : vector<8x8xf32>
    %711 = arith.addf %710, %698 : vector<8x8xf32>
    %c8_246 = arith.constant 8 : index
    %c0_247 = arith.constant 0 : index
    %c0_248 = arith.constant 0 : index
    %712 = vector.load %arg4[%c8_246, %c0_247, %c0_248] : memref<9x8x8xf32, #tpu.memory_space<vmem>>, vector<1x8x8xf32>
    %713 = vector.shape_cast %712 : vector<1x8x8xf32> to vector<8x8xf32>
    %714 = vector.shape_cast %711 : vector<8x8xf32> to vector<1x8x8xf32>
    tpu.vector_store %arg4[%c8_246, %c0_247, %c0_248], %714 {strides = array<i32>} : memref<9x8x8xf32, #tpu.memory_space<vmem>>, vector<1x8x8xf32>,
    %c7_249 = arith.constant 7 : index
    %c0_250 = arith.constant 0 : index
    %c0_251 = arith.constant 0 : index
    %715 = vector.load %arg5[%c7_249, %c0_250, %c0_251] : memref<8x8x4xf32, #tpu.memory_space<vmem>>, vector<1x8x4xf32>
    %716 = vector.shape_cast %715 : vector<1x8x4xf32> to vector<8x4xf32>
    %717 = vector.shape_cast %695 : vector<8x4xf32> to vector<1x8x4xf32>
    tpu.vector_store %arg5[%c7_249, %c0_250, %c0_251], %717 {strides = array<i32>} : memref<8x8x4xf32, #tpu.memory_space<vmem>>, vector<1x8x4xf32>,
    %718 = arith.truncf %711 : vector<8x8xf32> to vector<8x8xbf16>
    %cst_252 = arith.constant dense<0.000000e+00> : vector<8x128xf32>
    %719 = tpu.matmul %718, %0, %cst_252 {dimension_numbers = #tpu.dot_dimension_numbers<[1], [0], [0], [1], [0, 0, 1, 1], [], []>} : vector<8x8xbf16>, vector<8x128xbf16>, vector<8x128xf32> -> vector<8x128xf32>
    %720 = arith.truncf %660 : vector<8x32xf32> to vector<8x32xbf16>
    %cst_253 = arith.constant dense<0.000000e+00> : vector<8x128xf32>
    %721 = tpu.matmul %720, %1, %cst_253 {dimension_numbers = #tpu.dot_dimension_numbers<[1], [0], [0], [1], [0, 0, 1, 1], [], []>} : vector<8x32xbf16>, vector<32x128xbf16>, vector<8x128xf32> -> vector<8x128xf32>
    %722 = arith.addf %719, %721 : vector<8x128xf32>
    %723 = vector.broadcast %6 : vector<1x128xf32> to vector<8x128xf32>
    %724 = arith.addf %722, %723 : vector<8x128xf32>
    %725 = math.tanh %724 : vector<8x128xf32>
    %726 = vector.extract_strided_slice %725 {offsets = [0, 0], sizes = [8, 32], strides = [1, 1]} : vector<8x128xf32> to vector<8x32xf32>
    %cst_254 = arith.constant 5.000000e-01 : f32
    %727 = vector.broadcast %cst_254 : f32 to vector<8x32xf32>
    %728 = arith.mulf %727, %726 : vector<8x32xf32>
    %cst_255 = arith.constant 5.000000e-01 : f32
    %729 = vector.broadcast %cst_255 : f32 to vector<8x32xf32>
    %730 = arith.addf %728, %729 : vector<8x32xf32>
    %731 = vector.extract_strided_slice %725 {offsets = [0, 32], sizes = [8, 32], strides = [1, 1]} : vector<8x128xf32> to vector<8x32xf32>
    %cst_256 = arith.constant 5.000000e-01 : f32
    %732 = vector.broadcast %cst_256 : f32 to vector<8x32xf32>
    %733 = arith.mulf %732, %731 : vector<8x32xf32>
    %cst_257 = arith.constant 5.000000e-01 : f32
    %734 = vector.broadcast %cst_257 : f32 to vector<8x32xf32>
    %735 = arith.addf %733, %734 : vector<8x32xf32>
    %736 = vector.extract_strided_slice %725 {offsets = [0, 64], sizes = [8, 32], strides = [1, 1]} : vector<8x128xf32> to vector<8x32xf32>
    %737 = vector.extract_strided_slice %725 {offsets = [0, 96], sizes = [8, 32], strides = [1, 1]} : vector<8x128xf32> to vector<8x32xf32>
    %cst_258 = arith.constant 5.000000e-01 : f32
    %738 = vector.broadcast %cst_258 : f32 to vector<8x32xf32>
    %739 = arith.mulf %738, %737 : vector<8x32xf32>
    %cst_259 = arith.constant 5.000000e-01 : f32
    %740 = vector.broadcast %cst_259 : f32 to vector<8x32xf32>
    %741 = arith.addf %739, %740 : vector<8x32xf32>
    %742 = arith.mulf %735, %658 : vector<8x32xf32>
    %743 = arith.mulf %730, %736 : vector<8x32xf32>
    %744 = arith.addf %742, %743 : vector<8x32xf32>
    %745 = math.tanh %744 : vector<8x32xf32>
    %746 = arith.mulf %741, %745 : vector<8x32xf32>
    %747 = arith.truncf %746 : vector<8x32xf32> to vector<8x32xbf16>
    %cst_260 = arith.constant dense<0.000000e+00> : vector<8x128xf32>
    %748 = tpu.matmul %747, %2, %cst_260 {dimension_numbers = #tpu.dot_dimension_numbers<[1], [0], [0], [1], [0, 0, 1, 1], [], []>} : vector<8x32xbf16>, vector<32x128xbf16>, vector<8x128xf32> -> vector<8x128xf32>
    %749 = arith.truncf %689 : vector<8x32xf32> to vector<8x32xbf16>
    %cst_261 = arith.constant dense<0.000000e+00> : vector<8x128xf32>
    %750 = tpu.matmul %749, %3, %cst_261 {dimension_numbers = #tpu.dot_dimension_numbers<[1], [0], [0], [1], [0, 0, 1, 1], [], []>} : vector<8x32xbf16>, vector<32x128xbf16>, vector<8x128xf32> -> vector<8x128xf32>
    %751 = arith.addf %748, %750 : vector<8x128xf32>
    %752 = vector.broadcast %7 : vector<1x128xf32> to vector<8x128xf32>
    %753 = arith.addf %751, %752 : vector<8x128xf32>
    %754 = math.tanh %753 : vector<8x128xf32>
    %755 = vector.extract_strided_slice %754 {offsets = [0, 0], sizes = [8, 32], strides = [1, 1]} : vector<8x128xf32> to vector<8x32xf32>
    %cst_262 = arith.constant 5.000000e-01 : f32
    %756 = vector.broadcast %cst_262 : f32 to vector<8x32xf32>
    %757 = arith.mulf %756, %755 : vector<8x32xf32>
    %cst_263 = arith.constant 5.000000e-01 : f32
    %758 = vector.broadcast %cst_263 : f32 to vector<8x32xf32>
    %759 = arith.addf %757, %758 : vector<8x32xf32>
    %760 = vector.extract_strided_slice %754 {offsets = [0, 32], sizes = [8, 32], strides = [1, 1]} : vector<8x128xf32> to vector<8x32xf32>
    %cst_264 = arith.constant 5.000000e-01 : f32
    %761 = vector.broadcast %cst_264 : f32 to vector<8x32xf32>
    %762 = arith.mulf %761, %760 : vector<8x32xf32>
    %cst_265 = arith.constant 5.000000e-01 : f32
    %763 = vector.broadcast %cst_265 : f32 to vector<8x32xf32>
    %764 = arith.addf %762, %763 : vector<8x32xf32>
    %765 = vector.extract_strided_slice %754 {offsets = [0, 64], sizes = [8, 32], strides = [1, 1]} : vector<8x128xf32> to vector<8x32xf32>
    %766 = vector.extract_strided_slice %754 {offsets = [0, 96], sizes = [8, 32], strides = [1, 1]} : vector<8x128xf32> to vector<8x32xf32>
    %cst_266 = arith.constant 5.000000e-01 : f32
    %767 = vector.broadcast %cst_266 : f32 to vector<8x32xf32>
    %768 = arith.mulf %767, %766 : vector<8x32xf32>
    %cst_267 = arith.constant 5.000000e-01 : f32
    %769 = vector.broadcast %cst_267 : f32 to vector<8x32xf32>
    %770 = arith.addf %768, %769 : vector<8x32xf32>
    %771 = arith.mulf %764, %687 : vector<8x32xf32>
    %772 = arith.mulf %759, %765 : vector<8x32xf32>
    %773 = arith.addf %771, %772 : vector<8x32xf32>
    %774 = math.tanh %773 : vector<8x32xf32>
    %775 = arith.mulf %770, %774 : vector<8x32xf32>
    %776 = arith.truncf %775 : vector<8x32xf32> to vector<8x32xbf16>
    %cst_268 = arith.constant dense<0.000000e+00> : vector<8x128xf32>
    %777 = tpu.matmul %776, %4, %cst_268 {dimension_numbers = #tpu.dot_dimension_numbers<[1], [0], [0], [1], [0, 0, 1, 1], [], []>} : vector<8x32xbf16>, vector<32x128xbf16>, vector<8x128xf32> -> vector<8x128xf32>
    %778 = vector.broadcast %8 : vector<1x128xf32> to vector<8x128xf32>
    %779 = arith.addf %777, %778 : vector<8x128xf32>
    %780 = vector.extract_strided_slice %779 {offsets = [0, 0], sizes = [8, 8], strides = [1, 1]} : vector<8x128xf32> to vector<8x8xf32>
    %781 = vector.extract_strided_slice %779 {offsets = [0, 8], sizes = [8, 8], strides = [1, 1]} : vector<8x128xf32> to vector<8x8xf32>
    %782 = tpu.concatenate %711, %780, %781, %708 in 1 : vector<8x8xf32>, vector<8x8xf32>, vector<8x8xf32>, vector<8x1xf32> -> vector<8x25xf32>
    %c0_269 = arith.constant 0 : index
    %c0_270 = arith.constant 0 : index
    %783 = vector.load %arg3[%c0_269, %c0_270] : memref<8x25xf32, #tpu.memory_space<vmem>>, vector<8x25xf32>
    tpu.vector_store %arg3[%c0_269, %c0_270], %782 {strides = array<i32>} : memref<8x25xf32, #tpu.memory_space<vmem>>, vector<8x25xf32>,
    return
  }
}

</mosaic_0001>

<llo_original>
// kernel: fbsde_forward.1
$region0: #{fbsde_forward.1}
  #allocation0 [shape = 'u32[]', space=smem, size = 0x4, offset = 0x4, fixed_abs, tag = 'smem constant byte address 0x4 - core index']
  #allocation1 [shape = 'u32[144,128]{1,0:T(1,128)}', space=vmem, size = 0x12000, scoped, tag = 'internal scratch']
  %s0 = inlined_call_operand.vmem [shape: f32[8,8,8], index: 0, kind: input, shape index: {}]
  %s1 = inlined_call_operand.vmem [shape: bf16[144,128], index: 1, kind: input, shape index: {}]
  %s2 = inlined_call_operand.vmem [shape: f32[24,128], index: 2, kind: input, shape index: {}]
  %s3 = inlined_call_operand.vmem [shape: f32[8,25], index: 3, kind: output, shape index: {0}]
  %s4 = inlined_call_operand.vmem [shape: f32[9,8,8], index: 4, kind: output, shape index: {1}]
  %s5 = inlined_call_operand.vmem [shape: f32[8,8,4], index: 5, kind: output, shape index: {2}]
  %6 = xla_tuple %s3, %s4, %s5
  %s7 = sld [smem:[#allocation0]]
  $region38: #{fbsde_forward.1} parent=0
    _
  %s9 = ssub.s32 1, %s7
  %s10 = scalar_select 0, %s9, %s7
  // Predicated region
  $region2: #{fbsde_forward.1} parent=0 // pred_check
    _
  $region3: #{fbsde_forward.1} parent=0 // pred_check_branch
    %12 = sbr.rel (0) target = $region5
  $region4: #{fbsde_forward.1} parent=0 // pred_region
    _
  $region5: #{fbsde_forward.1} parent=0 // pred_fallthru
    _
  // Predicated region
  $region6: #{fbsde_forward.1} parent=0 // pred_check
    _
  $region7: #{fbsde_forward.1} parent=0 // pred_check_branch
    %14 = sbr.rel (0) target = $region9
  $region8: #{fbsde_forward.1} parent=0 // pred_region
    _
  $region9: #{fbsde_forward.1} parent=0 // pred_fallthru
    _
  // Predicated region
  $region10: #{fbsde_forward.1} parent=0 // pred_check
    _
  $region11: #{fbsde_forward.1} parent=0 // pred_check_branch
    %16 = sbr.rel (0) target = $region13
  $region12: #{fbsde_forward.1} parent=0 // pred_region
    _
  $region13: #{fbsde_forward.1} parent=0 // pred_fallthru
    _
  %v18 = vld [vmem:[%s1] sm:$0xf]
  %v19 = vld [vmem:[%s1 + $0x8] sm:$0xf]
  %v20 = vld [vmem:[%s1 + $0xc] sm:$0xf]
  %v21 = vld [vmem:[%s1 + $0x10] sm:$0xf]
  %v22 = vld [vmem:[%s1 + $0x14] sm:$0xf]
  %v23 = vld [vmem:[%s1 + $0x18] sm:$0xf]
  %v24 = vld [vmem:[%s1 + $0x1c] sm:$0xf]
  %v25 = vld [vmem:[%s1 + $0x20] sm:$0xf]
  %v26 = vld [vmem:[%s1 + $0x24] sm:$0xf]
  %v27 = vld [vmem:[%s1 + $0x28] sm:$0xf]
  %v28 = vld [vmem:[%s1 + $0x2c] sm:$0xf]
  %v29 = vld [vmem:[%s1 + $0x30] sm:$0xf]
  %v30 = vld [vmem:[%s1 + $0x34] sm:$0xf]
  %v31 = vld [vmem:[%s1 + $0x38] sm:$0xf]
  %v32 = vld [vmem:[%s1 + $0x3c] sm:$0xf]
  %v33 = vld [vmem:[%s1 + $0x40] sm:$0xf]
  %v34 = vld [vmem:[%s1 + $0x44] sm:$0xf]
  %v35 = vld [vmem:[%s2] sm:$0xff]
  %v36 = vld [vmem:[%s2 + $0x8] sm:$0x1]
  %v37 = vld [vmem:[%s2 + $0x9] sm:$0x1]
  %v38 = vld [vmem:[%s2 + $0xa] sm:$0x1]
  %v39 = vld [vmem:[%s2 + $0xb] sm:$0x1]
  %v40 = vlaneseq
  %v41 = vshrl.u32 %v40, 7
  %v42 = vsub.s32 0, %v41
  %v43 = vrot.slane %v39, %v42
  %v44 = vld [vmem:[%s2 + $0xc] sm:$0x1]
  %v45 = vlaneseq
  %v46 = vshrl.u32 %v45, 7
  %v47 = vsub.s32 0, %v46
  %v48 = vrot.slane %v44, %v47
  %v49 = vld [vmem:[%s2 + $0xd] sm:$0x1]
  %v50 = vlaneseq
  %v51 = vshrl.u32 %v50, 7
  %v52 = vsub.s32 0, %v51
  %v53 = vrot.slane %v49, %v52
  %v54 = vld [vmem:[%s2 + $0xe] sm:$0x1]
  %v55 = vlaneseq
  %v56 = vshrl.u32 %v55, 7
  %v57 = vsub.s32 0, %v56
  %v58 = vrot.slane %v54, %v57
  %v59 = vld [vmem:[%s2 + $0xf] sm:$0x1]
  %v60 = vlaneseq
  %v61 = vshrl.u32 %v60, 7
  %v62 = vsub.s32 0, %v61
  %v63 = vrot.slane %v59, %v62
  %v64 = vld [vmem:[%s2 + $0x10] sm:$0x1]
  %v65 = vlaneseq
  %v66 = vshrl.u32 %v65, 7
  %v67 = vsub.s32 0, %v66
  %v68 = vrot.slane %v64, %v67
  %vm69 = vcmask 64512
  %70 = vst.msk [vmem:[%s4] sm:$0xff] %vm69, %v43
  %v71 = vpack.c.bf16 %v43, %v43
  %v72 = vpack.c.bf16 %v53, %v53
  %v77 = vunpack.c.l.b16 %v19
  %v78 = vunpack.c.l.b16 %v20
  %v79 = vunpack.c.l.b16 %v21
  %v80 = vunpack.c.l.b16 %v22
  %v81 = vpack.c.b16 %v78, %v77
  %v82 = vpack.c.b16 %v80, %v79
  %vm85 = vcmask 261120
  %v87 = vsel %vm85, %v72, 0
  %89 = vmatprep.subr.bf16.mxu0 0
  %90 = vmatpush1.bf16.msra.mxu0 %v81
  %91 = vmatprep.subr.bf16.mxu0 0
  %92 = vmatpush1.bf16.msra.mxu0 %v82
  %93 = vmatprep.subr.bf16.mxu0 0
  %94 = vmatpush1.bf16.msra.mxu0 0
  %95 = vmatprep.subr.bf16.mxu0 0
  %96 = vmatpush1.bf16.msra.mxu0 0
  %97 = vmatprep.subr.bf16.mxu0 0
  %98 = vmatpush1.bf16.msra.mxu0 0
  %99 = vmatprep.subr.bf16.mxu0 0
  %100 = vmatpush1.bf16.msra.mxu0 0
  %101 = vmatprep.subr.bf16.mxu0 0
  %102 = vmatpush1.bf16.msra.mxu0 0
  %103 = vmatprep.subr.bf16.mxu0 0
  %104 = vmatpush1.bf16.msra.mxu0 0
  %105 = vmatprep.subr.bf16.mxu0 0
  %106 = vmatpush1.bf16.msra.mxu0 0
  %107 = vmatprep.subr.bf16.mxu0 0
  %108 = vmatpush1.bf16.msra.mxu0 0
  %109 = vmatprep.subr.bf16.mxu0 0
  %110 = vmatpush1.bf16.msra.mxu0 0
  %111 = vmatprep.subr.bf16.mxu0 0
  %112 = vmatpush1.bf16.msra.mxu0 0
  %113 = vmatprep.subr.bf16.mxu0 0
  %114 = vmatpush1.bf16.msra.mxu0 0
  %115 = vmatprep.subr.bf16.mxu0 0
  %116 = vmatpush1.bf16.msra.mxu0 0
  %117 = vmatprep.subr.bf16.mxu0 0
  %118 = vmatpush1.bf16.msra.mxu0 0
  %119 = vmatprep.subr.bf16.mxu0 0
  %120 = vmatpush1.bf16.msra.mxu0 0
  %121 = vmatprep.mubr.bf16.mxu0 0
  %122 = vmatmul.mubr.bf16.gmra.mrb[0].mxu0 %v87
  %v123 = vpop.f32.mrb[0].mxu0
  %v124 = vadd.f32 0.0, %v123
  %v125 = vpop.f32.mrb[0].mxu0
  %v126 = vpop.f32.mrb[0].mxu0
  %v127 = vpop.f32.mrb[0].mxu0
  %128 = vdwg.mxu0
  %v130 = vsel %vm69, %v71, 0
  %vm132 = vcmask 1043456
  %v134 = vsel %vm132, %v18, 0
  %136 = vmatprep.subr.bf16.mxu0 0
  %137 = vmatpush1.bf16.msra.mxu0 %v134
  %138 = vmatprep.subr.bf16.mxu0 0
  %139 = vmatpush1.bf16.msra.mxu0 0
  %140 = vmatprep.subr.bf16.mxu0 0
  %141 = vmatpush1.bf16.msra.mxu0 0
  %142 = vmatprep.subr.bf16.mxu0 0
  %143 = vmatpush1.bf16.msra.mxu0 0
  %144 = vmatprep.subr.bf16.mxu0 0
  %145 = vmatpush1.bf16.msra.mxu0 0
  %146 = vmatprep.subr.bf16.mxu0 0
  %147 = vmatpush1.bf16.msra.mxu0 0
  %148 = vmatprep.subr.bf16.mxu0 0
  %149 = vmatpush1.bf16.msra.mxu0 0
  %150 = vmatprep.subr.bf16.mxu0 0
  %151 = vmatpush1.bf16.msra.mxu0 0
  %152 = vmatprep.subr.bf16.mxu0 0
  %153 = vmatpush1.bf16.msra.mxu0 0
  %154 = vmatprep.subr.bf16.mxu0 0
  %155 = vmatpush1.bf16.msra.mxu0 0
  %156 = vmatprep.subr.bf16.mxu0 0
  %157 = vmatpush1.bf16.msra.mxu0 0
  %158 = vmatprep.subr.bf16.mxu0 0
  %159 = vmatpush1.bf16.msra.mxu0 0
  %160 = vmatprep.subr.bf16.mxu0 0
  %161 = vmatpush1.bf16.msra.mxu0 0
  %162 = vmatprep.subr.bf16.mxu0 0
  %163 = vmatpush1.bf16.msra.mxu0 0
  %164 = vmatprep.subr.bf16.mxu0 0
  %165 = vmatpush1.bf16.msra.mxu0 0
  %166 = vmatprep.subr.bf16.mxu0 0
  %167 = vmatpush1.bf16.msra.mxu0 0
  %168 = vmatprep.mubr.bf16.mxu0 0
  %169 = vmatmul.mubr.bf16.gmra.mrb[0].mxu0 %v130
  %v170 = vpop.f32.mrb[0].mxu0
  %v171 = vadd.f32 %v124, %v170
  %v172 = vpop.f32.mrb[0].mxu0
  %v173 = vpop.f32.mrb[0].mxu0
  %v174 = vpop.f32.mrb[0].mxu0
  %175 = vdwg.mxu0
  %v176 = vlaneseq
  %v177 = vshrl.u32 %v176, 7
  %v178 = vsub.s32 0, %v177
  %v179 = vrot.slane %v36, %v178
  %v180 = vadd.f32 %v171, %v179
  %v181 = vtanh.pop %v180
  %v182 = vmul.f32 %v181, 0.5
  %v183 = vadd.f32 %v182, 0.5
  %185 = vrot.lane.b32.xlu0 %v58, 32
  %v186 = vpop.permute.xlu0 %185
  %v188 = vmul.f32 %v183, %v186
  %190 = vrot.lane.b32.xlu0 %v181, 64
  %v191 = vpop.permute.xlu0 %190
  %v193 = vmul.f32 %v183, %v191
  %195 = vrot.lane.b32.xlu0 %v193, 32
  %v196 = vpop.permute.xlu0 %195
  %v198 = vadd.f32 %v188, %v196
  %v199 = vtanh.pop %v198
  %201 = vrot.lane.b32.xlu0 %v199, 64
  %v202 = vpop.permute.xlu0 %201
  %v204 = vmul.f32 %v183, %v202
  %v205 = vpack.c.bf16 %v204, %v204
  %v206 = vpack.c.bf16 %v63, %v63
  %v211 = vunpack.c.l.b16 %v27
  %v212 = vunpack.c.l.b16 %v28
  %v213 = vunpack.c.l.b16 %v29
  %v214 = vunpack.c.l.b16 %v30
  %v215 = vpack.c.b16 %v212, %v211
  %v216 = vpack.c.b16 %v214, %v213
  %v220 = vsel %vm85, %v206, 0
  %222 = vmatprep.subr.bf16.mxu0 0
  %223 = vmatpush1.bf16.msra.mxu0 %v215
  %224 = vmatprep.subr.bf16.mxu0 0
  %225 = vmatpush1.bf16.msra.mxu0 %v216
  %226 = vmatprep.subr.bf16.mxu0 0
  %227 = vmatpush1.bf16.msra.mxu0 0
  %228 = vmatprep.subr.bf16.mxu0 0
  %229 = vmatpush1.bf16.msra.mxu0 0
  %230 = vmatprep.subr.bf16.mxu0 0
  %231 = vmatpush1.bf16.msra.mxu0 0
  %232 = vmatprep.subr.bf16.mxu0 0
  %233 = vmatpush1.bf16.msra.mxu0 0
  %234 = vmatprep.subr.bf16.mxu0 0
  %235 = vmatpush1.bf16.msra.mxu0 0
  %236 = vmatprep.subr.bf16.mxu0 0
  %237 = vmatpush1.bf16.msra.mxu0 0
  %238 = vmatprep.subr.bf16.mxu0 0
  %239 = vmatpush1.bf16.msra.mxu0 0
  %240 = vmatprep.subr.bf16.mxu0 0
  %241 = vmatpush1.bf16.msra.mxu0 0
  %242 = vmatprep.subr.bf16.mxu0 0
  %243 = vmatpush1.bf16.msra.mxu0 0
  %244 = vmatprep.subr.bf16.mxu0 0
  %245 = vmatpush1.bf16.msra.mxu0 0
  %246 = vmatprep.subr.bf16.mxu0 0
  %247 = vmatpush1.bf16.msra.mxu0 0
  %248 = vmatprep.subr.bf16.mxu0 0
  %249 = vmatpush1.bf16.msra.mxu0 0
  %250 = vmatprep.subr.bf16.mxu0 0
  %251 = vmatpush1.bf16.msra.mxu0 0
  %252 = vmatprep.subr.bf16.mxu0 0
  %253 = vmatpush1.bf16.msra.mxu0 0
  %254 = vmatprep.mubr.bf16.mxu0 0
  %255 = vmatmul.mubr.bf16.gmra.mrb[0].mxu0 %v220
  %v256 = vpop.f32.mrb[0].mxu0
  %v257 = vadd.f32 0.0, %v256
  %v258 = vpop.f32.mrb[0].mxu0
  %v259 = vpop.f32.mrb[0].mxu0
  %v260 = vpop.f32.mrb[0].mxu0
  %261 = vdwg.mxu0
  %263 = vrot.lane.b32.xlu0 %v205, 32
  %v264 = vpop.permute.xlu0 %263
  %v269 = vunpack.c.l.b16 %v23
  %v270 = vunpack.c.l.b16 %v24
  %v271 = vunpack.c.l.b16 %v25
  %v272 = vunpack.c.l.b16 %v26
  %v273 = vpack.c.b16 %v270, %v269
  %v274 = vpack.c.b16 %v272, %v271
  %v278 = vsel %vm85, %v264, 0
  %280 = vmatprep.subr.bf16.mxu0 0
  %281 = vmatpush1.bf16.msra.mxu0 %v273
  %282 = vmatprep.subr.bf16.mxu0 0
  %283 = vmatpush1.bf16.msra.mxu0 %v274
  %284 = vmatprep.subr.bf16.mxu0 0
  %285 = vmatpush1.bf16.msra.mxu0 0
  %286 = vmatprep.subr.bf16.mxu0 0
  %287 = vmatpush1.bf16.msra.mxu0 0
  %288 = vmatprep.subr.bf16.mxu0 0
  %289 = vmatpush1.bf16.msra.mxu0 0
  %290 = vmatprep.subr.bf16.mxu0 0
  %291 = vmatpush1.bf16.msra.mxu0 0
  %292 = vmatprep.subr.bf16.mxu0 0
  %293 = vmatpush1.bf16.msra.mxu0 0
  %294 = vmatprep.subr.bf16.mxu0 0
  %295 = vmatpush1.bf16.msra.mxu0 0
  %296 = vmatprep.subr.bf16.mxu0 0
  %297 = vmatpush1.bf16.msra.mxu0 0
  %298 = vmatprep.subr.bf16.mxu0 0
  %299 = vmatpush1.bf16.msra.mxu0 0
  %300 = vmatprep.subr.bf16.mxu0 0
  %301 = vmatpush1.bf16.msra.mxu0 0
  %302 = vmatprep.subr.bf16.mxu0 0
  %303 = vmatpush1.bf16.msra.mxu0 0
  %304 = vmatprep.subr.bf16.mxu0 0
  %305 = vmatpush1.bf16.msra.mxu0 0
  %306 = vmatprep.subr.bf16.mxu0 0
  %307 = vmatpush1.bf16.msra.mxu0 0
  %308 = vmatprep.subr.bf16.mxu0 0
  %309 = vmatpush1.bf16.msra.mxu0 0
  %310 = vmatprep.subr.bf16.mxu0 0
  %311 = vmatpush1.bf16.msra.mxu0 0
  %312 = vmatprep.mubr.bf16.mxu0 0
  %313 = vmatmul.mubr.bf16.gmra.mrb[0].mxu0 %v278
  %v314 = vpop.f32.mrb[0].mxu0
  %v315 = vadd.f32 %v257, %v314
  %v316 = vpop.f32.mrb[0].mxu0
  %v317 = vpop.f32.mrb[0].mxu0
  %v318 = vpop.f32.mrb[0].mxu0
  %319 = vdwg.mxu0
  %v320 = vlaneseq
  %v321 = vshrl.u32 %v320, 7
  %v322 = vsub.s32 0, %v321
  %v323 = vrot.slane %v37, %v322
  %v324 = vadd.f32 %v315, %v323
  %v325 = vtanh.pop %v324
  %v326 = vmul.f32 %v325, 0.5
  %v327 = vadd.f32 %v326, 0.5
  %329 = vrot.lane.b32.xlu0 %v68, 32
  %v330 = vpop.permute.xlu0 %329
  %v332 = vmul.f32 %v327, %v330
  %334 = vrot.lane.b32.xlu0 %v325, 64
  %v335 = vpop.permute.xlu0 %334
  %v337 = vmul.f32 %v327, %v335
  %339 = vrot.lane.b32.xlu0 %v337, 32
  %v340 = vpop.permute.xlu0 %339
  %v342 = vadd.f32 %v332, %v340
  %v343 = vtanh.pop %v342
  %345 = vrot.lane.b32.xlu0 %v343, 64
  %v346 = vpop.permute.xlu0 %345
  %v348 = vmul.f32 %v327, %v346
  %v349 = vpack.c.bf16 %v348, %v348
  %v350 = vlaneseq
  %v351 = vshrl.u32 %v350, 7
  %v352 = vsub.s32 0, %v351
  %v353 = vrot.slane %v38, %v352
  %355 = vrot.lane.b32.xlu0 %v349, 32
  %v356 = vpop.permute.xlu0 %355
  %v361 = vunpack.c.l.b16 %v31
  %v362 = vunpack.c.l.b16 %v32
  %v363 = vunpack.c.l.b16 %v33
  %v364 = vunpack.c.l.b16 %v34
  %v365 = vpack.c.b16 %v362, %v361
  %v366 = vpack.c.b16 %v364, %v363
  %v370 = vsel %vm85, %v356, 0
  %372 = vmatprep.subr.bf16.mxu0 0
  %373 = vmatpush1.bf16.msra.mxu0 %v365
  %374 = vmatprep.subr.bf16.mxu0 0
  %375 = vmatpush1.bf16.msra.mxu0 %v366
  %376 = vmatprep.subr.bf16.mxu0 0
  %377 = vmatpush1.bf16.msra.mxu0 0
  %378 = vmatprep.subr.bf16.mxu0 0
  %379 = vmatpush1.bf16.msra.mxu0 0
  %380 = vmatprep.subr.bf16.mxu0 0
  %381 = vmatpush1.bf16.msra.mxu0 0
  %382 = vmatprep.subr.bf16.mxu0 0
  %383 = vmatpush1.bf16.msra.mxu0 0
  %384 = vmatprep.subr.bf16.mxu0 0
  %385 = vmatpush1.bf16.msra.mxu0 0
  %386 = vmatprep.subr.bf16.mxu0 0
  %387 = vmatpush1.bf16.msra.mxu0 0
  %388 = vmatprep.subr.bf16.mxu0 0
  %389 = vmatpush1.bf16.msra.mxu0 0
  %390 = vmatprep.subr.bf16.mxu0 0
  %391 = vmatpush1.bf16.msra.mxu0 0
  %392 = vmatprep.subr.bf16.mxu0 0
  %393 = vmatpush1.bf16.msra.mxu0 0
  %394 = vmatprep.subr.bf16.mxu0 0
  %395 = vmatpush1.bf16.msra.mxu0 0
  %396 = vmatprep.subr.bf16.mxu0 0
  %397 = vmatpush1.bf16.msra.mxu0 0
  %398 = vmatprep.subr.bf16.mxu0 0
  %399 = vmatpush1.bf16.msra.mxu0 0
  %400 = vmatprep.subr.bf16.mxu0 0
  %401 = vmatpush1.bf16.msra.mxu0 0
  %402 = vmatprep.subr.bf16.mxu0 0
  %403 = vmatpush1.bf16.msra.mxu0 0
  %404 = vmatprep.mubr.bf16.mxu0 0
  %405 = vmatmul.mubr.bf16.gmra.mrb[0].mxu0 %v370
  %v406 = vpop.f32.mrb[0].mxu0
  %v407 = vadd.f32 %v353, %v406
  %v408 = vpop.f32.mrb[0].mxu0
  %v409 = vpop.f32.mrb[0].mxu0
  %v410 = vpop.f32.mrb[0].mxu0
  %411 = vdwg.mxu0
  %v412 = vld [vmem:[%s0] sm:$0xff]
  %v413 = vmul.f32 %v407, %v407
  %415 = vrot.lane.b32.xlu0 %v413, 112
  %v416 = vpop.permute.xlu0 %415
  %vm418 = vcmask 31744
  %v419 = vsel %vm418, %v416, 0.0
  %420 = vadd.xlane.f32.xlu0 %v419
  %v421 = vpop.xlane.xlu0 %420
  %v422 = vmul.f32 %v421, 0.05
  %v423 = vadd.f32 %v48, %v422
  %v424 = vmul.f32 %v407, %v412
  %v425 = vsel %vm69, %v424, 0.0
  %426 = vadd.xlane.f32.xlu0 %v425
  %v427 = vpop.xlane.xlu0 %426
  %v428 = vadd.f32 %v423, %v427
  %430 = vrot.lane.b32.xlu0 %v407, 108
  %v431 = vpop.permute.xlu0 %430
  %v434 = vsel %vm69, %v43, 0
  %436 = vmatprep.subr.mxu0 0.0
  %437 = vmatpush1.msra.mxu0 %v35
  %438 = vmatprep.subr.mxu0 0.0
  %439 = vmatpush1.msra.mxu0 0.0
  %440 = vmatprep.subr.mxu0 0.0
  %441 = vmatpush1.msra.mxu0 0.0
  %442 = vmatprep.subr.mxu0 0.0
  %443 = vmatpush1.msra.mxu0 0.0
  %444 = vmatprep.subr.mxu0 0.0
  %445 = vmatpush1.msra.mxu0 0.0
  %446 = vmatprep.subr.mxu0 0.0
  %447 = vmatpush1.msra.mxu0 0.0
  %448 = vmatprep.subr.mxu0 0.0
  %449 = vmatpush1.msra.mxu0 0.0
  %450 = vmatprep.subr.mxu0 0.0
  %451 = vmatpush1.msra.mxu0 0.0
  %452 = vmatprep.subr.mxu0 0.0
  %453 = vmatpush1.msra.mxu0 0.0
  %454 = vmatprep.subr.mxu0 0.0
  %455 = vmatpush1.msra.mxu0 0.0
  %456 = vmatprep.subr.mxu0 0.0
  %457 = vmatpush1.msra.mxu0 0.0
  %458 = vmatprep.subr.mxu0 0.0
  %459 = vmatpush1.msra.mxu0 0.0
  %460 = vmatprep.subr.mxu0 0.0
  %461 = vmatpush1.msra.mxu0 0.0
  %462 = vmatprep.subr.mxu0 0.0
  %463 = vmatpush1.msra.mxu0 0.0
  %464 = vmatprep.subr.mxu0 0.0
  %465 = vmatpush1.msra.mxu0 0.0
  %466 = vmatprep.subr.mxu0 0.0
  %467 = vmatpush1.msra.mxu0 0.0
  %468 = vmatprep.subr.mxu0 0.0
  %469 = vmatpush1.msra.mxu0 0.0
  %470 = vmatprep.subr.mxu0 0.0
  %471 = vmatpush1.msra.mxu0 0.0
  %472 = vmatprep.subr.mxu0 0.0
  %473 = vmatpush1.msra.mxu0 0.0
  %474 = vmatprep.subr.mxu0 0.0
  %475 = vmatpush1.msra.mxu0 0.0
  %476 = vmatprep.subr.mxu0 0.0
  %477 = vmatpush1.msra.mxu0 0.0
  %478 = vmatprep.subr.mxu0 0.0
  %479 = vmatpush1.msra.mxu0 0.0
  %480 = vmatprep.subr.mxu0 0.0
  %481 = vmatpush1.msra.mxu0 0.0
  %482 = vmatprep.subr.mxu0 0.0
  %483 = vmatpush1.msra.mxu0 0.0
  %484 = vmatprep.subr.mxu0 0.0
  %485 = vmatpush1.msra.mxu0 0.0
  %486 = vmatprep.subr.mxu0 0.0
  %487 = vmatpush1.msra.mxu0 0.0
  %488 = vmatprep.subr.mxu0 0.0
  %489 = vmatpush1.msra.mxu0 0.0
  %490 = vmatprep.subr.mxu0 0.0
  %491 = vmatpush1.msra.mxu0 0.0
  %492 = vmatprep.subr.mxu0 0.0
  %493 = vmatpush1.msra.mxu0 0.0
  %494 = vmatprep.subr.mxu0 0.0
  %495 = vmatpush1.msra.mxu0 0.0
  %496 = vmatprep.subr.mxu0 0.0
  %497 = vmatpush1.msra.mxu0 0.0
  %498 = vmatprep.subr.mxu0 0.0
  %499 = vmatpush1.msra.mxu0 0.0
  %500 = vmatprep.mubr.f32.mxu0 0.0
  %501 = vmatmul.mubr.f32.gmra.mrb[0].mxu0 %v434
  %v502 = vpop.f32.mrb[0].mxu0
  %v503 = vadd.f32 %v431, %v502
  %v504 = vpop.f32.mrb[0].mxu0
  %505 = vdwg.mxu0
  %v506 = vadd.f32 %v503, %v412
  %s507 = scalar_lea.vmem %s4, 8
  %508 = vst.msk [vmem:[%s507] sm:$0xff] %vm69, %v506
  %509 = vrot.lane.b32.xlu0 %v407, 112
  %v510 = vpop.permute.xlu0 %509
  %512 = vst.msk [vmem:[%s5] sm:$0xff] %vm418, %v510
  %v513 = vpack.c.bf16 %v506, %v506
  %514 = vmatprep.subr.bf16.mxu0 0
  %515 = vmatpush1.bf16.msra.mxu0 %v81
  %516 = vmatprep.subr.bf16.mxu0 0
  %517 = vmatpush1.bf16.msra.mxu0 %v82
  %518 = vmatprep.subr.bf16.mxu0 0
  %519 = vmatpush1.bf16.msra.mxu0 0
  %520 = vmatprep.subr.bf16.mxu0 0
  %521 = vmatpush1.bf16.msra.mxu0 0
  %522 = vmatprep.subr.bf16.mxu0 0
  %523 = vmatpush1.bf16.msra.mxu0 0
  %524 = vmatprep.subr.bf16.mxu0 0
  %525 = vmatpush1.bf16.msra.mxu0 0
  %526 = vmatprep.subr.bf16.mxu0 0
  %527 = vmatpush1.bf16.msra.mxu0 0
  %528 = vmatprep.subr.bf16.mxu0 0
  %529 = vmatpush1.bf16.msra.mxu0 0
  %530 = vmatprep.subr.bf16.mxu0 0
  %531 = vmatpush1.bf16.msra.mxu0 0
  %532 = vmatprep.subr.bf16.mxu0 0
  %533 = vmatpush1.bf16.msra.mxu0 0
  %534 = vmatprep.subr.bf16.mxu0 0
  %535 = vmatpush1.bf16.msra.mxu0 0
  %536 = vmatprep.subr.bf16.mxu0 0
  %537 = vmatpush1.bf16.msra.mxu0 0
  %538 = vmatprep.subr.bf16.mxu0 0
  %539 = vmatpush1.bf16.msra.mxu0 0
  %540 = vmatprep.subr.bf16.mxu0 0
  %541 = vmatpush1.bf16.msra.mxu0 0
  %542 = vmatprep.subr.bf16.mxu0 0
  %543 = vmatpush1.bf16.msra.mxu0 0
  %544 = vmatprep.subr.bf16.mxu0 0
  %545 = vmatpush1.bf16.msra.mxu0 0
  %546 = vmatprep.mubr.bf16.mxu0 0
  %547 = vmatmul.mubr.bf16.gmra.mrb[0].mxu0 %v278
  %v548 = vpop.f32.mrb[0].mxu0
  %v549 = vadd.f32 0.0, %v548
  %v550 = vpop.f32.mrb[0].mxu0
  %v551 = vpop.f32.mrb[0].mxu0
  %v552 = vpop.f32.mrb[0].mxu0
  %553 = vdwg.mxu0
  %v555 = vsel %vm69, %v513, 0
  %557 = vmatprep.subr.bf16.mxu0 0
  %558 = vmatpush1.bf16.msra.mxu0 %v134
  %559 = vmatprep.subr.bf16.mxu0 0
  %560 = vmatpush1.bf16.msra.mxu0 0
  %561 = vmatprep.subr.bf16.mxu0 0
  %562 = vmatpush1.bf16.msra.mxu0 0
  %563 = vmatprep.subr.bf16.mxu0 0
  %564 = vmatpush1.bf16.msra.mxu0 0
  %565 = vmatprep.subr.bf16.mxu0 0
  %566 = vmatpush1.bf16.msra.mxu0 0
  %567 = vmatprep.subr.bf16.mxu0 0
  %568 = vmatpush1.bf16.msra.mxu0 0
  %569 = vmatprep.subr.bf16.mxu0 0
  %570 = vmatpush1.bf16.msra.mxu0 0
  %571 = vmatprep.subr.bf16.mxu0 0
  %572 = vmatpush1.bf16.msra.mxu0 0
  %573 = vmatprep.subr.bf16.mxu0 0
  %574 = vmatpush1.bf16.msra.mxu0 0
  %575 = vmatprep.subr.bf16.mxu0 0
  %576 = vmatpush1.bf16.msra.mxu0 0
  %577 = vmatprep.subr.bf16.mxu0 0
  %578 = vmatpush1.bf16.msra.mxu0 0
  %579 = vmatprep.subr.bf16.mxu0 0
  %580 = vmatpush1.bf16.msra.mxu0 0
  %581 = vmatprep.subr.bf16.mxu0 0
  %582 = vmatpush1.bf16.msra.mxu0 0
  %583 = vmatprep.subr.bf16.mxu0 0
  %584 = vmatpush1.bf16.msra.mxu0 0
  %585 = vmatprep.subr.bf16.mxu0 0
  %586 = vmatpush1.bf16.msra.mxu0 0
  %587 = vmatprep.subr.bf16.mxu0 0
  %588 = vmatpush1.bf16.msra.mxu0 0
  %589 = vmatprep.mubr.bf16.mxu0 0
  %590 = vmatmul.mubr.bf16.gmra.mrb[0].mxu0 %v555
  %v591 = vpop.f32.mrb[0].mxu0
  %v592 = vadd.f32 %v549, %v591
  %v593 = vpop.f32.mrb[0].mxu0
  %v594 = vpop.f32.mrb[0].mxu0
  %v595 = vpop.f32.mrb[0].mxu0
  %596 = vdwg.mxu0
  %v597 = vadd.f32 %v592, %v179
  %v598 = vtanh.pop %v597
  %v599 = vmul.f32 %v598, 0.5
  %v600 = vadd.f32 %v599, 0.5
  %v601 = vmul.f32 %v600, %v198
  %603 = vrot.lane.b32.xlu0 %v598, 64
  %v604 = vpop.permute.xlu0 %603
  %v606 = vmul.f32 %v600, %v604
  %608 = vrot.lane.b32.xlu0 %v606, 32
  %v609 = vpop.permute.xlu0 %608
  %v611 = vadd.f32 %v601, %v609
  %v612 = vtanh.pop %v611
  %614 = vrot.lane.b32.xlu0 %v612, 64
  %v615 = vpop.permute.xlu0 %614
  %v617 = vmul.f32 %v600, %v615
  %v618 = vpack.c.bf16 %v617, %v617
  %619 = vmatprep.subr.bf16.mxu0 0
  %620 = vmatpush1.bf16.msra.mxu0 %v215
  %621 = vmatprep.subr.bf16.mxu0 0
  %622 = vmatpush1.bf16.msra.mxu0 %v216
  %623 = vmatprep.subr.bf16.mxu0 0
  %624 = vmatpush1.bf16.msra.mxu0 0
  %625 = vmatprep.subr.bf16.mxu0 0
  %626 = vmatpush1.bf16.msra.mxu0 0
  %627 = vmatprep.subr.bf16.mxu0 0
  %628 = vmatpush1.bf16.msra.mxu0 0
  %629 = vmatprep.subr.bf16.mxu0 0
  %630 = vmatpush1.bf16.msra.mxu0 0
  %631 = vmatprep.subr.bf16.mxu0 0
  %632 = vmatpush1.bf16.msra.mxu0 0
  %633 = vmatprep.subr.bf16.mxu0 0
  %634 = vmatpush1.bf16.msra.mxu0 0
  %635 = vmatprep.subr.bf16.mxu0 0
  %636 = vmatpush1.bf16.msra.mxu0 0
  %637 = vmatprep.subr.bf16.mxu0 0
  %638 = vmatpush1.bf16.msra.mxu0 0
  %639 = vmatprep.subr.bf16.mxu0 0
  %640 = vmatpush1.bf16.msra.mxu0 0
  %641 = vmatprep.subr.bf16.mxu0 0
  %642 = vmatpush1.bf16.msra.mxu0 0
  %643 = vmatprep.subr.bf16.mxu0 0
  %644 = vmatpush1.bf16.msra.mxu0 0
  %645 = vmatprep.subr.bf16.mxu0 0
  %646 = vmatpush1.bf16.msra.mxu0 0
  %647 = vmatprep.subr.bf16.mxu0 0
  %648 = vmatpush1.bf16.msra.mxu0 0
  %649 = vmatprep.subr.bf16.mxu0 0
  %650 = vmatpush1.bf16.msra.mxu0 0
  %651 = vmatprep.mubr.bf16.mxu0 0
  %652 = vmatmul.mubr.bf16.gmra.mrb[0].mxu0 %v370
  %v653 = vpop.f32.mrb[0].mxu0
  %v654 = vadd.f32 0.0, %v653
  %v655 = vpop.f32.mrb[0].mxu0
  %v656 = vpop.f32.mrb[0].mxu0
  %v657 = vpop.f32.mrb[0].mxu0
  %658 = vdwg.mxu0
  %660 = vrot.lane.b32.xlu0 %v618, 32
  %v661 = vpop.permute.xlu0 %660
  %v663 = vsel %vm85, %v661, 0
  %665 = vmatprep.subr.bf16.mxu0 0
  %666 = vmatpush1.bf16.msra.mxu0 %v273
  %667 = vmatprep.subr.bf16.mxu0 0
  %668 = vmatpush1.bf16.msra.mxu0 %v274
  %669 = vmatprep.subr.bf16.mxu0 0
  %670 = vmatpush1.bf16.msra.mxu0 0
  %671 = vmatprep.subr.bf16.mxu0 0
  %672 = vmatpush1.bf16.msra.mxu0 0
  %673 = vmatprep.subr.bf16.mxu0 0
  %674 = vmatpush1.bf16.msra.mxu0 0
  %675 = vmatprep.subr.bf16.mxu0 0
  %676 = vmatpush1.bf16.msra.mxu0 0
  %677 = vmatprep.subr.bf16.mxu0 0
  %678 = vmatpush1.bf16.msra.mxu0 0
  %679 = vmatprep.subr.bf16.mxu0 0
  %680 = vmatpush1.bf16.msra.mxu0 0
  %681 = vmatprep.subr.bf16.mxu0 0
  %682 = vmatpush1.bf16.msra.mxu0 0
  %683 = vmatprep.subr.bf16.mxu0 0
  %684 = vmatpush1.bf16.msra.mxu0 0
  %685 = vmatprep.subr.bf16.mxu0 0
  %686 = vmatpush1.bf16.msra.mxu0 0
  %687 = vmatprep.subr.bf16.mxu0 0
  %688 = vmatpush1.bf16.msra.mxu0 0
  %689 = vmatprep.subr.bf16.mxu0 0
  %690 = vmatpush1.bf16.msra.mxu0 0
  %691 = vmatprep.subr.bf16.mxu0 0
  %692 = vmatpush1.bf16.msra.mxu0 0
  %693 = vmatprep.subr.bf16.mxu0 0
  %694 = vmatpush1.bf16.msra.mxu0 0
  %695 = vmatprep.subr.bf16.mxu0 0
  %696 = vmatpush1.bf16.msra.mxu0 0
  %697 = vmatprep.mubr.bf16.mxu0 0
  %698 = vmatmul.mubr.bf16.gmra.mrb[0].mxu0 %v663
  %v699 = vpop.f32.mrb[0].mxu0
  %v700 = vadd.f32 %v654, %v699
  %v701 = vpop.f32.mrb[0].mxu0
  %v702 = vpop.f32.mrb[0].mxu0
  %v703 = vpop.f32.mrb[0].mxu0
  %704 = vdwg.mxu0
  %v705 = vadd.f32 %v700, %v323
  %v706 = vtanh.pop %v705
  %v707 = vmul.f32 %v706, 0.5
  %v708 = vadd.f32 %v707, 0.5
  %v709 = vmul.f32 %v708, %v342
  %711 = vrot.lane.b32.xlu0 %v706, 64
  %v712 = vpop.permute.xlu0 %711
  %v714 = vmul.f32 %v708, %v712
  %716 = vrot.lane.b32.xlu0 %v714, 32
  %v717 = vpop.permute.xlu0 %716
  %v719 = vadd.f32 %v709, %v717
  %v720 = vtanh.pop %v719
  %722 = vrot.lane.b32.xlu0 %v720, 64
  %v723 = vpop.permute.xlu0 %722
  %v725 = vmul.f32 %v708, %v723
  %v726 = vpack.c.bf16 %v725, %v725
  %728 = vrot.lane.b32.xlu0 %v726, 32
  %v729 = vpop.permute.xlu0 %728
  %v731 = vsel %vm85, %v729, 0
  %733 = vmatprep.subr.bf16.mxu0 0
  %734 = vmatpush1.bf16.msra.mxu0 %v365
  %735 = vmatprep.subr.bf16.mxu0 0
  %736 = vmatpush1.bf16.msra.mxu0 %v366
  %737 = vmatprep.subr.bf16.mxu0 0
  %738 = vmatpush1.bf16.msra.mxu0 0
  %739 = vmatprep.subr.bf16.mxu0 0
  %740 = vmatpush1.bf16.msra.mxu0 0
  %741 = vmatprep.subr.bf16.mxu0 0
  %742 = vmatpush1.bf16.msra.mxu0 0
  %743 = vmatprep.subr.bf16.mxu0 0
  %744 = vmatpush1.bf16.msra.mxu0 0
  %745 = vmatprep.subr.bf16.mxu0 0
  %746 = vmatpush1.bf16.msra.mxu0 0
  %747 = vmatprep.subr.bf16.mxu0 0
  %748 = vmatpush1.bf16.msra.mxu0 0
  %749 = vmatprep.subr.bf16.mxu0 0
  %750 = vmatpush1.bf16.msra.mxu0 0
  %751 = vmatprep.subr.bf16.mxu0 0
  %752 = vmatpush1.bf16.msra.mxu0 0
  %753 = vmatprep.subr.bf16.mxu0 0
  %754 = vmatpush1.bf16.msra.mxu0 0
  %755 = vmatprep.subr.bf16.mxu0 0
  %756 = vmatpush1.bf16.msra.mxu0 0
  %757 = vmatprep.subr.bf16.mxu0 0
  %758 = vmatpush1.bf16.msra.mxu0 0
  %759 = vmatprep.subr.bf16.mxu0 0
  %760 = vmatpush1.bf16.msra.mxu0 0
  %761 = vmatprep.subr.bf16.mxu0 0
  %762 = vmatpush1.bf16.msra.mxu0 0
  %763 = vmatprep.subr.bf16.mxu0 0
  %764 = vmatpush1.bf16.msra.mxu0 0
  %765 = vmatprep.mubr.bf16.mxu0 0
  %766 = vmatmul.mubr.bf16.gmra.mrb[0].mxu0 %v731
  %v767 = vpop.f32.mrb[0].mxu0
  %v768 = vadd.f32 %v353, %v767
  %v769 = vpop.f32.mrb[0].mxu0
  %v770 = vpop.f32.mrb[0].mxu0
  %v771 = vpop.f32.mrb[0].mxu0
  %772 = vdwg.mxu0
  %s773 = scalar_lea.vmem %s0, 8
  %v774 = vld [vmem:[%s773] sm:$0xff]
  %v775 = vmul.f32 %v768, %v768
  %777 = vrot.lane.b32.xlu0 %v775, 112
  %v778 = vpop.permute.xlu0 %777
  %v780 = vsel %vm418, %v778, 0.0
  %781 = vadd.xlane.f32.xlu0 %v780
  %v782 = vpop.xlane.xlu0 %781
  %v783 = vmul.f32 %v782, 0.05
  %v784 = vadd.f32 %v428, %v783
  %v785 = vmul.f32 %v768, %v774
  %v786 = vsel %vm69, %v785, 0.0
  %787 = vadd.xlane.f32.xlu0 %v786
  %v788 = vpop.xlane.xlu0 %787
  %v789 = vadd.f32 %v784, %v788
  %791 = vrot.lane.b32.xlu0 %v768, 108
  %v792 = vpop.permute.xlu0 %791
  %v795 = vsel %vm69, %v506, 0
  %797 = vmatprep.subr.mxu0 0.0
  %798 = vmatpush1.msra.mxu0 %v35
  %799 = vmatprep.subr.mxu0 0.0
  %800 = vmatpush1.msra.mxu0 0.0
  %801 = vmatprep.subr.mxu0 0.0
  %802 = vmatpush1.msra.mxu0 0.0
  %803 = vmatprep.subr.mxu0 0.0
  %804 = vmatpush1.msra.mxu0 0.0
  %805 = vmatprep.subr.mxu0 0.0
  %806 = vmatpush1.msra.mxu0 0.0
  %807 = vmatprep.subr.mxu0 0.0
  %808 = vmatpush1.msra.mxu0 0.0
  %809 = vmatprep.subr.mxu0 0.0
  %810 = vmatpush1.msra.mxu0 0.0
  %811 = vmatprep.subr.mxu0 0.0
  %812 = vmatpush1.msra.mxu0 0.0
  %813 = vmatprep.subr.mxu0 0.0
  %814 = vmatpush1.msra.mxu0 0.0
  %815 = vmatprep.subr.mxu0 0.0
  %816 = vmatpush1.msra.mxu0 0.0
  %817 = vmatprep.subr.mxu0 0.0
  %818 = vmatpush1.msra.mxu0 0.0
  %819 = vmatprep.subr.mxu0 0.0
  %820 = vmatpush1.msra.mxu0 0.0
  %821 = vmatprep.subr.mxu0 0.0
  %822 = vmatpush1.msra.mxu0 0.0
  %823 = vmatprep.subr.mxu0 0.0
  %824 = vmatpush1.msra.mxu0 0.0
  %825 = vmatprep.subr.mxu0 0.0
  %826 = vmatpush1.msra.mxu0 0.0
  %827 = vmatprep.subr.mxu0 0.0
  %828 = vmatpush1.msra.mxu0 0.0
  %829 = vmatprep.subr.mxu0 0.0
  %830 = vmatpush1.msra.mxu0 0.0
  %831 = vmatprep.subr.mxu0 0.0
  %832 = vmatpush1.msra.mxu0 0.0
  %833 = vmatprep.subr.mxu0 0.0
  %834 = vmatpush1.msra.mxu0 0.0
  %835 = vmatprep.subr.mxu0 0.0
  %836 = vmatpush1.msra.mxu0 0.0
  %837 = vmatprep.subr.mxu0 0.0
  %838 = vmatpush1.msra.mxu0 0.0
  %839 = vmatprep.subr.mxu0 0.0
  %840 = vmatpush1.msra.mxu0 0.0
  %841 = vmatprep.subr.mxu0 0.0
  %842 = vmatpush1.msra.mxu0 0.0
  %843 = vmatprep.subr.mxu0 0.0
  %844 = vmatpush1.msra.mxu0 0.0
  %845 = vmatprep.subr.mxu0 0.0
  %846 = vmatpush1.msra.mxu0 0.0
  %847 = vmatprep.subr.mxu0 0.0
  %848 = vmatpush1.msra.mxu0 0.0
  %849 = vmatprep.subr.mxu0 0.0
  %850 = vmatpush1.msra.mxu0 0.0
  %851 = vmatprep.subr.mxu0 0.0
  %852 = vmatpush1.msra.mxu0 0.0
  %853 = vmatprep.subr.mxu0 0.0
  %854 = vmatpush1.msra.mxu0 0.0
  %855 = vmatprep.subr.mxu0 0.0
  %856 = vmatpush1.msra.mxu0 0.0
  %857 = vmatprep.subr.mxu0 0.0
  %858 = vmatpush1.msra.mxu0 0.0
  %859 = vmatprep.subr.mxu0 0.0
  %860 = vmatpush1.msra.mxu0 0.0
  %861 = vmatprep.mubr.f32.mxu0 0.0
  %862 = vmatmul.mubr.f32.gmra.mrb[0].mxu0 %v795
  %v863 = vpop.f32.mrb[0].mxu0
  %v864 = vadd.f32 %v792, %v863
  %v865 = vpop.f32.mrb[0].mxu0
  %866 = vdwg.mxu0
  %v867 = vadd.f32 %v864, %v774
  %s868 = scalar_lea.vmem %s4, 16
  %869 = vst.msk [vmem:[%s868] sm:$0xff] %vm69, %v867
  %870 = vrot.lane.b32.xlu0 %v768, 112
  %v871 = vpop.permute.xlu0 %870
  %s873 = scalar_lea.vmem %s5, 8
  %874 = vst.msk [vmem:[%s873] sm:$0xff] %vm418, %v871
  %v875 = vpack.c.bf16 %v867, %v867
  %876 = vmatprep.subr.bf16.mxu0 0
  %877 = vmatpush1.bf16.msra.mxu0 %v81
  %878 = vmatprep.subr.bf16.mxu0 0
  %879 = vmatpush1.bf16.msra.mxu0 %v82
  %880 = vmatprep.subr.bf16.mxu0 0
  %881 = vmatpush1.bf16.msra.mxu0 0
  %882 = vmatprep.subr.bf16.mxu0 0
  %883 = vmatpush1.bf16.msra.mxu0 0
  %884 = vmatprep.subr.bf16.mxu0 0
  %885 = vmatpush1.bf16.msra.mxu0 0
  %886 = vmatprep.subr.bf16.mxu0 0
  %887 = vmatpush1.bf16.msra.mxu0 0
  %888 = vmatprep.subr.bf16.mxu0 0
  %889 = vmatpush1.bf16.msra.mxu0 0
  %890 = vmatprep.subr.bf16.mxu0 0
  %891 = vmatpush1.bf16.msra.mxu0 0
  %892 = vmatprep.subr.bf16.mxu0 0
  %893 = vmatpush1.bf16.msra.mxu0 0
  %894 = vmatprep.subr.bf16.mxu0 0
  %895 = vmatpush1.bf16.msra.mxu0 0
  %896 = vmatprep.subr.bf16.mxu0 0
  %897 = vmatpush1.bf16.msra.mxu0 0
  %898 = vmatprep.subr.bf16.mxu0 0
  %899 = vmatpush1.bf16.msra.mxu0 0
  %900 = vmatprep.subr.bf16.mxu0 0
  %901 = vmatpush1.bf16.msra.mxu0 0
  %902 = vmatprep.subr.bf16.mxu0 0
  %903 = vmatpush1.bf16.msra.mxu0 0
  %904 = vmatprep.subr.bf16.mxu0 0
  %905 = vmatpush1.bf16.msra.mxu0 0
  %906 = vmatprep.subr.bf16.mxu0 0
  %907 = vmatpush1.bf16.msra.mxu0 0
  %908 = vmatprep.mubr.bf16.mxu0 0
  %909 = vmatmul.mubr.bf16.gmra.mrb[0].mxu0 %v663
  %v910 = vpop.f32.mrb[0].mxu0
  %v911 = vadd.f32 0.0, %v910
  %v912 = vpop.f32.mrb[0].mxu0
  %v913 = vpop.f32.mrb[0].mxu0
  %v914 = vpop.f32.mrb[0].mxu0
  %915 = vdwg.mxu0
  %v917 = vsel %vm69, %v875, 0
  %919 = vmatprep.subr.bf16.mxu0 0
  %920 = vmatpush1.bf16.msra.mxu0 %v134
  %921 = vmatprep.subr.bf16.mxu0 0
  %922 = vmatpush1.bf16.msra.mxu0 0
  %923 = vmatprep.subr.bf16.mxu0 0
  %924 = vmatpush1.bf16.msra.mxu0 0
  %925 = vmatprep.subr.bf16.mxu0 0
  %926 = vmatpush1.bf16.msra.mxu0 0
  %927 = vmatprep.subr.bf16.mxu0 0
  %928 = vmatpush1.bf16.msra.mxu0 0
  %929 = vmatprep.subr.bf16.mxu0 0
  %930 = vmatpush1.bf16.msra.mxu0 0
  %931 = vmatprep.subr.bf16.mxu0 0
  %932 = vmatpush1.bf16.msra.mxu0 0
  %933 = vmatprep.subr.bf16.mxu0 0
  %934 = vmatpush1.bf16.msra.mxu0 0
  %935 = vmatprep.subr.bf16.mxu0 0
  %936 = vmatpush1.bf16.msra.mxu0 0
  %937 = vmatprep.subr.bf16.mxu0 0
  %938 = vmatpush1.bf16.msra.mxu0 0
  %939 = vmatprep.subr.bf16.mxu0 0
  %940 = vmatpush1.bf16.msra.mxu0 0
  %941 = vmatprep.subr.bf16.mxu0 0
  %942 = vmatpush1.bf16.msra.mxu0 0
  %943 = vmatprep.subr.bf16.mxu0 0
  %944 = vmatpush1.bf16.msra.mxu0 0
  %945 = vmatprep.subr.bf16.mxu0 0
  %946 = vmatpush1.bf16.msra.mxu0 0
  %947 = vmatprep.subr.bf16.mxu0 0
  %948 = vmatpush1.bf16.msra.mxu0 0
  %949 = vmatprep.subr.bf16.mxu0 0
  %950 = vmatpush1.bf16.msra.mxu0 0
  %951 = vmatprep.mubr.bf16.mxu0 0
  %952 = vmatmul.mubr.bf16.gmra.mrb[0].mxu0 %v917
  %v953 = vpop.f32.mrb[0].mxu0
  %v954 = vadd.f32 %v911, %v953
  %v955 = vpop.f32.mrb[0].mxu0
  %v956 = vpop.f32.mrb[0].mxu0
  %v957 = vpop.f32.mrb[0].mxu0
  %958 = vdwg.mxu0
  %v959 = vadd.f32 %v954, %v179
  %v960 = vtanh.pop %v959
  %v961 = vmul.f32 %v960, 0.5
  %v962 = vadd.f32 %v961, 0.5
  %v963 = vmul.f32 %v962, %v611
  %965 = vrot.lane.b32.xlu0 %v960, 64
  %v966 = vpop.permute.xlu0 %965
  %v968 = vmul.f32 %v962, %v966
  %970 = vrot.lane.b32.xlu0 %v968, 32
  %v971 = vpop.permute.xlu0 %970
  %v973 = vadd.f32 %v963, %v971
  %v974 = vtanh.pop %v973
  %976 = vrot.lane.b32.xlu0 %v974, 64
  %v977 = vpop.permute.xlu0 %976
  %v979 = vmul.f32 %v962, %v977
  %v980 = vpack.c.bf16 %v979, %v979
  %981 = vmatprep.subr.bf16.mxu0 0
  %982 = vmatpush1.bf16.msra.mxu0 %v215
  %983 = vmatprep.subr.bf16.mxu0 0
  %984 = vmatpush1.bf16.msra.mxu0 %v216
  %985 = vmatprep.subr.bf16.mxu0 0
  %986 = vmatpush1.bf16.msra.mxu0 0
  %987 = vmatprep.subr.bf16.mxu0 0
  %988 = vmatpush1.bf16.msra.mxu0 0
  %989 = vmatprep.subr.bf16.mxu0 0
  %990 = vmatpush1.bf16.msra.mxu0 0
  %991 = vmatprep.subr.bf16.mxu0 0
  %992 = vmatpush1.bf16.msra.mxu0 0
  %993 = vmatprep.subr.bf16.mxu0 0
  %994 = vmatpush1.bf16.msra.mxu0 0
  %995 = vmatprep.subr.bf16.mxu0 0
  %996 = vmatpush1.bf16.msra.mxu0 0
  %997 = vmatprep.subr.bf16.mxu0 0
  %998 = vmatpush1.bf16.msra.mxu0 0
  %999 = vmatprep.subr.bf16.mxu0 0
  %1000 = vmatpush1.bf16.msra.mxu0 0
  %1001 = vmatprep.subr.bf16.mxu0 0
  %1002 = vmatpush1.bf16.msra.mxu0 0
  %1003 = vmatprep.subr.bf16.mxu0 0
  %1004 = vmatpush1.bf16.msra.mxu0 0
  %1005 = vmatprep.subr.bf16.mxu0 0
  %1006 = vmatpush1.bf16.msra.mxu0 0
  %1007 = vmatprep.subr.bf16.mxu0 0
  %1008 = vmatpush1.bf16.msra.mxu0 0
  %1009 = vmatprep.subr.bf16.mxu0 0
  %1010 = vmatpush1.bf16.msra.mxu0 0
  %1011 = vmatprep.subr.bf16.mxu0 0
  %1012 = vmatpush1.bf16.msra.mxu0 0
  %1013 = vmatprep.mubr.bf16.mxu0 0
  %1014 = vmatmul.mubr.bf16.gmra.mrb[0].mxu0 %v731
  %v1015 = vpop.f32.mrb[0].mxu0
  %v1016 = vadd.f32 0.0, %v1015
  %v1017 = vpop.f32.mrb[0].mxu0
  %v1018 = vpop.f32.mrb[0].mxu0
  %v1019 = vpop.f32.mrb[0].mxu0
  %1020 = vdwg.mxu0
  %1022 = vrot.lane.b32.xlu0 %v980, 32
  %v1023 = vpop.permute.xlu0 %1022
  %v1025 = vsel %vm85, %v1023, 0
  %1027 = vmatprep.subr.bf16.mxu0 0
  %1028 = vmatpush1.bf16.msra.mxu0 %v273
  %1029 = vmatprep.subr.bf16.mxu0 0
  %1030 = vmatpush1.bf16.msra.mxu0 %v274
  %1031 = vmatprep.subr.bf16.mxu0 0
  %1032 = vmatpush1.bf16.msra.mxu0 0
  %1033 = vmatprep.subr.bf16.mxu0 0
  %1034 = vmatpush1.bf16.msra.mxu0 0
  %1035 = vmatprep.subr.bf16.mxu0 0
  %1036 = vmatpush1.bf16.msra.mxu0 0
  %1037 = vmatprep.subr.bf16.mxu0 0
  %1038 = vmatpush1.bf16.msra.mxu0 0
  %1039 = vmatprep.subr.bf16.mxu0 0
  %1040 = vmatpush1.bf16.msra.mxu0 0
  %1041 = vmatprep.subr.bf16.mxu0 0
  %1042 = vmatpush1.bf16.msra.mxu0 0
  %1043 = vmatprep.subr.bf16.mxu0 0
  %1044 = vmatpush1.bf16.msra.mxu0 0
  %1045 = vmatprep.subr.bf16.mxu0 0
  %1046 = vmatpush1.bf16.msra.mxu0 0
  %1047 = vmatprep.subr.bf16.mxu0 0
  %1048 = vmatpush1.bf16.msra.mxu0 0
  %1049 = vmatprep.subr.bf16.mxu0 0
  %1050 = vmatpush1.bf16.msra.mxu0 0
  %1051 = vmatprep.subr.bf16.mxu0 0
  %1052 = vmatpush1.bf16.msra.mxu0 0
  %1053 = vmatprep.subr.bf16.mxu0 0
  %1054 = vmatpush1.bf16.msra.mxu0 0
  %1055 = vmatprep.subr.bf16.mxu0 0
  %1056 = vmatpush1.bf16.msra.mxu0 0
  %1057 = vmatprep.subr.bf16.mxu0 0
  %1058 = vmatpush1.bf16.msra.mxu0 0
  %1059 = vmatprep.mubr.bf16.mxu0 0
  %1060 = vmatmul.mubr.bf16.gmra.mrb[0].mxu0 %v1025
  %v1061 = vpop.f32.mrb[0].mxu0
  %v1062 = vadd.f32 %v1016, %v1061
  %v1063 = vpop.f32.mrb[0].mxu0
  %v1064 = vpop.f32.mrb[0].mxu0
  %v1065 = vpop.f32.mrb[0].mxu0
  %1066 = vdwg.mxu0
  %v1067 = vadd.f32 %v1062, %v323
  %v1068 = vtanh.pop %v1067
  %v1069 = vmul.f32 %v1068, 0.5
  %v1070 = vadd.f32 %v1069, 0.5
  %v1071 = vmul.f32 %v1070, %v719
  %1073 = vrot.lane.b32.xlu0 %v1068, 64
  %v1074 = vpop.permute.xlu0 %1073
  %v1076 = vmul.f32 %v1070, %v1074
  %1078 = vrot.lane.b32.xlu0 %v1076, 32
  %v1079 = vpop.permute.xlu0 %1078
  %v1081 = vadd.f32 %v1071, %v1079
  %v1082 = vtanh.pop %v1081
  %1084 = vrot.lane.b32.xlu0 %v1082, 64
  %v1085 = vpop.permute.xlu0 %1084
  %v1087 = vmul.f32 %v1070, %v1085
  %v1088 = vpack.c.bf16 %v1087, %v1087
  %1090 = vrot.lane.b32.xlu0 %v1088, 32
  %v1091 = vpop.permute.xlu0 %1090
  %v1093 = vsel %vm85, %v1091, 0
  %1095 = vmatprep.subr.bf16.mxu0 0
  %1096 = vmatpush1.bf16.msra.mxu0 %v365
  %1097 = vmatprep.subr.bf16.mxu0 0
  %1098 = vmatpush1.bf16.msra.mxu0 %v366
  %1099 = vmatprep.subr.bf16.mxu0 0
  %1100 = vmatpush1.bf16.msra.mxu0 0
  %1101 = vmatprep.subr.bf16.mxu0 0
  %1102 = vmatpush1.bf16.msra.mxu0 0
  %1103 = vmatprep.subr.bf16.mxu0 0
  %1104 = vmatpush1.bf16.msra.mxu0 0
  %1105 = vmatprep.subr.bf16.mxu0 0
  %1106 = vmatpush1.bf16.msra.mxu0 0
  %1107 = vmatprep.subr.bf16.mxu0 0
  %1108 = vmatpush1.bf16.msra.mxu0 0
  %1109 = vmatprep.subr.bf16.mxu0 0
  %1110 = vmatpush1.bf16.msra.mxu0 0
  %1111 = vmatprep.subr.bf16.mxu0 0
  %1112 = vmatpush1.bf16.msra.mxu0 0
  %1113 = vmatprep.subr.bf16.mxu0 0
  %1114 = vmatpush1.bf16.msra.mxu0 0
  %1115 = vmatprep.subr.bf16.mxu0 0
  %1116 = vmatpush1.bf16.msra.mxu0 0
  %1117 = vmatprep.subr.bf16.mxu0 0
  %1118 = vmatpush1.bf16.msra.mxu0 0
  %1119 = vmatprep.subr.bf16.mxu0 0
  %1120 = vmatpush1.bf16.msra.mxu0 0
  %1121 = vmatprep.subr.bf16.mxu0 0
  %1122 = vmatpush1.bf16.msra.mxu0 0
  %1123 = vmatprep.subr.bf16.mxu0 0
  %1124 = vmatpush1.bf16.msra.mxu0 0
  %1125 = vmatprep.subr.bf16.mxu0 0
  %1126 = vmatpush1.bf16.msra.mxu0 0
  %1127 = vmatprep.mubr.bf16.mxu0 0
  %1128 = vmatmul.mubr.bf16.gmra.mrb[0].mxu0 %v1093
  %v1129 = vpop.f32.mrb[0].mxu0
  %v1130 = vadd.f32 %v353, %v1129
  %v1131 = vpop.f32.mrb[0].mxu0
  %v1132 = vpop.f32.mrb[0].mxu0
  %v1133 = vpop.f32.mrb[0].mxu0
  %1134 = vdwg.mxu0
  %s1135 = scalar_lea.vmem %s0, 16
  %v1136 = vld [vmem:[%s1135] sm:$0xff]
  %v1137 = vmul.f32 %v1130, %v1130
  %1139 = vrot.lane.b32.xlu0 %v1137, 112
  %v1140 = vpop.permute.xlu0 %1139
  %v1142 = vsel %vm418, %v1140, 0.0
  %1143 = vadd.xlane.f32.xlu0 %v1142
  %v1144 = vpop.xlane.xlu0 %1143
  %v1145 = vmul.f32 %v1144, 0.05
  %v1146 = vadd.f32 %v789, %v1145
  %v1147 = vmul.f32 %v1130, %v1136
  %v1148 = vsel %vm69, %v1147, 0.0
  %1149 = vadd.xlane.f32.xlu0 %v1148
  %v1150 = vpop.xlane.xlu0 %1149
  %v1151 = vadd.f32 %v1146, %v1150
  %1153 = vrot.lane.b32.xlu0 %v1130, 108
  %v1154 = vpop.permute.xlu0 %1153
  %v1157 = vsel %vm69, %v867, 0
  %1159 = vmatprep.subr.mxu0 0.0
  %1160 = vmatpush1.msra.mxu0 %v35
  %1161 = vmatprep.subr.mxu0 0.0
  %1162 = vmatpush1.msra.mxu0 0.0
  %1163 = vmatprep.subr.mxu0 0.0
  %1164 = vmatpush1.msra.mxu0 0.0
  %1165 = vmatprep.subr.mxu0 0.0
  %1166 = vmatpush1.msra.mxu0 0.0
  %1167 = vmatprep.subr.mxu0 0.0
  %1168 = vmatpush1.msra.mxu0 0.0
  %1169 = vmatprep.subr.mxu0 0.0
  %1170 = vmatpush1.msra.mxu0 0.0
  %1171 = vmatprep.subr.mxu0 0.0
  %1172 = vmatpush1.msra.mxu0 0.0
  %1173 = vmatprep.subr.mxu0 0.0
  %1174 = vmatpush1.msra.mxu0 0.0
  %1175 = vmatprep.subr.mxu0 0.0
  %1176 = vmatpush1.msra.mxu0 0.0
  %1177 = vmatprep.subr.mxu0 0.0
  %1178 = vmatpush1.msra.mxu0 0.0
  %1179 = vmatprep.subr.mxu0 0.0
  %1180 = vmatpush1.msra.mxu0 0.0
  %1181 = vmatprep.subr.mxu0 0.0
  %1182 = vmatpush1.msra.mxu0 0.0
  %1183 = vmatprep.subr.mxu0 0.0
  %1184 = vmatpush1.msra.mxu0 0.0
  %1185 = vmatprep.subr.mxu0 0.0
  %1186 = vmatpush1.msra.mxu0 0.0
  %1187 = vmatprep.subr.mxu0 0.0
  %1188 = vmatpush1.msra.mxu0 0.0
  %1189 = vmatprep.subr.mxu0 0.0
  %1190 = vmatpush1.msra.mxu0 0.0
  %1191 = vmatprep.subr.mxu0 0.0
  %1192 = vmatpush1.msra.mxu0 0.0
  %1193 = vmatprep.subr.mxu0 0.0
  %1194 = vmatpush1.msra.mxu0 0.0
  %1195 = vmatprep.subr.mxu0 0.0
  %1196 = vmatpush1.msra.mxu0 0.0
  %1197 = vmatprep.subr.mxu0 0.0
  %1198 = vmatpush1.msra.mxu0 0.0
  %1199 = vmatprep.subr.mxu0 0.0
  %1200 = vmatpush1.msra.mxu0 0.0
  %1201 = vmatprep.subr.mxu0 0.0
  %1202 = vmatpush1.msra.mxu0 0.0
  %1203 = vmatprep.subr.mxu0 0.0
  %1204 = vmatpush1.msra.mxu0 0.0
  %1205 = vmatprep.subr.mxu0 0.0
  %1206 = vmatpush1.msra.mxu0 0.0
  %1207 = vmatprep.subr.mxu0 0.0
  %1208 = vmatpush1.msra.mxu0 0.0
  %1209 = vmatprep.subr.mxu0 0.0
  %1210 = vmatpush1.msra.mxu0 0.0
  %1211 = vmatprep.subr.mxu0 0.0
  %1212 = vmatpush1.msra.mxu0 0.0
  %1213 = vmatprep.subr.mxu0 0.0
  %1214 = vmatpush1.msra.mxu0 0.0
  %1215 = vmatprep.subr.mxu0 0.0
  %1216 = vmatpush1.msra.mxu0 0.0
  %1217 = vmatprep.subr.mxu0 0.0
  %1218 = vmatpush1.msra.mxu0 0.0
  %1219 = vmatprep.subr.mxu0 0.0
  %1220 = vmatpush1.msra.mxu0 0.0
  %1221 = vmatprep.subr.mxu0 0.0
  %1222 = vmatpush1.msra.mxu0 0.0
  %1223 = vmatprep.mubr.f32.mxu0 0.0
  %1224 = vmatmul.mubr.f32.gmra.mrb[0].mxu0 %v1157
  %v1225 = vpop.f32.mrb[0].mxu0
  %v1226 = vadd.f32 %v1154, %v1225
  %v1227 = vpop.f32.mrb[0].mxu0
  %1228 = vdwg.mxu0
  %v1229 = vadd.f32 %v1226, %v1136
  %s1230 = scalar_lea.vmem %s4, 24
  %1231 = vst.msk [vmem:[%s1230] sm:$0xff] %vm69, %v1229
  %1232 = vrot.lane.b32.xlu0 %v1130, 112
  %v1233 = vpop.permute.xlu0 %1232
  %s1235 = scalar_lea.vmem %s5, 16
  %1236 = vst.msk [vmem:[%s1235] sm:$0xff] %vm418, %v1233
  %v1237 = vpack.c.bf16 %v1229, %v1229
  %1238 = vmatprep.subr.bf16.mxu0 0
  %1239 = vmatpush1.bf16.msra.mxu0 %v81
  %1240 = vmatprep.subr.bf16.mxu0 0
  %1241 = vmatpush1.bf16.msra.mxu0 %v82
  %1242 = vmatprep.subr.bf16.mxu0 0
  %1243 = vmatpush1.bf16.msra.mxu0 0
  %1244 = vmatprep.subr.bf16.mxu0 0
  %1245 = vmatpush1.bf16.msra.mxu0 0
  %1246 = vmatprep.subr.bf16.mxu0 0
  %1247 = vmatpush1.bf16.msra.mxu0 0
  %1248 = vmatprep.subr.bf16.mxu0 0
  %1249 = vmatpush1.bf16.msra.mxu0 0
  %1250 = vmatprep.subr.bf16.mxu0 0
  %1251 = vmatpush1.bf16.msra.mxu0 0
  %1252 = vmatprep.subr.bf16.mxu0 0
  %1253 = vmatpush1.bf16.msra.mxu0 0
  %1254 = vmatprep.subr.bf16.mxu0 0
  %1255 = vmatpush1.bf16.msra.mxu0 0
  %1256 = vmatprep.subr.bf16.mxu0 0
  %1257 = vmatpush1.bf16.msra.mxu0 0
  %1258 = vmatprep.subr.bf16.mxu0 0
  %1259 = vmatpush1.bf16.msra.mxu0 0
  %1260 = vmatprep.subr.bf16.mxu0 0
  %1261 = vmatpush1.bf16.msra.mxu0 0
  %1262 = vmatprep.subr.bf16.mxu0 0
  %1263 = vmatpush1.bf16.msra.mxu0 0
  %1264 = vmatprep.subr.bf16.mxu0 0
  %1265 = vmatpush1.bf16.msra.mxu0 0
  %1266 = vmatprep.subr.bf16.mxu0 0
  %1267 = vmatpush1.bf16.msra.mxu0 0
  %1268 = vmatprep.subr.bf16.mxu0 0
  %1269 = vmatpush1.bf16.msra.mxu0 0
  %1270 = vmatprep.mubr.bf16.mxu0 0
  %1271 = vmatmul.mubr.bf16.gmra.mrb[0].mxu0 %v1025
  %v1272 = vpop.f32.mrb[0].mxu0
  %v1273 = vadd.f32 0.0, %v1272
  %v1274 = vpop.f32.mrb[0].mxu0
  %v1275 = vpop.f32.mrb[0].mxu0
  %v1276 = vpop.f32.mrb[0].mxu0
  %1277 = vdwg.mxu0
  %v1279 = vsel %vm69, %v1237, 0
  %1281 = vmatprep.subr.bf16.mxu0 0
  %1282 = vmatpush1.bf16.msra.mxu0 %v134
  %1283 = vmatprep.subr.bf16.mxu0 0
  %1284 = vmatpush1.bf16.msra.mxu0 0
  %1285 = vmatprep.subr.bf16.mxu0 0
  %1286 = vmatpush1.bf16.msra.mxu0 0
  %1287 = vmatprep.subr.bf16.mxu0 0
  %1288 = vmatpush1.bf16.msra.mxu0 0
  %1289 = vmatprep.subr.bf16.mxu0 0
  %1290 = vmatpush1.bf16.msra.mxu0 0
  %1291 = vmatprep.subr.bf16.mxu0 0
  %1292 = vmatpush1.bf16.msra.mxu0 0
  %1293 = vmatprep.subr.bf16.mxu0 0
  %1294 = vmatpush1.bf16.msra.mxu0 0
  %1295 = vmatprep.subr.bf16.mxu0 0
  %1296 = vmatpush1.bf16.msra.mxu0 0
  %1297 = vmatprep.subr.bf16.mxu0 0
  %1298 = vmatpush1.bf16.msra.mxu0 0
  %1299 = vmatprep.subr.bf16.mxu0 0
  %1300 = vmatpush1.bf16.msra.mxu0 0
  %1301 = vmatprep.subr.bf16.mxu0 0
  %1302 = vmatpush1.bf16.msra.mxu0 0
  %1303 = vmatprep.subr.bf16.mxu0 0
  %1304 = vmatpush1.bf16.msra.mxu0 0
  %1305 = vmatprep.subr.bf16.mxu0 0
  %1306 = vmatpush1.bf16.msra.mxu0 0
  %1307 = vmatprep.subr.bf16.mxu0 0
  %1308 = vmatpush1.bf16.msra.mxu0 0
  %1309 = vmatprep.subr.bf16.mxu0 0
  %1310 = vmatpush1.bf16.msra.mxu0 0
  %1311 = vmatprep.subr.bf16.mxu0 0
  %1312 = vmatpush1.bf16.msra.mxu0 0
  %1313 = vmatprep.mubr.bf16.mxu0 0
  %1314 = vmatmul.mubr.bf16.gmra.mrb[0].mxu0 %v1279
  %v1315 = vpop.f32.mrb[0].mxu0
  %v1316 = vadd.f32 %v1273, %v1315
  %v1317 = vpop.f32.mrb[0].mxu0
  %v1318 = vpop.f32.mrb[0].mxu0
  %v1319 = vpop.f32.mrb[0].mxu0
  %1320 = vdwg.mxu0
  %v1321 = vadd.f32 %v1316, %v179
  %v1322 = vtanh.pop %v1321
  %v1323 = vmul.f32 %v1322, 0.5
  %v1324 = vadd.f32 %v1323, 0.5
  %v1325 = vmul.f32 %v1324, %v973
  %1327 = vrot.lane.b32.xlu0 %v1322, 64
  %v1328 = vpop.permute.xlu0 %1327
  %v1330 = vmul.f32 %v1324, %v1328
  %1332 = vrot.lane.b32.xlu0 %v1330, 32
  %v1333 = vpop.permute.xlu0 %1332
  %v1335 = vadd.f32 %v1325, %v1333
  %v1336 = vtanh.pop %v1335
  %1338 = vrot.lane.b32.xlu0 %v1336, 64
  %v1339 = vpop.permute.xlu0 %1338
  %v1341 = vmul.f32 %v1324, %v1339
  %v1342 = vpack.c.bf16 %v1341, %v1341
  %1343 = vmatprep.subr.bf16.mxu0 0
  %1344 = vmatpush1.bf16.msra.mxu0 %v215
  %1345 = vmatprep.subr.bf16.mxu0 0
  %1346 = vmatpush1.bf16.msra.mxu0 %v216
  %1347 = vmatprep.subr.bf16.mxu0 0
  %1348 = vmatpush1.bf16.msra.mxu0 0
  %1349 = vmatprep.subr.bf16.mxu0 0
  %1350 = vmatpush1.bf16.msra.mxu0 0
  %1351 = vmatprep.subr.bf16.mxu0 0
  %1352 = vmatpush1.bf16.msra.mxu0 0
  %1353 = vmatprep.subr.bf16.mxu0 0
  %1354 = vmatpush1.bf16.msra.mxu0 0
  %1355 = vmatprep.subr.bf16.mxu0 0
  %1356 = vmatpush1.bf16.msra.mxu0 0
  %1357 = vmatprep.subr.bf16.mxu0 0
  %1358 = vmatpush1.bf16.msra.mxu0 0
  %1359 = vmatprep.subr.bf16.mxu0 0
  %1360 = vmatpush1.bf16.msra.mxu0 0
  %1361 = vmatprep.subr.bf16.mxu0 0
  %1362 = vmatpush1.bf16.msra.mxu0 0
  %1363 = vmatprep.subr.bf16.mxu0 0
  %1364 = vmatpush1.bf16.msra.mxu0 0
  %1365 = vmatprep.subr.bf16.mxu0 0
  %1366 = vmatpush1.bf16.msra.mxu0 0
  %1367 = vmatprep.subr.bf16.mxu0 0
  %1368 = vmatpush1.bf16.msra.mxu0 0
  %1369 = vmatprep.subr.bf16.mxu0 0
  %1370 = vmatpush1.bf16.msra.mxu0 0
  %1371 = vmatprep.subr.bf16.mxu0 0
  %1372 = vmatpush1.bf16.msra.mxu0 0
  %1373 = vmatprep.subr.bf16.mxu0 0
  %1374 = vmatpush1.bf16.msra.mxu0 0
  %1375 = vmatprep.mubr.bf16.mxu0 0
  %1376 = vmatmul.mubr.bf16.gmra.mrb[0].mxu0 %v1093
  %v1377 = vpop.f32.mrb[0].mxu0
  %v1378 = vadd.f32 0.0, %v1377
  %v1379 = vpop.f32.mrb[0].mxu0
  %v1380 = vpop.f32.mrb[0].mxu0
  %v1381 = vpop.f32.mrb[0].mxu0
  %1382 = vdwg.mxu0
  %1384 = vrot.lane.b32.xlu0 %v1342, 32
  %v1385 = vpop.permute.xlu0 %1384
  %v1387 = vsel %vm85, %v1385, 0
  %1389 = vmatprep.subr.bf16.mxu0 0
  %1390 = vmatpush1.bf16.msra.mxu0 %v273
  %1391 = vmatprep.subr.bf16.mxu0 0
  %1392 = vmatpush1.bf16.msra.mxu0 %v274
  %1393 = vmatprep.subr.bf16.mxu0 0
  %1394 = vmatpush1.bf16.msra.mxu0 0
  %1395 = vmatprep.subr.bf16.mxu0 0
  %1396 = vmatpush1.bf16.msra.mxu0 0
  %1397 = vmatprep.subr.bf16.mxu0 0
  %1398 = vmatpush1.bf16.msra.mxu0 0
  %1399 = vmatprep.subr.bf16.mxu0 0
  %1400 = vmatpush1.bf16.msra.mxu0 0
  %1401 = vmatprep.subr.bf16.mxu0 0
  %1402 = vmatpush1.bf16.msra.mxu0 0
  %1403 = vmatprep.subr.bf16.mxu0 0
  %1404 = vmatpush1.bf16.msra.mxu0 0
  %1405 = vmatprep.subr.bf16.mxu0 0
  %1406 = vmatpush1.bf16.msra.mxu0 0
  %1407 = vmatprep.subr.bf16.mxu0 0
  %1408 = vmatpush1.bf16.msra.mxu0 0
  %1409 = vmatprep.subr.bf16.mxu0 0
  %1410 = vmatpush1.bf16.msra.mxu0 0
  %1411 = vmatprep.subr.bf16.mxu0 0
  %1412 = vmatpush1.bf16.msra.mxu0 0
  %1413 = vmatprep.subr.bf16.mxu0 0
  %1414 = vmatpush1.bf16.msra.mxu0 0
  %1415 = vmatprep.subr.bf16.mxu0 0
  %1416 = vmatpush1.bf16.msra.mxu0 0
  %1417 = vmatprep.subr.bf16.mxu0 0
  %1418 = vmatpush1.bf16.msra.mxu0 0
  %1419 = vmatprep.subr.bf16.mxu0 0
  %1420 = vmatpush1.bf16.msra.mxu0 0
  %1421 = vmatprep.mubr.bf16.mxu0 0
  %1422 = vmatmul.mubr.bf16.gmra.mrb[0].mxu0 %v1387
  %v1423 = vpop.f32.mrb[0].mxu0
  %v1424 = vadd.f32 %v1378, %v1423
  %v1425 = vpop.f32.mrb[0].mxu0
  %v1426 = vpop.f32.mrb[0].mxu0
  %v1427 = vpop.f32.mrb[0].mxu0
  %1428 = vdwg.mxu0
  %v1429 = vadd.f32 %v1424, %v323
  %v1430 = vtanh.pop %v1429
  %v1431 = vmul.f32 %v1430, 0.5
  %v1432 = vadd.f32 %v1431, 0.5
  %v1433 = vmul.f32 %v1432, %v1081
  %1435 = vrot.lane.b32.xlu0 %v1430, 64
  %v1436 = vpop.permute.xlu0 %1435
  %v1438 = vmul.f32 %v1432, %v1436
  %1440 = vrot.lane.b32.xlu0 %v1438, 32
  %v1441 = vpop.permute.xlu0 %1440
  %v1443 = vadd.f32 %v1433, %v1441
  %v1444 = vtanh.pop %v1443
  %1446 = vrot.lane.b32.xlu0 %v1444, 64
  %v1447 = vpop.permute.xlu0 %1446
  %v1449 = vmul.f32 %v1432, %v1447
  %v1450 = vpack.c.bf16 %v1449, %v1449
  %1452 = vrot.lane.b32.xlu0 %v1450, 32
  %v1453 = vpop.permute.xlu0 %1452
  %v1455 = vsel %vm85, %v1453, 0
  %1457 = vmatprep.subr.bf16.mxu0 0
  %1458 = vmatpush1.bf16.msra.mxu0 %v365
  %1459 = vmatprep.subr.bf16.mxu0 0
  %1460 = vmatpush1.bf16.msra.mxu0 %v366
  %1461 = vmatprep.subr.bf16.mxu0 0
  %1462 = vmatpush1.bf16.msra.mxu0 0
  %1463 = vmatprep.subr.bf16.mxu0 0
  %1464 = vmatpush1.bf16.msra.mxu0 0
  %1465 = vmatprep.subr.bf16.mxu0 0
  %1466 = vmatpush1.bf16.msra.mxu0 0
  %1467 = vmatprep.subr.bf16.mxu0 0
  %1468 = vmatpush1.bf16.msra.mxu0 0
  %1469 = vmatprep.subr.bf16.mxu0 0
  %1470 = vmatpush1.bf16.msra.mxu0 0
  %1471 = vmatprep.subr.bf16.mxu0 0
  %1472 = vmatpush1.bf16.msra.mxu0 0
  %1473 = vmatprep.subr.bf16.mxu0 0
  %1474 = vmatpush1.bf16.msra.mxu0 0
  %1475 = vmatprep.subr.bf16.mxu0 0
  %1476 = vmatpush1.bf16.msra.mxu0 0
  %1477 = vmatprep.subr.bf16.mxu0 0
  %1478 = vmatpush1.bf16.msra.mxu0 0
  %1479 = vmatprep.subr.bf16.mxu0 0
  %1480 = vmatpush1.bf16.msra.mxu0 0
  %1481 = vmatprep.subr.bf16.mxu0 0
  %1482 = vmatpush1.bf16.msra.mxu0 0
  %1483 = vmatprep.subr.bf16.mxu0 0
  %1484 = vmatpush1.bf16.msra.mxu0 0
  %1485 = vmatprep.subr.bf16.mxu0 0
  %1486 = vmatpush1.bf16.msra.mxu0 0
  %1487 = vmatprep.subr.bf16.mxu0 0
  %1488 = vmatpush1.bf16.msra.mxu0 0
  %1489 = vmatprep.mubr.bf16.mxu0 0
  %1490 = vmatmul.mubr.bf16.gmra.mrb[0].mxu0 %v1455
  %v1491 = vpop.f32.mrb[0].mxu0
  %v1492 = vadd.f32 %v353, %v1491
  %v1493 = vpop.f32.mrb[0].mxu0
  %v1494 = vpop.f32.mrb[0].mxu0
  %v1495 = vpop.f32.mrb[0].mxu0
  %1496 = vdwg.mxu0
  %s1497 = scalar_lea.vmem %s0, 24
  %v1498 = vld [vmem:[%s1497] sm:$0xff]
  %v1499 = vmul.f32 %v1492, %v1492
  %1501 = vrot.lane.b32.xlu0 %v1499, 112
  %v1502 = vpop.permute.xlu0 %1501
  %v1504 = vsel %vm418, %v1502, 0.0
  %1505 = vadd.xlane.f32.xlu0 %v1504
  %v1506 = vpop.xlane.xlu0 %1505
  %v1507 = vmul.f32 %v1506, 0.05
  %v1508 = vadd.f32 %v1151, %v1507
  %v1509 = vmul.f32 %v1492, %v1498
  %v1510 = vsel %vm69, %v1509, 0.0
  %1511 = vadd.xlane.f32.xlu0 %v1510
  %v1512 = vpop.xlane.xlu0 %1511
  %v1513 = vadd.f32 %v1508, %v1512
  %1515 = vrot.lane.b32.xlu0 %v1492, 108
  %v1516 = vpop.permute.xlu0 %1515
  %v1519 = vsel %vm69, %v1229, 0
  %1521 = vmatprep.subr.mxu0 0.0
  %1522 = vmatpush1.msra.mxu0 %v35
  %1523 = vmatprep.subr.mxu0 0.0
  %1524 = vmatpush1.msra.mxu0 0.0
  %1525 = vmatprep.subr.mxu0 0.0
  %1526 = vmatpush1.msra.mxu0 0.0
  %1527 = vmatprep.subr.mxu0 0.0
  %1528 = vmatpush1.msra.mxu0 0.0
  %1529 = vmatprep.subr.mxu0 0.0
  %1530 = vmatpush1.msra.mxu0 0.0
  %1531 = vmatprep.subr.mxu0 0.0
  %1532 = vmatpush1.msra.mxu0 0.0
  %1533 = vmatprep.subr.mxu0 0.0
  %1534 = vmatpush1.msra.mxu0 0.0
  %1535 = vmatprep.subr.mxu0 0.0
  %1536 = vmatpush1.msra.mxu0 0.0
  %1537 = vmatprep.subr.mxu0 0.0
  %1538 = vmatpush1.msra.mxu0 0.0
  %1539 = vmatprep.subr.mxu0 0.0
  %1540 = vmatpush1.msra.mxu0 0.0
  %1541 = vmatprep.subr.mxu0 0.0
  %1542 = vmatpush1.msra.mxu0 0.0
  %1543 = vmatprep.subr.mxu0 0.0
  %1544 = vmatpush1.msra.mxu0 0.0
  %1545 = vmatprep.subr.mxu0 0.0
  %1546 = vmatpush1.msra.mxu0 0.0
  %1547 = vmatprep.subr.mxu0 0.0
  %1548 = vmatpush1.msra.mxu0 0.0
  %1549 = vmatprep.subr.mxu0 0.0
  %1550 = vmatpush1.msra.mxu0 0.0
  %1551 = vmatprep.subr.mxu0 0.0
  %1552 = vmatpush1.msra.mxu0 0.0
  %1553 = vmatprep.subr.mxu0 0.0
  %1554 = vmatpush1.msra.mxu0 0.0
  %1555 = vmatprep.subr.mxu0 0.0
  %1556 = vmatpush1.msra.mxu0 0.0
  %1557 = vmatprep.subr.mxu0 0.0
  %1558 = vmatpush1.msra.mxu0 0.0
  %1559 = vmatprep.subr.mxu0 0.0
  %1560 = vmatpush1.msra.mxu0 0.0
  %1561 = vmatprep.subr.mxu0 0.0
  %1562 = vmatpush1.msra.mxu0 0.0
  %1563 = vmatprep.subr.mxu0 0.0
  %1564 = vmatpush1.msra.mxu0 0.0
  %1565 = vmatprep.subr.mxu0 0.0
  %1566 = vmatpush1.msra.mxu0 0.0
  %1567 = vmatprep.subr.mxu0 0.0
  %1568 = vmatpush1.msra.mxu0 0.0
  %1569 = vmatprep.subr.mxu0 0.0
  %1570 = vmatpush1.msra.mxu0 0.0
  %1571 = vmatprep.subr.mxu0 0.0
  %1572 = vmatpush1.msra.mxu0 0.0
  %1573 = vmatprep.subr.mxu0 0.0
  %1574 = vmatpush1.msra.mxu0 0.0
  %1575 = vmatprep.subr.mxu0 0.0
  %1576 = vmatpush1.msra.mxu0 0.0
  %1577 = vmatprep.subr.mxu0 0.0
  %1578 = vmatpush1.msra.mxu0 0.0
  %1579 = vmatprep.subr.mxu0 0.0
  %1580 = vmatpush1.msra.mxu0 0.0
  %1581 = vmatprep.subr.mxu0 0.0
  %1582 = vmatpush1.msra.mxu0 0.0
  %1583 = vmatprep.subr.mxu0 0.0
  %1584 = vmatpush1.msra.mxu0 0.0
  %1585 = vmatprep.mubr.f32.mxu0 0.0
  %1586 = vmatmul.mubr.f32.gmra.mrb[0].mxu0 %v1519
  %v1587 = vpop.f32.mrb[0].mxu0
  %v1588 = vadd.f32 %v1516, %v1587
  %v1589 = vpop.f32.mrb[0].mxu0
  %1590 = vdwg.mxu0
  %v1591 = vadd.f32 %v1588, %v1498
  %s1592 = scalar_lea.vmem %s4, 32
  %1593 = vst.msk [vmem:[%s1592] sm:$0xff] %vm69, %v1591
  %1594 = vrot.lane.b32.xlu0 %v1492, 112
  %v1595 = vpop.permute.xlu0 %1594
  %s1597 = scalar_lea.vmem %s5, 24
  %1598 = vst.msk [vmem:[%s1597] sm:$0xff] %vm418, %v1595
  %v1599 = vpack.c.bf16 %v1591, %v1591
  %1600 = vmatprep.subr.bf16.mxu0 0
  %1601 = vmatpush1.bf16.msra.mxu0 %v81
  %1602 = vmatprep.subr.bf16.mxu0 0
  %1603 = vmatpush1.bf16.msra.mxu0 %v82
  %1604 = vmatprep.subr.bf16.mxu0 0
  %1605 = vmatpush1.bf16.msra.mxu0 0
  %1606 = vmatprep.subr.bf16.mxu0 0
  %1607 = vmatpush1.bf16.msra.mxu0 0
  %1608 = vmatprep.subr.bf16.mxu0 0
  %1609 = vmatpush1.bf16.msra.mxu0 0
  %1610 = vmatprep.subr.bf16.mxu0 0
  %1611 = vmatpush1.bf16.msra.mxu0 0
  %1612 = vmatprep.subr.bf16.mxu0 0
  %1613 = vmatpush1.bf16.msra.mxu0 0
  %1614 = vmatprep.subr.bf16.mxu0 0
  %1615 = vmatpush1.bf16.msra.mxu0 0
  %1616 = vmatprep.subr.bf16.mxu0 0
  %1617 = vmatpush1.bf16.msra.mxu0 0
  %1618 = vmatprep.subr.bf16.mxu0 0
  %1619 = vmatpush1.bf16.msra.mxu0 0
  %1620 = vmatprep.subr.bf16.mxu0 0
  %1621 = vmatpush1.bf16.msra.mxu0 0
  %1622 = vmatprep.subr.bf16.mxu0 0
  %1623 = vmatpush1.bf16.msra.mxu0 0
  %1624 = vmatprep.subr.bf16.mxu0 0
  %1625 = vmatpush1.bf16.msra.mxu0 0
  %1626 = vmatprep.subr.bf16.mxu0 0
  %1627 = vmatpush1.bf16.msra.mxu0 0
  %1628 = vmatprep.subr.bf16.mxu0 0
  %1629 = vmatpush1.bf16.msra.mxu0 0
  %1630 = vmatprep.subr.bf16.mxu0 0
  %1631 = vmatpush1.bf16.msra.mxu0 0
  %1632 = vmatprep.mubr.bf16.mxu0 0
  %1633 = vmatmul.mubr.bf16.gmra.mrb[0].mxu0 %v1387
  %v1634 = vpop.f32.mrb[0].mxu0
  %v1635 = vadd.f32 0.0, %v1634
  %v1636 = vpop.f32.mrb[0].mxu0
  %v1637 = vpop.f32.mrb[0].mxu0
  %v1638 = vpop.f32.mrb[0].mxu0
  %1639 = vdwg.mxu0
  %v1641 = vsel %vm69, %v1599, 0
  %1643 = vmatprep.subr.bf16.mxu0 0
  %1644 = vmatpush1.bf16.msra.mxu0 %v134
  %1645 = vmatprep.subr.bf16.mxu0 0
  %1646 = vmatpush1.bf16.msra.mxu0 0
  %1647 = vmatprep.subr.bf16.mxu0 0
  %1648 = vmatpush1.bf16.msra.mxu0 0
  %1649 = vmatprep.subr.bf16.mxu0 0
  %1650 = vmatpush1.bf16.msra.mxu0 0
  %1651 = vmatprep.subr.bf16.mxu0 0
  %1652 = vmatpush1.bf16.msra.mxu0 0
  %1653 = vmatprep.subr.bf16.mxu0 0
  %1654 = vmatpush1.bf16.msra.mxu0 0
  %1655 = vmatprep.subr.bf16.mxu0 0
  %1656 = vmatpush1.bf16.msra.mxu0 0
  %1657 = vmatprep.subr.bf16.mxu0 0
  %1658 = vmatpush1.bf16.msra.mxu0 0
  %1659 = vmatprep.subr.bf16.mxu0 0
  %1660 = vmatpush1.bf16.msra.mxu0 0
  %1661 = vmatprep.subr.bf16.mxu0 0
  %1662 = vmatpush1.bf16.msra.mxu0 0
  %1663 = vmatprep.subr.bf16.mxu0 0
  %1664 = vmatpush1.bf16.msra.mxu0 0
  %1665 = vmatprep.subr.bf16.mxu0 0
  %1666 = vmatpush1.bf16.msra.mxu0 0
  %1667 = vmatprep.subr.bf16.mxu0 0
  %1668 = vmatpush1.bf16.msra.mxu0 0
  %1669 = vmatprep.subr.bf16.mxu0 0
  %1670 = vmatpush1.bf16.msra.mxu0 0
  %1671 = vmatprep.subr.bf16.mxu0 0
  %1672 = vmatpush1.bf16.msra.mxu0 0
  %1673 = vmatprep.subr.bf16.mxu0 0
  %1674 = vmatpush1.bf16.msra.mxu0 0
  %1675 = vmatprep.mubr.bf16.mxu0 0
  %1676 = vmatmul.mubr.bf16.gmra.mrb[0].mxu0 %v1641
  %v1677 = vpop.f32.mrb[0].mxu0
  %v1678 = vadd.f32 %v1635, %v1677
  %v1679 = vpop.f32.mrb[0].mxu0
  %v1680 = vpop.f32.mrb[0].mxu0
  %v1681 = vpop.f32.mrb[0].mxu0
  %1682 = vdwg.mxu0
  %v1683 = vadd.f32 %v1678, %v179
  %v1684 = vtanh.pop %v1683
  %v1685 = vmul.f32 %v1684, 0.5
  %v1686 = vadd.f32 %v1685, 0.5
  %v1687 = vmul.f32 %v1686, %v1335
  %1689 = vrot.lane.b32.xlu0 %v1684, 64
  %v1690 = vpop.permute.xlu0 %1689
  %v1692 = vmul.f32 %v1686, %v1690
  %1694 = vrot.lane.b32.xlu0 %v1692, 32
  %v1695 = vpop.permute.xlu0 %1694
  %v1697 = vadd.f32 %v1687, %v1695
  %v1698 = vtanh.pop %v1697
  %1700 = vrot.lane.b32.xlu0 %v1698, 64
  %v1701 = vpop.permute.xlu0 %1700
  %v1703 = vmul.f32 %v1686, %v1701
  %v1704 = vpack.c.bf16 %v1703, %v1703
  %1705 = vmatprep.subr.bf16.mxu0 0
  %1706 = vmatpush1.bf16.msra.mxu0 %v215
  %1707 = vmatprep.subr.bf16.mxu0 0
  %1708 = vmatpush1.bf16.msra.mxu0 %v216
  %1709 = vmatprep.subr.bf16.mxu0 0
  %1710 = vmatpush1.bf16.msra.mxu0 0
  %1711 = vmatprep.subr.bf16.mxu0 0
  %1712 = vmatpush1.bf16.msra.mxu0 0
  %1713 = vmatprep.subr.bf16.mxu0 0
  %1714 = vmatpush1.bf16.msra.mxu0 0
  %1715 = vmatprep.subr.bf16.mxu0 0
  %1716 = vmatpush1.bf16.msra.mxu0 0
  %1717 = vmatprep.subr.bf16.mxu0 0
  %1718 = vmatpush1.bf16.msra.mxu0 0
  %1719 = vmatprep.subr.bf16.mxu0 0
  %1720 = vmatpush1.bf16.msra.mxu0 0
  %1721 = vmatprep.subr.bf16.mxu0 0
  %1722 = vmatpush1.bf16.msra.mxu0 0
  %1723 = vmatprep.subr.bf16.mxu0 0
  %1724 = vmatpush1.bf16.msra.mxu0 0
  %1725 = vmatprep.subr.bf16.mxu0 0
  %1726 = vmatpush1.bf16.msra.mxu0 0
  %1727 = vmatprep.subr.bf16.mxu0 0
  %1728 = vmatpush1.bf16.msra.mxu0 0
  %1729 = vmatprep.subr.bf16.mxu0 0
  %1730 = vmatpush1.bf16.msra.mxu0 0
  %1731 = vmatprep.subr.bf16.mxu0 0
  %1732 = vmatpush1.bf16.msra.mxu0 0
  %1733 = vmatprep.subr.bf16.mxu0 0
  %1734 = vmatpush1.bf16.msra.mxu0 0
  %1735 = vmatprep.subr.bf16.mxu0 0
  %1736 = vmatpush1.bf16.msra.mxu0 0
  %1737 = vmatprep.mubr.bf16.mxu0 0
  %1738 = vmatmul.mubr.bf16.gmra.mrb[0].mxu0 %v1455
  %v1739 = vpop.f32.mrb[0].mxu0
  %v1740 = vadd.f32 0.0, %v1739
  %v1741 = vpop.f32.mrb[0].mxu0
  %v1742 = vpop.f32.mrb[0].mxu0
  %v1743 = vpop.f32.mrb[0].mxu0
  %1744 = vdwg.mxu0
  %1746 = vrot.lane.b32.xlu0 %v1704, 32
  %v1747 = vpop.permute.xlu0 %1746
  %v1749 = vsel %vm85, %v1747, 0
  %1751 = vmatprep.subr.bf16.mxu0 0
  %1752 = vmatpush1.bf16.msra.mxu0 %v273
  %1753 = vmatprep.subr.bf16.mxu0 0
  %1754 = vmatpush1.bf16.msra.mxu0 %v274
  %1755 = vmatprep.subr.bf16.mxu0 0
  %1756 = vmatpush1.bf16.msra.mxu0 0
  %1757 = vmatprep.subr.bf16.mxu0 0
  %1758 = vmatpush1.bf16.msra.mxu0 0
  %1759 = vmatprep.subr.bf16.mxu0 0
  %1760 = vmatpush1.bf16.msra.mxu0 0
  %1761 = vmatprep.subr.bf16.mxu0 0
  %1762 = vmatpush1.bf16.msra.mxu0 0
  %1763 = vmatprep.subr.bf16.mxu0 0
  %1764 = vmatpush1.bf16.msra.mxu0 0
  %1765 = vmatprep.subr.bf16.mxu0 0
  %1766 = vmatpush1.bf16.msra.mxu0 0
  %1767 = vmatprep.subr.bf16.mxu0 0
  %1768 = vmatpush1.bf16.msra.mxu0 0
  %1769 = vmatprep.subr.bf16.mxu0 0
  %1770 = vmatpush1.bf16.msra.mxu0 0
  %1771 = vmatprep.subr.bf16.mxu0 0
  %1772 = vmatpush1.bf16.msra.mxu0 0
  %1773 = vmatprep.subr.bf16.mxu0 0
  %1774 = vmatpush1.bf16.msra.mxu0 0
  %1775 = vmatprep.subr.bf16.mxu0 0
  %1776 = vmatpush1.bf16.msra.mxu0 0
  %1777 = vmatprep.subr.bf16.mxu0 0
  %1778 = vmatpush1.bf16.msra.mxu0 0
  %1779 = vmatprep.subr.bf16.mxu0 0
  %1780 = vmatpush1.bf16.msra.mxu0 0
  %1781 = vmatprep.subr.bf16.mxu0 0
  %1782 = vmatpush1.bf16.msra.mxu0 0
  %1783 = vmatprep.mubr.bf16.mxu0 0
  %1784 = vmatmul.mubr.bf16.gmra.mrb[0].mxu0 %v1749
  %v1785 = vpop.f32.mrb[0].mxu0
  %v1786 = vadd.f32 %v1740, %v1785
  %v1787 = vpop.f32.mrb[0].mxu0
  %v1788 = vpop.f32.mrb[0].mxu0
  %v1789 = vpop.f32.mrb[0].mxu0
  %1790 = vdwg.mxu0
  %v1791 = vadd.f32 %v1786, %v323
  %v1792 = vtanh.pop %v1791
  %v1793 = vmul.f32 %v1792, 0.5
  %v1794 = vadd.f32 %v1793, 0.5
  %v1795 = vmul.f32 %v1794, %v1443
  %1797 = vrot.lane.b32.xlu0 %v1792, 64
  %v1798 = vpop.permute.xlu0 %1797
  %v1800 = vmul.f32 %v1794, %v1798
  %1802 = vrot.lane.b32.xlu0 %v1800, 32
  %v1803 = vpop.permute.xlu0 %1802
  %v1805 = vadd.f32 %v1795, %v1803
  %v1806 = vtanh.pop %v1805
  %1808 = vrot.lane.b32.xlu0 %v1806, 64
  %v1809 = vpop.permute.xlu0 %1808
  %v1811 = vmul.f32 %v1794, %v1809
  %v1812 = vpack.c.bf16 %v1811, %v1811
  %1814 = vrot.lane.b32.xlu0 %v1812, 32
  %v1815 = vpop.permute.xlu0 %1814
  %v1817 = vsel %vm85, %v1815, 0
  %1819 = vmatprep.subr.bf16.mxu0 0
  %1820 = vmatpush1.bf16.msra.mxu0 %v365
  %1821 = vmatprep.subr.bf16.mxu0 0
  %1822 = vmatpush1.bf16.msra.mxu0 %v366
  %1823 = vmatprep.subr.bf16.mxu0 0
  %1824 = vmatpush1.bf16.msra.mxu0 0
  %1825 = vmatprep.subr.bf16.mxu0 0
  %1826 = vmatpush1.bf16.msra.mxu0 0
  %1827 = vmatprep.subr.bf16.mxu0 0
  %1828 = vmatpush1.bf16.msra.mxu0 0
  %1829 = vmatprep.subr.bf16.mxu0 0
  %1830 = vmatpush1.bf16.msra.mxu0 0
  %1831 = vmatprep.subr.bf16.mxu0 0
  %1832 = vmatpush1.bf16.msra.mxu0 0
  %1833 = vmatprep.subr.bf16.mxu0 0
  %1834 = vmatpush1.bf16.msra.mxu0 0
  %1835 = vmatprep.subr.bf16.mxu0 0
  %1836 = vmatpush1.bf16.msra.mxu0 0
  %1837 = vmatprep.subr.bf16.mxu0 0
  %1838 = vmatpush1.bf16.msra.mxu0 0
  %1839 = vmatprep.subr.bf16.mxu0 0
  %1840 = vmatpush1.bf16.msra.mxu0 0
  %1841 = vmatprep.subr.bf16.mxu0 0
  %1842 = vmatpush1.bf16.msra.mxu0 0
  %1843 = vmatprep.subr.bf16.mxu0 0
  %1844 = vmatpush1.bf16.msra.mxu0 0
  %1845 = vmatprep.subr.bf16.mxu0 0
  %1846 = vmatpush1.bf16.msra.mxu0 0
  %1847 = vmatprep.subr.bf16.mxu0 0
  %1848 = vmatpush1.bf16.msra.mxu0 0
  %1849 = vmatprep.subr.bf16.mxu0 0
  %1850 = vmatpush1.bf16.msra.mxu0 0
  %1851 = vmatprep.mubr.bf16.mxu0 0
  %1852 = vmatmul.mubr.bf16.gmra.mrb[0].mxu0 %v1817
  %v1853 = vpop.f32.mrb[0].mxu0
  %v1854 = vadd.f32 %v353, %v1853
  %v1855 = vpop.f32.mrb[0].mxu0
  %v1856 = vpop.f32.mrb[0].mxu0
  %v1857 = vpop.f32.mrb[0].mxu0
  %1858 = vdwg.mxu0
  %s1859 = scalar_lea.vmem %s0, 32
  %v1860 = vld [vmem:[%s1859] sm:$0xff]
  %v1861 = vmul.f32 %v1854, %v1854
  %1863 = vrot.lane.b32.xlu0 %v1861, 112
  %v1864 = vpop.permute.xlu0 %1863
  %v1866 = vsel %vm418, %v1864, 0.0
  %1867 = vadd.xlane.f32.xlu0 %v1866
  %v1868 = vpop.xlane.xlu0 %1867
  %v1869 = vmul.f32 %v1868, 0.05
  %v1870 = vadd.f32 %v1513, %v1869
  %v1871 = vmul.f32 %v1854, %v1860
  %v1872 = vsel %vm69, %v1871, 0.0
  %1873 = vadd.xlane.f32.xlu0 %v1872
  %v1874 = vpop.xlane.xlu0 %1873
  %v1875 = vadd.f32 %v1870, %v1874
  %1877 = vrot.lane.b32.xlu0 %v1854, 108
  %v1878 = vpop.permute.xlu0 %1877
  %v1881 = vsel %vm69, %v1591, 0
  %1883 = vmatprep.subr.mxu0 0.0
  %1884 = vmatpush1.msra.mxu0 %v35
  %1885 = vmatprep.subr.mxu0 0.0
  %1886 = vmatpush1.msra.mxu0 0.0
  %1887 = vmatprep.subr.mxu0 0.0
  %1888 = vmatpush1.msra.mxu0 0.0
  %1889 = vmatprep.subr.mxu0 0.0
  %1890 = vmatpush1.msra.mxu0 0.0
  %1891 = vmatprep.subr.mxu0 0.0
  %1892 = vmatpush1.msra.mxu0 0.0
  %1893 = vmatprep.subr.mxu0 0.0
  %1894 = vmatpush1.msra.mxu0 0.0
  %1895 = vmatprep.subr.mxu0 0.0
  %1896 = vmatpush1.msra.mxu0 0.0
  %1897 = vmatprep.subr.mxu0 0.0
  %1898 = vmatpush1.msra.mxu0 0.0
  %1899 = vmatprep.subr.mxu0 0.0
  %1900 = vmatpush1.msra.mxu0 0.0
  %1901 = vmatprep.subr.mxu0 0.0
  %1902 = vmatpush1.msra.mxu0 0.0
  %1903 = vmatprep.subr.mxu0 0.0
  %1904 = vmatpush1.msra.mxu0 0.0
  %1905 = vmatprep.subr.mxu0 0.0
  %1906 = vmatpush1.msra.mxu0 0.0
  %1907 = vmatprep.subr.mxu0 0.0
  %1908 = vmatpush1.msra.mxu0 0.0
  %1909 = vmatprep.subr.mxu0 0.0
  %1910 = vmatpush1.msra.mxu0 0.0
  %1911 = vmatprep.subr.mxu0 0.0
  %1912 = vmatpush1.msra.mxu0 0.0
  %1913 = vmatprep.subr.mxu0 0.0
  %1914 = vmatpush1.msra.mxu0 0.0
  %1915 = vmatprep.subr.mxu0 0.0
  %1916 = vmatpush1.msra.mxu0 0.0
  %1917 = vmatprep.subr.mxu0 0.0
  %1918 = vmatpush1.msra.mxu0 0.0
  %1919 = vmatprep.subr.mxu0 0.0
  %1920 = vmatpush1.msra.mxu0 0.0
  %1921 = vmatprep.subr.mxu0 0.0
  %1922 = vmatpush1.msra.mxu0 0.0
  %1923 = vmatprep.subr.mxu0 0.0
  %1924 = vmatpush1.msra.mxu0 0.0
  %1925 = vmatprep.subr.mxu0 0.0
  %1926 = vmatpush1.msra.mxu0 0.0
  %1927 = vmatprep.subr.mxu0 0.0
  %1928 = vmatpush1.msra.mxu0 0.0
  %1929 = vmatprep.subr.mxu0 0.0
  %1930 = vmatpush1.msra.mxu0 0.0
  %1931 = vmatprep.subr.mxu0 0.0
  %1932 = vmatpush1.msra.mxu0 0.0
  %1933 = vmatprep.subr.mxu0 0.0
  %1934 = vmatpush1.msra.mxu0 0.0
  %1935 = vmatprep.subr.mxu0 0.0
  %1936 = vmatpush1.msra.mxu0 0.0
  %1937 = vmatprep.subr.mxu0 0.0
  %1938 = vmatpush1.msra.mxu0 0.0
  %1939 = vmatprep.subr.mxu0 0.0
  %1940 = vmatpush1.msra.mxu0 0.0
  %1941 = vmatprep.subr.mxu0 0.0
  %1942 = vmatpush1.msra.mxu0 0.0
  %1943 = vmatprep.subr.mxu0 0.0
  %1944 = vmatpush1.msra.mxu0 0.0
  %1945 = vmatprep.subr.mxu0 0.0
  %1946 = vmatpush1.msra.mxu0 0.0
  %1947 = vmatprep.mubr.f32.mxu0 0.0
  %1948 = vmatmul.mubr.f32.gmra.mrb[0].mxu0 %v1881
  %v1949 = vpop.f32.mrb[0].mxu0
  %v1950 = vadd.f32 %v1878, %v1949
  %v1951 = vpop.f32.mrb[0].mxu0
  %1952 = vdwg.mxu0
  %v1953 = vadd.f32 %v1950, %v1860
  %s1954 = scalar_lea.vmem %s4, 40
  %1955 = vst.msk [vmem:[%s1954] sm:$0xff] %vm69, %v1953
  %1956 = vrot.lane.b32.xlu0 %v1854, 112
  %v1957 = vpop.permute.xlu0 %1956
  %s1959 = scalar_lea.vmem %s5, 32
  %1960 = vst.msk [vmem:[%s1959] sm:$0xff] %vm418, %v1957
  %v1961 = vpack.c.bf16 %v1953, %v1953
  %1962 = vmatprep.subr.bf16.mxu0 0
  %1963 = vmatpush1.bf16.msra.mxu0 %v81
  %1964 = vmatprep.subr.bf16.mxu0 0
  %1965 = vmatpush1.bf16.msra.mxu0 %v82
  %1966 = vmatprep.subr.bf16.mxu0 0
  %1967 = vmatpush1.bf16.msra.mxu0 0
  %1968 = vmatprep.subr.bf16.mxu0 0
  %1969 = vmatpush1.bf16.msra.mxu0 0
  %1970 = vmatprep.subr.bf16.mxu0 0
  %1971 = vmatpush1.bf16.msra.mxu0 0
  %1972 = vmatprep.subr.bf16.mxu0 0
  %1973 = vmatpush1.bf16.msra.mxu0 0
  %1974 = vmatprep.subr.bf16.mxu0 0
  %1975 = vmatpush1.bf16.msra.mxu0 0
  %1976 = vmatprep.subr.bf16.mxu0 0
  %1977 = vmatpush1.bf16.msra.mxu0 0
  %1978 = vmatprep.subr.bf16.mxu0 0
  %1979 = vmatpush1.bf16.msra.mxu0 0
  %1980 = vmatprep.subr.bf16.mxu0 0
  %1981 = vmatpush1.bf16.msra.mxu0 0
  %1982 = vmatprep.subr.bf16.mxu0 0
  %1983 = vmatpush1.bf16.msra.mxu0 0
  %1984 = vmatprep.subr.bf16.mxu0 0
  %1985 = vmatpush1.bf16.msra.mxu0 0
  %1986 = vmatprep.subr.bf16.mxu0 0
  %1987 = vmatpush1.bf16.msra.mxu0 0
  %1988 = vmatprep.subr.bf16.mxu0 0
  %1989 = vmatpush1.bf16.msra.mxu0 0
  %1990 = vmatprep.subr.bf16.mxu0 0
  %1991 = vmatpush1.bf16.msra.mxu0 0
  %1992 = vmatprep.subr.bf16.mxu0 0
  %1993 = vmatpush1.bf16.msra.mxu0 0
  %1994 = vmatprep.mubr.bf16.mxu0 0
  %1995 = vmatmul.mubr.bf16.gmra.mrb[0].mxu0 %v1749
  %v1996 = vpop.f32.mrb[0].mxu0
  %v1997 = vadd.f32 0.0, %v1996
  %v1998 = vpop.f32.mrb[0].mxu0
  %v1999 = vpop.f32.mrb[0].mxu0
  %v2000 = vpop.f32.mrb[0].mxu0
  %2001 = vdwg.mxu0
  %v2003 = vsel %vm69, %v1961, 0
  %2005 = vmatprep.subr.bf16.mxu0 0
  %2006 = vmatpush1.bf16.msra.mxu0 %v134
  %2007 = vmatprep.subr.bf16.mxu0 0
  %2008 = vmatpush1.bf16.msra.mxu0 0
  %2009 = vmatprep.subr.bf16.mxu0 0
  %2010 = vmatpush1.bf16.msra.mxu0 0
  %2011 = vmatprep.subr.bf16.mxu0 0
  %2012 = vmatpush1.bf16.msra.mxu0 0
  %2013 = vmatprep.subr.bf16.mxu0 0
  %2014 = vmatpush1.bf16.msra.mxu0 0
  %2015 = vmatprep.subr.bf16.mxu0 0
  %2016 = vmatpush1.bf16.msra.mxu0 0
  %2017 = vmatprep.subr.bf16.mxu0 0
  %2018 = vmatpush1.bf16.msra.mxu0 0
  %2019 = vmatprep.subr.bf16.mxu0 0
  %2020 = vmatpush1.bf16.msra.mxu0 0
  %2021 = vmatprep.subr.bf16.mxu0 0
  %2022 = vmatpush1.bf16.msra.mxu0 0
  %2023 = vmatprep.subr.bf16.mxu0 0
  %2024 = vmatpush1.bf16.msra.mxu0 0
  %2025 = vmatprep.subr.bf16.mxu0 0
  %2026 = vmatpush1.bf16.msra.mxu0 0
  %2027 = vmatprep.subr.bf16.mxu0 0
  %2028 = vmatpush1.bf16.msra.mxu0 0
  %2029 = vmatprep.subr.bf16.mxu0 0
  %2030 = vmatpush1.bf16.msra.mxu0 0
  %2031 = vmatprep.subr.bf16.mxu0 0
  %2032 = vmatpush1.bf16.msra.mxu0 0
  %2033 = vmatprep.subr.bf16.mxu0 0
  %2034 = vmatpush1.bf16.msra.mxu0 0
  %2035 = vmatprep.subr.bf16.mxu0 0
  %2036 = vmatpush1.bf16.msra.mxu0 0
  %2037 = vmatprep.mubr.bf16.mxu0 0
  %2038 = vmatmul.mubr.bf16.gmra.mrb[0].mxu0 %v2003
  %v2039 = vpop.f32.mrb[0].mxu0
  %v2040 = vadd.f32 %v1997, %v2039
  %v2041 = vpop.f32.mrb[0].mxu0
  %v2042 = vpop.f32.mrb[0].mxu0
  %v2043 = vpop.f32.mrb[0].mxu0
  %2044 = vdwg.mxu0
  %v2045 = vadd.f32 %v2040, %v179
  %v2046 = vtanh.pop %v2045
  %v2047 = vmul.f32 %v2046, 0.5
  %v2048 = vadd.f32 %v2047, 0.5
  %v2049 = vmul.f32 %v2048, %v1697
  %2051 = vrot.lane.b32.xlu0 %v2046, 64
  %v2052 = vpop.permute.xlu0 %2051
  %v2054 = vmul.f32 %v2048, %v2052
  %2056 = vrot.lane.b32.xlu0 %v2054, 32
  %v2057 = vpop.permute.xlu0 %2056
  %v2059 = vadd.f32 %v2049, %v2057
  %v2060 = vtanh.pop %v2059
  %2062 = vrot.lane.b32.xlu0 %v2060, 64
  %v2063 = vpop.permute.xlu0 %2062
  %v2065 = vmul.f32 %v2048, %v2063
  %v2066 = vpack.c.bf16 %v2065, %v2065
  %2067 = vmatprep.subr.bf16.mxu0 0
  %2068 = vmatpush1.bf16.msra.mxu0 %v215
  %2069 = vmatprep.subr.bf16.mxu0 0
  %2070 = vmatpush1.bf16.msra.mxu0 %v216
  %2071 = vmatprep.subr.bf16.mxu0 0
  %2072 = vmatpush1.bf16.msra.mxu0 0
  %2073 = vmatprep.subr.bf16.mxu0 0
  %2074 = vmatpush1.bf16.msra.mxu0 0
  %2075 = vmatprep.subr.bf16.mxu0 0
  %2076 = vmatpush1.bf16.msra.mxu0 0
  %2077 = vmatprep.subr.bf16.mxu0 0
  %2078 = vmatpush1.bf16.msra.mxu0 0
  %2079 = vmatprep.subr.bf16.mxu0 0
  %2080 = vmatpush1.bf16.msra.mxu0 0
  %2081 = vmatprep.subr.bf16.mxu0 0
  %2082 = vmatpush1.bf16.msra.mxu0 0
  %2083 = vmatprep.subr.bf16.mxu0 0
  %2084 = vmatpush1.bf16.msra.mxu0 0
  %2085 = vmatprep.subr.bf16.mxu0 0
  %2086 = vmatpush1.bf16.msra.mxu0 0
  %2087 = vmatprep.subr.bf16.mxu0 0
  %2088 = vmatpush1.bf16.msra.mxu0 0
  %2089 = vmatprep.subr.bf16.mxu0 0
  %2090 = vmatpush1.bf16.msra.mxu0 0
  %2091 = vmatprep.subr.bf16.mxu0 0
  %2092 = vmatpush1.bf16.msra.mxu0 0
  %2093 = vmatprep.subr.bf16.mxu0 0
  %2094 = vmatpush1.bf16.msra.mxu0 0
  %2095 = vmatprep.subr.bf16.mxu0 0
  %2096 = vmatpush1.bf16.msra.mxu0 0
  %2097 = vmatprep.subr.bf16.mxu0 0
  %2098 = vmatpush1.bf16.msra.mxu0 0
  %2099 = vmatprep.mubr.bf16.mxu0 0
  %2100 = vmatmul.mubr.bf16.gmra.mrb[0].mxu0 %v1817
  %v2101 = vpop.f32.mrb[0].mxu0
  %v2102 = vadd.f32 0.0, %v2101
  %v2103 = vpop.f32.mrb[0].mxu0
  %v2104 = vpop.f32.mrb[0].mxu0
  %v2105 = vpop.f32.mrb[0].mxu0
  %2106 = vdwg.mxu0
  %2108 = vrot.lane.b32.xlu0 %v2066, 32
  %v2109 = vpop.permute.xlu0 %2108
  %v2111 = vsel %vm85, %v2109, 0
  %2113 = vmatprep.subr.bf16.mxu0 0
  %2114 = vmatpush1.bf16.msra.mxu0 %v273
  %2115 = vmatprep.subr.bf16.mxu0 0
  %2116 = vmatpush1.bf16.msra.mxu0 %v274
  %2117 = vmatprep.subr.bf16.mxu0 0
  %2118 = vmatpush1.bf16.msra.mxu0 0
  %2119 = vmatprep.subr.bf16.mxu0 0
  %2120 = vmatpush1.bf16.msra.mxu0 0
  %2121 = vmatprep.subr.bf16.mxu0 0
  %2122 = vmatpush1.bf16.msra.mxu0 0
  %2123 = vmatprep.subr.bf16.mxu0 0
  %2124 = vmatpush1.bf16.msra.mxu0 0
  %2125 = vmatprep.subr.bf16.mxu0 0
  %2126 = vmatpush1.bf16.msra.mxu0 0
  %2127 = vmatprep.subr.bf16.mxu0 0
  %2128 = vmatpush1.bf16.msra.mxu0 0
  %2129 = vmatprep.subr.bf16.mxu0 0
  %2130 = vmatpush1.bf16.msra.mxu0 0
  %2131 = vmatprep.subr.bf16.mxu0 0
  %2132 = vmatpush1.bf16.msra.mxu0 0
  %2133 = vmatprep.subr.bf16.mxu0 0
  %2134 = vmatpush1.bf16.msra.mxu0 0
  %2135 = vmatprep.subr.bf16.mxu0 0
  %2136 = vmatpush1.bf16.msra.mxu0 0
  %2137 = vmatprep.subr.bf16.mxu0 0
  %2138 = vmatpush1.bf16.msra.mxu0 0
  %2139 = vmatprep.subr.bf16.mxu0 0
  %2140 = vmatpush1.bf16.msra.mxu0 0
  %2141 = vmatprep.subr.bf16.mxu0 0
  %2142 = vmatpush1.bf16.msra.mxu0 0
  %2143 = vmatprep.subr.bf16.mxu0 0
  %2144 = vmatpush1.bf16.msra.mxu0 0
  %2145 = vmatprep.mubr.bf16.mxu0 0
  %2146 = vmatmul.mubr.bf16.gmra.mrb[0].mxu0 %v2111
  %v2147 = vpop.f32.mrb[0].mxu0
  %v2148 = vadd.f32 %v2102, %v2147
  %v2149 = vpop.f32.mrb[0].mxu0
  %v2150 = vpop.f32.mrb[0].mxu0
  %v2151 = vpop.f32.mrb[0].mxu0
  %2152 = vdwg.mxu0
  %v2153 = vadd.f32 %v2148, %v323
  %v2154 = vtanh.pop %v2153
  %v2155 = vmul.f32 %v2154, 0.5
  %v2156 = vadd.f32 %v2155, 0.5
  %v2157 = vmul.f32 %v2156, %v1805
  %2159 = vrot.lane.b32.xlu0 %v2154, 64
  %v2160 = vpop.permute.xlu0 %2159
  %v2162 = vmul.f32 %v2156, %v2160
  %2164 = vrot.lane.b32.xlu0 %v2162, 32
  %v2165 = vpop.permute.xlu0 %2164
  %v2167 = vadd.f32 %v2157, %v2165
  %v2168 = vtanh.pop %v2167
  %2170 = vrot.lane.b32.xlu0 %v2168, 64
  %v2171 = vpop.permute.xlu0 %2170
  %v2173 = vmul.f32 %v2156, %v2171
  %v2174 = vpack.c.bf16 %v2173, %v2173
  %2176 = vrot.lane.b32.xlu0 %v2174, 32
  %v2177 = vpop.permute.xlu0 %2176
  %v2179 = vsel %vm85, %v2177, 0
  %2181 = vmatprep.subr.bf16.mxu0 0
  %2182 = vmatpush1.bf16.msra.mxu0 %v365
  %2183 = vmatprep.subr.bf16.mxu0 0
  %2184 = vmatpush1.bf16.msra.mxu0 %v366
  %2185 = vmatprep.subr.bf16.mxu0 0
  %2186 = vmatpush1.bf16.msra.mxu0 0
  %2187 = vmatprep.subr.bf16.mxu0 0
  %2188 = vmatpush1.bf16.msra.mxu0 0
  %2189 = vmatprep.subr.bf16.mxu0 0
  %2190 = vmatpush1.bf16.msra.mxu0 0
  %2191 = vmatprep.subr.bf16.mxu0 0
  %2192 = vmatpush1.bf16.msra.mxu0 0
  %2193 = vmatprep.subr.bf16.mxu0 0
  %2194 = vmatpush1.bf16.msra.mxu0 0
  %2195 = vmatprep.subr.bf16.mxu0 0
  %2196 = vmatpush1.bf16.msra.mxu0 0
  %2197 = vmatprep.subr.bf16.mxu0 0
  %2198 = vmatpush1.bf16.msra.mxu0 0
  %2199 = vmatprep.subr.bf16.mxu0 0
  %2200 = vmatpush1.bf16.msra.mxu0 0
  %2201 = vmatprep.subr.bf16.mxu0 0
  %2202 = vmatpush1.bf16.msra.mxu0 0
  %2203 = vmatprep.subr.bf16.mxu0 0
  %2204 = vmatpush1.bf16.msra.mxu0 0
  %2205 = vmatprep.subr.bf16.mxu0 0
  %2206 = vmatpush1.bf16.msra.mxu0 0
  %2207 = vmatprep.subr.bf16.mxu0 0
  %2208 = vmatpush1.bf16.msra.mxu0 0
  %2209 = vmatprep.subr.bf16.mxu0 0
  %2210 = vmatpush1.bf16.msra.mxu0 0
  %2211 = vmatprep.subr.bf16.mxu0 0
  %2212 = vmatpush1.bf16.msra.mxu0 0
  %2213 = vmatprep.mubr.bf16.mxu0 0
  %2214 = vmatmul.mubr.bf16.gmra.mrb[0].mxu0 %v2179
  %v2215 = vpop.f32.mrb[0].mxu0
  %v2216 = vadd.f32 %v353, %v2215
  %v2217 = vpop.f32.mrb[0].mxu0
  %v2218 = vpop.f32.mrb[0].mxu0
  %v2219 = vpop.f32.mrb[0].mxu0
  %2220 = vdwg.mxu0
  %s2221 = scalar_lea.vmem %s0, 40
  %v2222 = vld [vmem:[%s2221] sm:$0xff]
  %v2223 = vmul.f32 %v2216, %v2216
  %2225 = vrot.lane.b32.xlu0 %v2223, 112
  %v2226 = vpop.permute.xlu0 %2225
  %v2228 = vsel %vm418, %v2226, 0.0
  %2229 = vadd.xlane.f32.xlu0 %v2228
  %v2230 = vpop.xlane.xlu0 %2229
  %v2231 = vmul.f32 %v2230, 0.05
  %v2232 = vadd.f32 %v1875, %v2231
  %v2233 = vmul.f32 %v2216, %v2222
  %v2234 = vsel %vm69, %v2233, 0.0
  %2235 = vadd.xlane.f32.xlu0 %v2234
  %v2236 = vpop.xlane.xlu0 %2235
  %v2237 = vadd.f32 %v2232, %v2236
  %2239 = vrot.lane.b32.xlu0 %v2216, 108
  %v2240 = vpop.permute.xlu0 %2239
  %v2243 = vsel %vm69, %v1953, 0
  %2245 = vmatprep.subr.mxu0 0.0
  %2246 = vmatpush1.msra.mxu0 %v35
  %2247 = vmatprep.subr.mxu0 0.0
  %2248 = vmatpush1.msra.mxu0 0.0
  %2249 = vmatprep.subr.mxu0 0.0
  %2250 = vmatpush1.msra.mxu0 0.0
  %2251 = vmatprep.subr.mxu0 0.0
  %2252 = vmatpush1.msra.mxu0 0.0
  %2253 = vmatprep.subr.mxu0 0.0
  %2254 = vmatpush1.msra.mxu0 0.0
  %2255 = vmatprep.subr.mxu0 0.0
  %2256 = vmatpush1.msra.mxu0 0.0
  %2257 = vmatprep.subr.mxu0 0.0
  %2258 = vmatpush1.msra.mxu0 0.0
  %2259 = vmatprep.subr.mxu0 0.0
  %2260 = vmatpush1.msra.mxu0 0.0
  %2261 = vmatprep.subr.mxu0 0.0
  %2262 = vmatpush1.msra.mxu0 0.0
  %2263 = vmatprep.subr.mxu0 0.0
  %2264 = vmatpush1.msra.mxu0 0.0
  %2265 = vmatprep.subr.mxu0 0.0
  %2266 = vmatpush1.msra.mxu0 0.0
  %2267 = vmatprep.subr.mxu0 0.0
  %2268 = vmatpush1.msra.mxu0 0.0
  %2269 = vmatprep.subr.mxu0 0.0
  %2270 = vmatpush1.msra.mxu0 0.0
  %2271 = vmatprep.subr.mxu0 0.0
  %2272 = vmatpush1.msra.mxu0 0.0
  %2273 = vmatprep.subr.mxu0 0.0
  %2274 = vmatpush1.msra.mxu0 0.0
  %2275 = vmatprep.subr.mxu0 0.0
  %2276 = vmatpush1.msra.mxu0 0.0
  %2277 = vmatprep.subr.mxu0 0.0
  %2278 = vmatpush1.msra.mxu0 0.0
  %2279 = vmatprep.subr.mxu0 0.0
  %2280 = vmatpush1.msra.mxu0 0.0
  %2281 = vmatprep.subr.mxu0 0.0
  %2282 = vmatpush1.msra.mxu0 0.0
  %2283 = vmatprep.subr.mxu0 0.0
  %2284 = vmatpush1.msra.mxu0 0.0
  %2285 = vmatprep.subr.mxu0 0.0
  %2286 = vmatpush1.msra.mxu0 0.0
  %2287 = vmatprep.subr.mxu0 0.0
  %2288 = vmatpush1.msra.mxu0 0.0
  %2289 = vmatprep.subr.mxu0 0.0
  %2290 = vmatpush1.msra.mxu0 0.0
  %2291 = vmatprep.subr.mxu0 0.0
  %2292 = vmatpush1.msra.mxu0 0.0
  %2293 = vmatprep.subr.mxu0 0.0
  %2294 = vmatpush1.msra.mxu0 0.0
  %2295 = vmatprep.subr.mxu0 0.0
  %2296 = vmatpush1.msra.mxu0 0.0
  %2297 = vmatprep.subr.mxu0 0.0
  %2298 = vmatpush1.msra.mxu0 0.0
  %2299 = vmatprep.subr.mxu0 0.0
  %2300 = vmatpush1.msra.mxu0 0.0
  %2301 = vmatprep.subr.mxu0 0.0
  %2302 = vmatpush1.msra.mxu0 0.0
  %2303 = vmatprep.subr.mxu0 0.0
  %2304 = vmatpush1.msra.mxu0 0.0
  %2305 = vmatprep.subr.mxu0 0.0
  %2306 = vmatpush1.msra.mxu0 0.0
  %2307 = vmatprep.subr.mxu0 0.0
  %2308 = vmatpush1.msra.mxu0 0.0
  %2309 = vmatprep.mubr.f32.mxu0 0.0
  %2310 = vmatmul.mubr.f32.gmra.mrb[0].mxu0 %v2243
  %v2311 = vpop.f32.mrb[0].mxu0
  %v2312 = vadd.f32 %v2240, %v2311
  %v2313 = vpop.f32.mrb[0].mxu0
  %2314 = vdwg.mxu0
  %v2315 = vadd.f32 %v2312, %v2222
  %s2316 = scalar_lea.vmem %s4, 48
  %2317 = vst.msk [vmem:[%s2316] sm:$0xff] %vm69, %v2315
  %2318 = vrot.lane.b32.xlu0 %v2216, 112
  %v2319 = vpop.permute.xlu0 %2318
  %s2321 = scalar_lea.vmem %s5, 40
  %2322 = vst.msk [vmem:[%s2321] sm:$0xff] %vm418, %v2319
  %v2323 = vpack.c.bf16 %v2315, %v2315
  %2324 = vmatprep.subr.bf16.mxu0 0
  %2325 = vmatpush1.bf16.msra.mxu0 %v81
  %2326 = vmatprep.subr.bf16.mxu0 0
  %2327 = vmatpush1.bf16.msra.mxu0 %v82
  %2328 = vmatprep.subr.bf16.mxu0 0
  %2329 = vmatpush1.bf16.msra.mxu0 0
  %2330 = vmatprep.subr.bf16.mxu0 0
  %2331 = vmatpush1.bf16.msra.mxu0 0
  %2332 = vmatprep.subr.bf16.mxu0 0
  %2333 = vmatpush1.bf16.msra.mxu0 0
  %2334 = vmatprep.subr.bf16.mxu0 0
  %2335 = vmatpush1.bf16.msra.mxu0 0
  %2336 = vmatprep.subr.bf16.mxu0 0
  %2337 = vmatpush1.bf16.msra.mxu0 0
  %2338 = vmatprep.subr.bf16.mxu0 0
  %2339 = vmatpush1.bf16.msra.mxu0 0
  %2340 = vmatprep.subr.bf16.mxu0 0
  %2341 = vmatpush1.bf16.msra.mxu0 0
  %2342 = vmatprep.subr.bf16.mxu0 0
  %2343 = vmatpush1.bf16.msra.mxu0 0
  %2344 = vmatprep.subr.bf16.mxu0 0
  %2345 = vmatpush1.bf16.msra.mxu0 0
  %2346 = vmatprep.subr.bf16.mxu0 0
  %2347 = vmatpush1.bf16.msra.mxu0 0
  %2348 = vmatprep.subr.bf16.mxu0 0
  %2349 = vmatpush1.bf16.msra.mxu0 0
  %2350 = vmatprep.subr.bf16.mxu0 0
  %2351 = vmatpush1.bf16.msra.mxu0 0
  %2352 = vmatprep.subr.bf16.mxu0 0
  %2353 = vmatpush1.bf16.msra.mxu0 0
  %2354 = vmatprep.subr.bf16.mxu0 0
  %2355 = vmatpush1.bf16.msra.mxu0 0
  %2356 = vmatprep.mubr.bf16.mxu0 0
  %2357 = vmatmul.mubr.bf16.gmra.mrb[0].mxu0 %v2111
  %v2358 = vpop.f32.mrb[0].mxu0
  %v2359 = vadd.f32 0.0, %v2358
  %v2360 = vpop.f32.mrb[0].mxu0
  %v2361 = vpop.f32.mrb[0].mxu0
  %v2362 = vpop.f32.mrb[0].mxu0
  %2363 = vdwg.mxu0
  %v2365 = vsel %vm69, %v2323, 0
  %2367 = vmatprep.subr.bf16.mxu0 0
  %2368 = vmatpush1.bf16.msra.mxu0 %v134
  %2369 = vmatprep.subr.bf16.mxu0 0
  %2370 = vmatpush1.bf16.msra.mxu0 0
  %2371 = vmatprep.subr.bf16.mxu0 0
  %2372 = vmatpush1.bf16.msra.mxu0 0
  %2373 = vmatprep.subr.bf16.mxu0 0
  %2374 = vmatpush1.bf16.msra.mxu0 0
  %2375 = vmatprep.subr.bf16.mxu0 0
  %2376 = vmatpush1.bf16.msra.mxu0 0
  %2377 = vmatprep.subr.bf16.mxu0 0
  %2378 = vmatpush1.bf16.msra.mxu0 0
  %2379 = vmatprep.subr.bf16.mxu0 0
  %2380 = vmatpush1.bf16.msra.mxu0 0
  %2381 = vmatprep.subr.bf16.mxu0 0
  %2382 = vmatpush1.bf16.msra.mxu0 0
  %2383 = vmatprep.subr.bf16.mxu0 0
  %2384 = vmatpush1.bf16.msra.mxu0 0
  %2385 = vmatprep.subr.bf16.mxu0 0
  %2386 = vmatpush1.bf16.msra.mxu0 0
  %2387 = vmatprep.subr.bf16.mxu0 0
  %2388 = vmatpush1.bf16.msra.mxu0 0
  %2389 = vmatprep.subr.bf16.mxu0 0
  %2390 = vmatpush1.bf16.msra.mxu0 0
  %2391 = vmatprep.subr.bf16.mxu0 0
  %2392 = vmatpush1.bf16.msra.mxu0 0
  %2393 = vmatprep.subr.bf16.mxu0 0
  %2394 = vmatpush1.bf16.msra.mxu0 0
  %2395 = vmatprep.subr.bf16.mxu0 0
  %2396 = vmatpush1.bf16.msra.mxu0 0
  %2397 = vmatprep.subr.bf16.mxu0 0
  %2398 = vmatpush1.bf16.msra.mxu0 0
  %2399 = vmatprep.mubr.bf16.mxu0 0
  %2400 = vmatmul.mubr.bf16.gmra.mrb[0].mxu0 %v2365
  %v2401 = vpop.f32.mrb[0].mxu0
  %v2402 = vadd.f32 %v2359, %v2401
  %v2403 = vpop.f32.mrb[0].mxu0
  %v2404 = vpop.f32.mrb[0].mxu0
  %v2405 = vpop.f32.mrb[0].mxu0
  %2406 = vdwg.mxu0
  %v2407 = vadd.f32 %v2402, %v179
  %v2408 = vtanh.pop %v2407
  %v2409 = vmul.f32 %v2408, 0.5
  %v2410 = vadd.f32 %v2409, 0.5
  %v2411 = vmul.f32 %v2410, %v2059
  %2413 = vrot.lane.b32.xlu0 %v2408, 64
  %v2414 = vpop.permute.xlu0 %2413
  %v2416 = vmul.f32 %v2410, %v2414
  %2418 = vrot.lane.b32.xlu0 %v2416, 32
  %v2419 = vpop.permute.xlu0 %2418
  %v2421 = vadd.f32 %v2411, %v2419
  %v2422 = vtanh.pop %v2421
  %2424 = vrot.lane.b32.xlu0 %v2422, 64
  %v2425 = vpop.permute.xlu0 %2424
  %v2427 = vmul.f32 %v2410, %v2425
  %v2428 = vpack.c.bf16 %v2427, %v2427
  %2429 = vmatprep.subr.bf16.mxu0 0
  %2430 = vmatpush1.bf16.msra.mxu0 %v215
  %2431 = vmatprep.subr.bf16.mxu0 0
  %2432 = vmatpush1.bf16.msra.mxu0 %v216
  %2433 = vmatprep.subr.bf16.mxu0 0
  %2434 = vmatpush1.bf16.msra.mxu0 0
  %2435 = vmatprep.subr.bf16.mxu0 0
  %2436 = vmatpush1.bf16.msra.mxu0 0
  %2437 = vmatprep.subr.bf16.mxu0 0
  %2438 = vmatpush1.bf16.msra.mxu0 0
  %2439 = vmatprep.subr.bf16.mxu0 0
  %2440 = vmatpush1.bf16.msra.mxu0 0
  %2441 = vmatprep.subr.bf16.mxu0 0
  %2442 = vmatpush1.bf16.msra.mxu0 0
  %2443 = vmatprep.subr.bf16.mxu0 0
  %2444 = vmatpush1.bf16.msra.mxu0 0
  %2445 = vmatprep.subr.bf16.mxu0 0
  %2446 = vmatpush1.bf16.msra.mxu0 0
  %2447 = vmatprep.subr.bf16.mxu0 0
  %2448 = vmatpush1.bf16.msra.mxu0 0
  %2449 = vmatprep.subr.bf16.mxu0 0
  %2450 = vmatpush1.bf16.msra.mxu0 0
  %2451 = vmatprep.subr.bf16.mxu0 0
  %2452 = vmatpush1.bf16.msra.mxu0 0
  %2453 = vmatprep.subr.bf16.mxu0 0
  %2454 = vmatpush1.bf16.msra.mxu0 0
  %2455 = vmatprep.subr.bf16.mxu0 0
  %2456 = vmatpush1.bf16.msra.mxu0 0
  %2457 = vmatprep.subr.bf16.mxu0 0
  %2458 = vmatpush1.bf16.msra.mxu0 0
  %2459 = vmatprep.subr.bf16.mxu0 0
  %2460 = vmatpush1.bf16.msra.mxu0 0
  %2461 = vmatprep.mubr.bf16.mxu0 0
  %2462 = vmatmul.mubr.bf16.gmra.mrb[0].mxu0 %v2179
  %v2463 = vpop.f32.mrb[0].mxu0
  %v2464 = vadd.f32 0.0, %v2463
  %v2465 = vpop.f32.mrb[0].mxu0
  %v2466 = vpop.f32.mrb[0].mxu0
  %v2467 = vpop.f32.mrb[0].mxu0
  %2468 = vdwg.mxu0
  %2470 = vrot.lane.b32.xlu0 %v2428, 32
  %v2471 = vpop.permute.xlu0 %2470
  %v2473 = vsel %vm85, %v2471, 0
  %2475 = vmatprep.subr.bf16.mxu0 0
  %2476 = vmatpush1.bf16.msra.mxu0 %v273
  %2477 = vmatprep.subr.bf16.mxu0 0
  %2478 = vmatpush1.bf16.msra.mxu0 %v274
  %2479 = vmatprep.subr.bf16.mxu0 0
  %2480 = vmatpush1.bf16.msra.mxu0 0
  %2481 = vmatprep.subr.bf16.mxu0 0
  %2482 = vmatpush1.bf16.msra.mxu0 0
  %2483 = vmatprep.subr.bf16.mxu0 0
  %2484 = vmatpush1.bf16.msra.mxu0 0
  %2485 = vmatprep.subr.bf16.mxu0 0
  %2486 = vmatpush1.bf16.msra.mxu0 0
  %2487 = vmatprep.subr.bf16.mxu0 0
  %2488 = vmatpush1.bf16.msra.mxu0 0
  %2489 = vmatprep.subr.bf16.mxu0 0
  %2490 = vmatpush1.bf16.msra.mxu0 0
  %2491 = vmatprep.subr.bf16.mxu0 0
  %2492 = vmatpush1.bf16.msra.mxu0 0
  %2493 = vmatprep.subr.bf16.mxu0 0
  %2494 = vmatpush1.bf16.msra.mxu0 0
  %2495 = vmatprep.subr.bf16.mxu0 0
  %2496 = vmatpush1.bf16.msra.mxu0 0
  %2497 = vmatprep.subr.bf16.mxu0 0
  %2498 = vmatpush1.bf16.msra.mxu0 0
  %2499 = vmatprep.subr.bf16.mxu0 0
  %2500 = vmatpush1.bf16.msra.mxu0 0
  %2501 = vmatprep.subr.bf16.mxu0 0
  %2502 = vmatpush1.bf16.msra.mxu0 0
  %2503 = vmatprep.subr.bf16.mxu0 0
  %2504 = vmatpush1.bf16.msra.mxu0 0
  %2505 = vmatprep.subr.bf16.mxu0 0
  %2506 = vmatpush1.bf16.msra.mxu0 0
  %2507 = vmatprep.mubr.bf16.mxu0 0
  %2508 = vmatmul.mubr.bf16.gmra.mrb[0].mxu0 %v2473
  %v2509 = vpop.f32.mrb[0].mxu0
  %v2510 = vadd.f32 %v2464, %v2509
  %v2511 = vpop.f32.mrb[0].mxu0
  %v2512 = vpop.f32.mrb[0].mxu0
  %v2513 = vpop.f32.mrb[0].mxu0
  %2514 = vdwg.mxu0
  %v2515 = vadd.f32 %v2510, %v323
  %v2516 = vtanh.pop %v2515
  %v2517 = vmul.f32 %v2516, 0.5
  %v2518 = vadd.f32 %v2517, 0.5
  %v2519 = vmul.f32 %v2518, %v2167
  %2521 = vrot.lane.b32.xlu0 %v2516, 64
  %v2522 = vpop.permute.xlu0 %2521
  %v2524 = vmul.f32 %v2518, %v2522
  %2526 = vrot.lane.b32.xlu0 %v2524, 32
  %v2527 = vpop.permute.xlu0 %2526
  %v2529 = vadd.f32 %v2519, %v2527
  %v2530 = vtanh.pop %v2529
  %2532 = vrot.lane.b32.xlu0 %v2530, 64
  %v2533 = vpop.permute.xlu0 %2532
  %v2535 = vmul.f32 %v2518, %v2533
  %v2536 = vpack.c.bf16 %v2535, %v2535
  %2538 = vrot.lane.b32.xlu0 %v2536, 32
  %v2539 = vpop.permute.xlu0 %2538
  %v2541 = vsel %vm85, %v2539, 0
  %2543 = vmatprep.subr.bf16.mxu0 0
  %2544 = vmatpush1.bf16.msra.mxu0 %v365
  %2545 = vmatprep.subr.bf16.mxu0 0
  %2546 = vmatpush1.bf16.msra.mxu0 %v366
  %2547 = vmatprep.subr.bf16.mxu0 0
  %2548 = vmatpush1.bf16.msra.mxu0 0
  %2549 = vmatprep.subr.bf16.mxu0 0
  %2550 = vmatpush1.bf16.msra.mxu0 0
  %2551 = vmatprep.subr.bf16.mxu0 0
  %2552 = vmatpush1.bf16.msra.mxu0 0
  %2553 = vmatprep.subr.bf16.mxu0 0
  %2554 = vmatpush1.bf16.msra.mxu0 0
  %2555 = vmatprep.subr.bf16.mxu0 0
  %2556 = vmatpush1.bf16.msra.mxu0 0
  %2557 = vmatprep.subr.bf16.mxu0 0
  %2558 = vmatpush1.bf16.msra.mxu0 0
  %2559 = vmatprep.subr.bf16.mxu0 0
  %2560 = vmatpush1.bf16.msra.mxu0 0
  %2561 = vmatprep.subr.bf16.mxu0 0
  %2562 = vmatpush1.bf16.msra.mxu0 0
  %2563 = vmatprep.subr.bf16.mxu0 0
  %2564 = vmatpush1.bf16.msra.mxu0 0
  %2565 = vmatprep.subr.bf16.mxu0 0
  %2566 = vmatpush1.bf16.msra.mxu0 0
  %2567 = vmatprep.subr.bf16.mxu0 0
  %2568 = vmatpush1.bf16.msra.mxu0 0
  %2569 = vmatprep.subr.bf16.mxu0 0
  %2570 = vmatpush1.bf16.msra.mxu0 0
  %2571 = vmatprep.subr.bf16.mxu0 0
  %2572 = vmatpush1.bf16.msra.mxu0 0
  %2573 = vmatprep.subr.bf16.mxu0 0
  %2574 = vmatpush1.bf16.msra.mxu0 0
  %2575 = vmatprep.mubr.bf16.mxu0 0
  %2576 = vmatmul.mubr.bf16.gmra.mrb[0].mxu0 %v2541
  %v2577 = vpop.f32.mrb[0].mxu0
  %v2578 = vadd.f32 %v353, %v2577
  %v2579 = vpop.f32.mrb[0].mxu0
  %v2580 = vpop.f32.mrb[0].mxu0
  %v2581 = vpop.f32.mrb[0].mxu0
  %2582 = vdwg.mxu0
  %s2583 = scalar_lea.vmem %s0, 48
  %v2584 = vld [vmem:[%s2583] sm:$0xff]
  %v2585 = vmul.f32 %v2578, %v2578
  %2587 = vrot.lane.b32.xlu0 %v2585, 112
  %v2588 = vpop.permute.xlu0 %2587
  %v2590 = vsel %vm418, %v2588, 0.0
  %2591 = vadd.xlane.f32.xlu0 %v2590
  %v2592 = vpop.xlane.xlu0 %2591
  %v2593 = vmul.f32 %v2592, 0.05
  %v2594 = vadd.f32 %v2237, %v2593
  %v2595 = vmul.f32 %v2578, %v2584
  %v2596 = vsel %vm69, %v2595, 0.0
  %2597 = vadd.xlane.f32.xlu0 %v2596
  %v2598 = vpop.xlane.xlu0 %2597
  %v2599 = vadd.f32 %v2594, %v2598
  %2601 = vrot.lane.b32.xlu0 %v2578, 108
  %v2602 = vpop.permute.xlu0 %2601
  %v2605 = vsel %vm69, %v2315, 0
  %2607 = vmatprep.subr.mxu0 0.0
  %2608 = vmatpush1.msra.mxu0 %v35
  %2609 = vmatprep.subr.mxu0 0.0
  %2610 = vmatpush1.msra.mxu0 0.0
  %2611 = vmatprep.subr.mxu0 0.0
  %2612 = vmatpush1.msra.mxu0 0.0
  %2613 = vmatprep.subr.mxu0 0.0
  %2614 = vmatpush1.msra.mxu0 0.0
  %2615 = vmatprep.subr.mxu0 0.0
  %2616 = vmatpush1.msra.mxu0 0.0
  %2617 = vmatprep.subr.mxu0 0.0
  %2618 = vmatpush1.msra.mxu0 0.0
  %2619 = vmatprep.subr.mxu0 0.0
  %2620 = vmatpush1.msra.mxu0 0.0
  %2621 = vmatprep.subr.mxu0 0.0
  %2622 = vmatpush1.msra.mxu0 0.0
  %2623 = vmatprep.subr.mxu0 0.0
  %2624 = vmatpush1.msra.mxu0 0.0
  %2625 = vmatprep.subr.mxu0 0.0
  %2626 = vmatpush1.msra.mxu0 0.0
  %2627 = vmatprep.subr.mxu0 0.0
  %2628 = vmatpush1.msra.mxu0 0.0
  %2629 = vmatprep.subr.mxu0 0.0
  %2630 = vmatpush1.msra.mxu0 0.0
  %2631 = vmatprep.subr.mxu0 0.0
  %2632 = vmatpush1.msra.mxu0 0.0
  %2633 = vmatprep.subr.mxu0 0.0
  %2634 = vmatpush1.msra.mxu0 0.0
  %2635 = vmatprep.subr.mxu0 0.0
  %2636 = vmatpush1.msra.mxu0 0.0
  %2637 = vmatprep.subr.mxu0 0.0
  %2638 = vmatpush1.msra.mxu0 0.0
  %2639 = vmatprep.subr.mxu0 0.0
  %2640 = vmatpush1.msra.mxu0 0.0
  %2641 = vmatprep.subr.mxu0 0.0
  %2642 = vmatpush1.msra.mxu0 0.0
  %2643 = vmatprep.subr.mxu0 0.0
  %2644 = vmatpush1.msra.mxu0 0.0
  %2645 = vmatprep.subr.mxu0 0.0
  %2646 = vmatpush1.msra.mxu0 0.0
  %2647 = vmatprep.subr.mxu0 0.0
  %2648 = vmatpush1.msra.mxu0 0.0
  %2649 = vmatprep.subr.mxu0 0.0
  %2650 = vmatpush1.msra.mxu0 0.0
  %2651 = vmatprep.subr.mxu0 0.0
  %2652 = vmatpush1.msra.mxu0 0.0
  %2653 = vmatprep.subr.mxu0 0.0
  %2654 = vmatpush1.msra.mxu0 0.0
  %2655 = vmatprep.subr.mxu0 0.0
  %2656 = vmatpush1.msra.mxu0 0.0
  %2657 = vmatprep.subr.mxu0 0.0
  %2658 = vmatpush1.msra.mxu0 0.0
  %2659 = vmatprep.subr.mxu0 0.0
  %2660 = vmatpush1.msra.mxu0 0.0
  %2661 = vmatprep.subr.mxu0 0.0
  %2662 = vmatpush1.msra.mxu0 0.0
  %2663 = vmatprep.subr.mxu0 0.0
  %2664 = vmatpush1.msra.mxu0 0.0
  %2665 = vmatprep.subr.mxu0 0.0
  %2666 = vmatpush1.msra.mxu0 0.0
  %2667 = vmatprep.subr.mxu0 0.0
  %2668 = vmatpush1.msra.mxu0 0.0
  %2669 = vmatprep.subr.mxu0 0.0
  %2670 = vmatpush1.msra.mxu0 0.0
  %2671 = vmatprep.mubr.f32.mxu0 0.0
  %2672 = vmatmul.mubr.f32.gmra.mrb[0].mxu0 %v2605
  %v2673 = vpop.f32.mrb[0].mxu0
  %v2674 = vadd.f32 %v2602, %v2673
  %v2675 = vpop.f32.mrb[0].mxu0
  %2676 = vdwg.mxu0
  %v2677 = vadd.f32 %v2674, %v2584
  %s2678 = scalar_lea.vmem %s4, 56
  %2679 = vst.msk [vmem:[%s2678] sm:$0xff] %vm69, %v2677
  %2680 = vrot.lane.b32.xlu0 %v2578, 112
  %v2681 = vpop.permute.xlu0 %2680
  %s2683 = scalar_lea.vmem %s5, 48
  %2684 = vst.msk [vmem:[%s2683] sm:$0xff] %vm418, %v2681
  %v2685 = vpack.c.bf16 %v2677, %v2677
  %2686 = vmatprep.subr.bf16.mxu0 0
  %2687 = vmatpush1.bf16.msra.mxu0 %v81
  %2688 = vmatprep.subr.bf16.mxu0 0
  %2689 = vmatpush1.bf16.msra.mxu0 %v82
  %2690 = vmatprep.subr.bf16.mxu0 0
  %2691 = vmatpush1.bf16.msra.mxu0 0
  %2692 = vmatprep.subr.bf16.mxu0 0
  %2693 = vmatpush1.bf16.msra.mxu0 0
  %2694 = vmatprep.subr.bf16.mxu0 0
  %2695 = vmatpush1.bf16.msra.mxu0 0
  %2696 = vmatprep.subr.bf16.mxu0 0
  %2697 = vmatpush1.bf16.msra.mxu0 0
  %2698 = vmatprep.subr.bf16.mxu0 0
  %2699 = vmatpush1.bf16.msra.mxu0 0
  %2700 = vmatprep.subr.bf16.mxu0 0
  %2701 = vmatpush1.bf16.msra.mxu0 0
  %2702 = vmatprep.subr.bf16.mxu0 0
  %2703 = vmatpush1.bf16.msra.mxu0 0
  %2704 = vmatprep.subr.bf16.mxu0 0
  %2705 = vmatpush1.bf16.msra.mxu0 0
  %2706 = vmatprep.subr.bf16.mxu0 0
  %2707 = vmatpush1.bf16.msra.mxu0 0
  %2708 = vmatprep.subr.bf16.mxu0 0
  %2709 = vmatpush1.bf16.msra.mxu0 0
  %2710 = vmatprep.subr.bf16.mxu0 0
  %2711 = vmatpush1.bf16.msra.mxu0 0
  %2712 = vmatprep.subr.bf16.mxu0 0
  %2713 = vmatpush1.bf16.msra.mxu0 0
  %2714 = vmatprep.subr.bf16.mxu0 0
  %2715 = vmatpush1.bf16.msra.mxu0 0
  %2716 = vmatprep.subr.bf16.mxu0 0
  %2717 = vmatpush1.bf16.msra.mxu0 0
  %2718 = vmatprep.mubr.bf16.mxu0 0
  %2719 = vmatmul.mubr.bf16.gmra.mrb[0].mxu0 %v2473
  %v2720 = vpop.f32.mrb[0].mxu0
  %v2721 = vadd.f32 0.0, %v2720
  %v2722 = vpop.f32.mrb[0].mxu0
  %v2723 = vpop.f32.mrb[0].mxu0
  %v2724 = vpop.f32.mrb[0].mxu0
  %2725 = vdwg.mxu0
  %v2727 = vsel %vm69, %v2685, 0
  %2729 = vmatprep.subr.bf16.mxu0 0
  %2730 = vmatpush1.bf16.msra.mxu0 %v134
  %2731 = vmatprep.subr.bf16.mxu0 0
  %2732 = vmatpush1.bf16.msra.mxu0 0
  %2733 = vmatprep.subr.bf16.mxu0 0
  %2734 = vmatpush1.bf16.msra.mxu0 0
  %2735 = vmatprep.subr.bf16.mxu0 0
  %2736 = vmatpush1.bf16.msra.mxu0 0
  %2737 = vmatprep.subr.bf16.mxu0 0
  %2738 = vmatpush1.bf16.msra.mxu0 0
  %2739 = vmatprep.subr.bf16.mxu0 0
  %2740 = vmatpush1.bf16.msra.mxu0 0
  %2741 = vmatprep.subr.bf16.mxu0 0
  %2742 = vmatpush1.bf16.msra.mxu0 0
  %2743 = vmatprep.subr.bf16.mxu0 0
  %2744 = vmatpush1.bf16.msra.mxu0 0
  %2745 = vmatprep.subr.bf16.mxu0 0
  %2746 = vmatpush1.bf16.msra.mxu0 0
  %2747 = vmatprep.subr.bf16.mxu0 0
  %2748 = vmatpush1.bf16.msra.mxu0 0
  %2749 = vmatprep.subr.bf16.mxu0 0
  %2750 = vmatpush1.bf16.msra.mxu0 0
  %2751 = vmatprep.subr.bf16.mxu0 0
  %2752 = vmatpush1.bf16.msra.mxu0 0
  %2753 = vmatprep.subr.bf16.mxu0 0
  %2754 = vmatpush1.bf16.msra.mxu0 0
  %2755 = vmatprep.subr.bf16.mxu0 0
  %2756 = vmatpush1.bf16.msra.mxu0 0
  %2757 = vmatprep.subr.bf16.mxu0 0
  %2758 = vmatpush1.bf16.msra.mxu0 0
  %2759 = vmatprep.subr.bf16.mxu0 0
  %2760 = vmatpush1.bf16.msra.mxu0 0
  %2761 = vmatprep.mubr.bf16.mxu0 0
  %2762 = vmatmul.mubr.bf16.gmra.mrb[0].mxu0 %v2727
  %v2763 = vpop.f32.mrb[0].mxu0
  %v2764 = vadd.f32 %v2721, %v2763
  %v2765 = vpop.f32.mrb[0].mxu0
  %v2766 = vpop.f32.mrb[0].mxu0
  %v2767 = vpop.f32.mrb[0].mxu0
  %2768 = vdwg.mxu0
  %v2769 = vadd.f32 %v2764, %v179
  %v2770 = vtanh.pop %v2769
  %v2771 = vmul.f32 %v2770, 0.5
  %v2772 = vadd.f32 %v2771, 0.5
  %v2773 = vmul.f32 %v2772, %v2421
  %2775 = vrot.lane.b32.xlu0 %v2770, 64
  %v2776 = vpop.permute.xlu0 %2775
  %v2778 = vmul.f32 %v2772, %v2776
  %2780 = vrot.lane.b32.xlu0 %v2778, 32
  %v2781 = vpop.permute.xlu0 %2780
  %v2783 = vadd.f32 %v2773, %v2781
  %v2784 = vtanh.pop %v2783
  %2786 = vrot.lane.b32.xlu0 %v2784, 64
  %v2787 = vpop.permute.xlu0 %2786
  %v2789 = vmul.f32 %v2772, %v2787
  %v2790 = vpack.c.bf16 %v2789, %v2789
  %2791 = vmatprep.subr.bf16.mxu0 0
  %2792 = vmatpush1.bf16.msra.mxu0 %v215
  %2793 = vmatprep.subr.bf16.mxu0 0
  %2794 = vmatpush1.bf16.msra.mxu0 %v216
  %2795 = vmatprep.subr.bf16.mxu0 0
  %2796 = vmatpush1.bf16.msra.mxu0 0
  %2797 = vmatprep.subr.bf16.mxu0 0
  %2798 = vmatpush1.bf16.msra.mxu0 0
  %2799 = vmatprep.subr.bf16.mxu0 0
  %2800 = vmatpush1.bf16.msra.mxu0 0
  %2801 = vmatprep.subr.bf16.mxu0 0
  %2802 = vmatpush1.bf16.msra.mxu0 0
  %2803 = vmatprep.subr.bf16.mxu0 0
  %2804 = vmatpush1.bf16.msra.mxu0 0
  %2805 = vmatprep.subr.bf16.mxu0 0
  %2806 = vmatpush1.bf16.msra.mxu0 0
  %2807 = vmatprep.subr.bf16.mxu0 0
  %2808 = vmatpush1.bf16.msra.mxu0 0
  %2809 = vmatprep.subr.bf16.mxu0 0
  %2810 = vmatpush1.bf16.msra.mxu0 0
  %2811 = vmatprep.subr.bf16.mxu0 0
  %2812 = vmatpush1.bf16.msra.mxu0 0
  %2813 = vmatprep.subr.bf16.mxu0 0
  %2814 = vmatpush1.bf16.msra.mxu0 0
  %2815 = vmatprep.subr.bf16.mxu0 0
  %2816 = vmatpush1.bf16.msra.mxu0 0
  %2817 = vmatprep.subr.bf16.mxu0 0
  %2818 = vmatpush1.bf16.msra.mxu0 0
  %2819 = vmatprep.subr.bf16.mxu0 0
  %2820 = vmatpush1.bf16.msra.mxu0 0
  %2821 = vmatprep.subr.bf16.mxu0 0
  %2822 = vmatpush1.bf16.msra.mxu0 0
  %2823 = vmatprep.mubr.bf16.mxu0 0
  %2824 = vmatmul.mubr.bf16.gmra.mrb[0].mxu0 %v2541
  %v2825 = vpop.f32.mrb[0].mxu0
  %v2826 = vadd.f32 0.0, %v2825
  %v2827 = vpop.f32.mrb[0].mxu0
  %v2828 = vpop.f32.mrb[0].mxu0
  %v2829 = vpop.f32.mrb[0].mxu0
  %2830 = vdwg.mxu0
  %2832 = vrot.lane.b32.xlu0 %v2790, 32
  %v2833 = vpop.permute.xlu0 %2832
  %v2835 = vsel %vm85, %v2833, 0
  %2837 = vmatprep.subr.bf16.mxu0 0
  %2838 = vmatpush1.bf16.msra.mxu0 %v273
  %2839 = vmatprep.subr.bf16.mxu0 0
  %2840 = vmatpush1.bf16.msra.mxu0 %v274
  %2841 = vmatprep.subr.bf16.mxu0 0
  %2842 = vmatpush1.bf16.msra.mxu0 0
  %2843 = vmatprep.subr.bf16.mxu0 0
  %2844 = vmatpush1.bf16.msra.mxu0 0
  %2845 = vmatprep.subr.bf16.mxu0 0
  %2846 = vmatpush1.bf16.msra.mxu0 0
  %2847 = vmatprep.subr.bf16.mxu0 0
  %2848 = vmatpush1.bf16.msra.mxu0 0
  %2849 = vmatprep.subr.bf16.mxu0 0
  %2850 = vmatpush1.bf16.msra.mxu0 0
  %2851 = vmatprep.subr.bf16.mxu0 0
  %2852 = vmatpush1.bf16.msra.mxu0 0
  %2853 = vmatprep.subr.bf16.mxu0 0
  %2854 = vmatpush1.bf16.msra.mxu0 0
  %2855 = vmatprep.subr.bf16.mxu0 0
  %2856 = vmatpush1.bf16.msra.mxu0 0
  %2857 = vmatprep.subr.bf16.mxu0 0
  %2858 = vmatpush1.bf16.msra.mxu0 0
  %2859 = vmatprep.subr.bf16.mxu0 0
  %2860 = vmatpush1.bf16.msra.mxu0 0
  %2861 = vmatprep.subr.bf16.mxu0 0
  %2862 = vmatpush1.bf16.msra.mxu0 0
  %2863 = vmatprep.subr.bf16.mxu0 0
  %2864 = vmatpush1.bf16.msra.mxu0 0
  %2865 = vmatprep.subr.bf16.mxu0 0
  %2866 = vmatpush1.bf16.msra.mxu0 0
  %2867 = vmatprep.subr.bf16.mxu0 0
  %2868 = vmatpush1.bf16.msra.mxu0 0
  %2869 = vmatprep.mubr.bf16.mxu0 0
  %2870 = vmatmul.mubr.bf16.gmra.mrb[0].mxu0 %v2835
  %v2871 = vpop.f32.mrb[0].mxu0
  %v2872 = vadd.f32 %v2826, %v2871
  %v2873 = vpop.f32.mrb[0].mxu0
  %v2874 = vpop.f32.mrb[0].mxu0
  %v2875 = vpop.f32.mrb[0].mxu0
  %2876 = vdwg.mxu0
  %v2877 = vadd.f32 %v2872, %v323
  %v2878 = vtanh.pop %v2877
  %v2879 = vmul.f32 %v2878, 0.5
  %v2880 = vadd.f32 %v2879, 0.5
  %v2881 = vmul.f32 %v2880, %v2529
  %2883 = vrot.lane.b32.xlu0 %v2878, 64
  %v2884 = vpop.permute.xlu0 %2883
  %v2886 = vmul.f32 %v2880, %v2884
  %2888 = vrot.lane.b32.xlu0 %v2886, 32
  %v2889 = vpop.permute.xlu0 %2888
  %v2891 = vadd.f32 %v2881, %v2889
  %v2892 = vtanh.pop %v2891
  %2894 = vrot.lane.b32.xlu0 %v2892, 64
  %v2895 = vpop.permute.xlu0 %2894
  %v2897 = vmul.f32 %v2880, %v2895
  %v2898 = vpack.c.bf16 %v2897, %v2897
  %2900 = vrot.lane.b32.xlu0 %v2898, 32
  %v2901 = vpop.permute.xlu0 %2900
  %v2903 = vsel %vm85, %v2901, 0
  %2905 = vmatprep.subr.bf16.mxu0 0
  %2906 = vmatpush1.bf16.msra.mxu0 %v365
  %2907 = vmatprep.subr.bf16.mxu0 0
  %2908 = vmatpush1.bf16.msra.mxu0 %v366
  %2909 = vmatprep.subr.bf16.mxu0 0
  %2910 = vmatpush1.bf16.msra.mxu0 0
  %2911 = vmatprep.subr.bf16.mxu0 0
  %2912 = vmatpush1.bf16.msra.mxu0 0
  %2913 = vmatprep.subr.bf16.mxu0 0
  %2914 = vmatpush1.bf16.msra.mxu0 0
  %2915 = vmatprep.subr.bf16.mxu0 0
  %2916 = vmatpush1.bf16.msra.mxu0 0
  %2917 = vmatprep.subr.bf16.mxu0 0
  %2918 = vmatpush1.bf16.msra.mxu0 0
  %2919 = vmatprep.subr.bf16.mxu0 0
  %2920 = vmatpush1.bf16.msra.mxu0 0
  %2921 = vmatprep.subr.bf16.mxu0 0
  %2922 = vmatpush1.bf16.msra.mxu0 0
  %2923 = vmatprep.subr.bf16.mxu0 0
  %2924 = vmatpush1.bf16.msra.mxu0 0
  %2925 = vmatprep.subr.bf16.mxu0 0
  %2926 = vmatpush1.bf16.msra.mxu0 0
  %2927 = vmatprep.subr.bf16.mxu0 0
  %2928 = vmatpush1.bf16.msra.mxu0 0
  %2929 = vmatprep.subr.bf16.mxu0 0
  %2930 = vmatpush1.bf16.msra.mxu0 0
  %2931 = vmatprep.subr.bf16.mxu0 0
  %2932 = vmatpush1.bf16.msra.mxu0 0
  %2933 = vmatprep.subr.bf16.mxu0 0
  %2934 = vmatpush1.bf16.msra.mxu0 0
  %2935 = vmatprep.subr.bf16.mxu0 0
  %2936 = vmatpush1.bf16.msra.mxu0 0
  %2937 = vmatprep.mubr.bf16.mxu0 0
  %2938 = vmatmul.mubr.bf16.gmra.mrb[0].mxu0 %v2903
  %v2939 = vpop.f32.mrb[0].mxu0
  %v2940 = vadd.f32 %v353, %v2939
  %v2941 = vpop.f32.mrb[0].mxu0
  %v2942 = vpop.f32.mrb[0].mxu0
  %v2943 = vpop.f32.mrb[0].mxu0
  %2944 = vdwg.mxu0
  %s2945 = scalar_lea.vmem %s0, 56
  %v2946 = vld [vmem:[%s2945] sm:$0xff]
  %v2947 = vmul.f32 %v2940, %v2940
  %2949 = vrot.lane.b32.xlu0 %v2947, 112
  %v2950 = vpop.permute.xlu0 %2949
  %v2952 = vsel %vm418, %v2950, 0.0
  %2953 = vadd.xlane.f32.xlu0 %v2952
  %v2954 = vpop.xlane.xlu0 %2953
  %v2955 = vmul.f32 %v2954, 0.05
  %v2956 = vadd.f32 %v2599, %v2955
  %v2957 = vmul.f32 %v2940, %v2946
  %v2958 = vsel %vm69, %v2957, 0.0
  %2959 = vadd.xlane.f32.xlu0 %v2958
  %v2960 = vpop.xlane.xlu0 %2959
  %v2961 = vadd.f32 %v2956, %v2960
  %2963 = vrot.lane.b32.xlu0 %v2940, 108
  %v2964 = vpop.permute.xlu0 %2963
  %v2967 = vsel %vm69, %v2677, 0
  %2969 = vmatprep.subr.mxu0 0.0
  %2970 = vmatpush1.msra.mxu0 %v35
  %2971 = vmatprep.subr.mxu0 0.0
  %2972 = vmatpush1.msra.mxu0 0.0
  %2973 = vmatprep.subr.mxu0 0.0
  %2974 = vmatpush1.msra.mxu0 0.0
  %2975 = vmatprep.subr.mxu0 0.0
  %2976 = vmatpush1.msra.mxu0 0.0
  %2977 = vmatprep.subr.mxu0 0.0
  %2978 = vmatpush1.msra.mxu0 0.0
  %2979 = vmatprep.subr.mxu0 0.0
  %2980 = vmatpush1.msra.mxu0 0.0
  %2981 = vmatprep.subr.mxu0 0.0
  %2982 = vmatpush1.msra.mxu0 0.0
  %2983 = vmatprep.subr.mxu0 0.0
  %2984 = vmatpush1.msra.mxu0 0.0
  %2985 = vmatprep.subr.mxu0 0.0
  %2986 = vmatpush1.msra.mxu0 0.0
  %2987 = vmatprep.subr.mxu0 0.0
  %2988 = vmatpush1.msra.mxu0 0.0
  %2989 = vmatprep.subr.mxu0 0.0
  %2990 = vmatpush1.msra.mxu0 0.0
  %2991 = vmatprep.subr.mxu0 0.0
  %2992 = vmatpush1.msra.mxu0 0.0
  %2993 = vmatprep.subr.mxu0 0.0
  %2994 = vmatpush1.msra.mxu0 0.0
  %2995 = vmatprep.subr.mxu0 0.0
  %2996 = vmatpush1.msra.mxu0 0.0
  %2997 = vmatprep.subr.mxu0 0.0
  %2998 = vmatpush1.msra.mxu0 0.0
  %2999 = vmatprep.subr.mxu0 0.0
  %3000 = vmatpush1.msra.mxu0 0.0
  %3001 = vmatprep.subr.mxu0 0.0
  %3002 = vmatpush1.msra.mxu0 0.0
  %3003 = vmatprep.subr.mxu0 0.0
  %3004 = vmatpush1.msra.mxu0 0.0
  %3005 = vmatprep.subr.mxu0 0.0
  %3006 = vmatpush1.msra.mxu0 0.0
  %3007 = vmatprep.subr.mxu0 0.0
  %3008 = vmatpush1.msra.mxu0 0.0
  %3009 = vmatprep.subr.mxu0 0.0
  %3010 = vmatpush1.msra.mxu0 0.0
  %3011 = vmatprep.subr.mxu0 0.0
  %3012 = vmatpush1.msra.mxu0 0.0
  %3013 = vmatprep.subr.mxu0 0.0
  %3014 = vmatpush1.msra.mxu0 0.0
  %3015 = vmatprep.subr.mxu0 0.0
  %3016 = vmatpush1.msra.mxu0 0.0
  %3017 = vmatprep.subr.mxu0 0.0
  %3018 = vmatpush1.msra.mxu0 0.0
  %3019 = vmatprep.subr.mxu0 0.0
  %3020 = vmatpush1.msra.mxu0 0.0
  %3021 = vmatprep.subr.mxu0 0.0
  %3022 = vmatpush1.msra.mxu0 0.0
  %3023 = vmatprep.subr.mxu0 0.0
  %3024 = vmatpush1.msra.mxu0 0.0
  %3025 = vmatprep.subr.mxu0 0.0
  %3026 = vmatpush1.msra.mxu0 0.0
  %3027 = vmatprep.subr.mxu0 0.0
  %3028 = vmatpush1.msra.mxu0 0.0
  %3029 = vmatprep.subr.mxu0 0.0
  %3030 = vmatpush1.msra.mxu0 0.0
  %3031 = vmatprep.subr.mxu0 0.0
  %3032 = vmatpush1.msra.mxu0 0.0
  %3033 = vmatprep.mubr.f32.mxu0 0.0
  %3034 = vmatmul.mubr.f32.gmra.mrb[0].mxu0 %v2967
  %v3035 = vpop.f32.mrb[0].mxu0
  %v3036 = vadd.f32 %v2964, %v3035
  %v3037 = vpop.f32.mrb[0].mxu0
  %3038 = vdwg.mxu0
  %v3039 = vadd.f32 %v3036, %v2946
  %s3040 = scalar_lea.vmem %s4, 64
  %3041 = vst.msk [vmem:[%s3040] sm:$0xff] %vm69, %v3039
  %3042 = vrot.lane.b32.xlu0 %v2940, 112
  %v3043 = vpop.permute.xlu0 %3042
  %s3045 = scalar_lea.vmem %s5, 56
  %3046 = vst.msk [vmem:[%s3045] sm:$0xff] %vm418, %v3043
  %v3047 = vpack.c.bf16 %v3039, %v3039
  %3048 = vmatprep.subr.bf16.mxu0 0
  %3049 = vmatpush1.bf16.msra.mxu0 %v81
  %3050 = vmatprep.subr.bf16.mxu0 0
  %3051 = vmatpush1.bf16.msra.mxu0 %v82
  %3052 = vmatprep.subr.bf16.mxu0 0
  %3053 = vmatpush1.bf16.msra.mxu0 0
  %3054 = vmatprep.subr.bf16.mxu0 0
  %3055 = vmatpush1.bf16.msra.mxu0 0
  %3056 = vmatprep.subr.bf16.mxu0 0
  %3057 = vmatpush1.bf16.msra.mxu0 0
  %3058 = vmatprep.subr.bf16.mxu0 0
  %3059 = vmatpush1.bf16.msra.mxu0 0
  %3060 = vmatprep.subr.bf16.mxu0 0
  %3061 = vmatpush1.bf16.msra.mxu0 0
  %3062 = vmatprep.subr.bf16.mxu0 0
  %3063 = vmatpush1.bf16.msra.mxu0 0
  %3064 = vmatprep.subr.bf16.mxu0 0
  %3065 = vmatpush1.bf16.msra.mxu0 0
  %3066 = vmatprep.subr.bf16.mxu0 0
  %3067 = vmatpush1.bf16.msra.mxu0 0
  %3068 = vmatprep.subr.bf16.mxu0 0
  %3069 = vmatpush1.bf16.msra.mxu0 0
  %3070 = vmatprep.subr.bf16.mxu0 0
  %3071 = vmatpush1.bf16.msra.mxu0 0
  %3072 = vmatprep.subr.bf16.mxu0 0
  %3073 = vmatpush1.bf16.msra.mxu0 0
  %3074 = vmatprep.subr.bf16.mxu0 0
  %3075 = vmatpush1.bf16.msra.mxu0 0
  %3076 = vmatprep.subr.bf16.mxu0 0
  %3077 = vmatpush1.bf16.msra.mxu0 0
  %3078 = vmatprep.subr.bf16.mxu0 0
  %3079 = vmatpush1.bf16.msra.mxu0 0
  %3080 = vmatprep.mubr.bf16.mxu0 0
  %3081 = vmatmul.mubr.bf16.gmra.mrb[0].mxu0 %v2835
  %v3082 = vpop.f32.mrb[0].mxu0
  %v3083 = vadd.f32 0.0, %v3082
  %v3084 = vpop.f32.mrb[0].mxu0
  %v3085 = vpop.f32.mrb[0].mxu0
  %v3086 = vpop.f32.mrb[0].mxu0
  %3087 = vdwg.mxu0
  %v3089 = vsel %vm69, %v3047, 0
  %3091 = vmatprep.subr.bf16.mxu0 0
  %3092 = vmatpush1.bf16.msra.mxu0 %v134
  %3093 = vmatprep.subr.bf16.mxu0 0
  %3094 = vmatpush1.bf16.msra.mxu0 0
  %3095 = vmatprep.subr.bf16.mxu0 0
  %3096 = vmatpush1.bf16.msra.mxu0 0
  %3097 = vmatprep.subr.bf16.mxu0 0
  %3098 = vmatpush1.bf16.msra.mxu0 0
  %3099 = vmatprep.subr.bf16.mxu0 0
  %3100 = vmatpush1.bf16.msra.mxu0 0
  %3101 = vmatprep.subr.bf16.mxu0 0
  %3102 = vmatpush1.bf16.msra.mxu0 0
  %3103 = vmatprep.subr.bf16.mxu0 0
  %3104 = vmatpush1.bf16.msra.mxu0 0
  %3105 = vmatprep.subr.bf16.mxu0 0
  %3106 = vmatpush1.bf16.msra.mxu0 0
  %3107 = vmatprep.subr.bf16.mxu0 0
  %3108 = vmatpush1.bf16.msra.mxu0 0
  %3109 = vmatprep.subr.bf16.mxu0 0
  %3110 = vmatpush1.bf16.msra.mxu0 0
  %3111 = vmatprep.subr.bf16.mxu0 0
  %3112 = vmatpush1.bf16.msra.mxu0 0
  %3113 = vmatprep.subr.bf16.mxu0 0
  %3114 = vmatpush1.bf16.msra.mxu0 0
  %3115 = vmatprep.subr.bf16.mxu0 0
  %3116 = vmatpush1.bf16.msra.mxu0 0
  %3117 = vmatprep.subr.bf16.mxu0 0
  %3118 = vmatpush1.bf16.msra.mxu0 0
  %3119 = vmatprep.subr.bf16.mxu0 0
  %3120 = vmatpush1.bf16.msra.mxu0 0
  %3121 = vmatprep.subr.bf16.mxu0 0
  %3122 = vmatpush1.bf16.msra.mxu0 0
  %3123 = vmatprep.mubr.bf16.mxu0 0
  %3124 = vmatmul.mubr.bf16.gmra.mrb[0].mxu0 %v3089
  %v3125 = vpop.f32.mrb[0].mxu0
  %v3126 = vadd.f32 %v3083, %v3125
  %v3127 = vpop.f32.mrb[0].mxu0
  %v3128 = vpop.f32.mrb[0].mxu0
  %v3129 = vpop.f32.mrb[0].mxu0
  %3130 = vdwg.mxu0
  %v3131 = vadd.f32 %v3126, %v179
  %v3132 = vtanh.pop %v3131
  %v3133 = vmul.f32 %v3132, 0.5
  %v3134 = vadd.f32 %v3133, 0.5
  %v3135 = vmul.f32 %v3134, %v2783
  %3137 = vrot.lane.b32.xlu0 %v3132, 64
  %v3138 = vpop.permute.xlu0 %3137
  %v3140 = vmul.f32 %v3134, %v3138
  %3142 = vrot.lane.b32.xlu0 %v3140, 32
  %v3143 = vpop.permute.xlu0 %3142
  %v3145 = vadd.f32 %v3135, %v3143
  %v3146 = vtanh.pop %v3145
  %3148 = vrot.lane.b32.xlu0 %v3146, 64
  %v3149 = vpop.permute.xlu0 %3148
  %v3151 = vmul.f32 %v3134, %v3149
  %v3152 = vpack.c.bf16 %v3151, %v3151
  %3153 = vmatprep.subr.bf16.mxu0 0
  %3154 = vmatpush1.bf16.msra.mxu0 %v215
  %3155 = vmatprep.subr.bf16.mxu0 0
  %3156 = vmatpush1.bf16.msra.mxu0 %v216
  %3157 = vmatprep.subr.bf16.mxu0 0
  %3158 = vmatpush1.bf16.msra.mxu0 0
  %3159 = vmatprep.subr.bf16.mxu0 0
  %3160 = vmatpush1.bf16.msra.mxu0 0
  %3161 = vmatprep.subr.bf16.mxu0 0
  %3162 = vmatpush1.bf16.msra.mxu0 0
  %3163 = vmatprep.subr.bf16.mxu0 0
  %3164 = vmatpush1.bf16.msra.mxu0 0
  %3165 = vmatprep.subr.bf16.mxu0 0
  %3166 = vmatpush1.bf16.msra.mxu0 0
  %3167 = vmatprep.subr.bf16.mxu0 0
  %3168 = vmatpush1.bf16.msra.mxu0 0
  %3169 = vmatprep.subr.bf16.mxu0 0
  %3170 = vmatpush1.bf16.msra.mxu0 0
  %3171 = vmatprep.subr.bf16.mxu0 0
  %3172 = vmatpush1.bf16.msra.mxu0 0
  %3173 = vmatprep.subr.bf16.mxu0 0
  %3174 = vmatpush1.bf16.msra.mxu0 0
  %3175 = vmatprep.subr.bf16.mxu0 0
  %3176 = vmatpush1.bf16.msra.mxu0 0
  %3177 = vmatprep.subr.bf16.mxu0 0
  %3178 = vmatpush1.bf16.msra.mxu0 0
  %3179 = vmatprep.subr.bf16.mxu0 0
  %3180 = vmatpush1.bf16.msra.mxu0 0
  %3181 = vmatprep.subr.bf16.mxu0 0
  %3182 = vmatpush1.bf16.msra.mxu0 0
  %3183 = vmatprep.subr.bf16.mxu0 0
  %3184 = vmatpush1.bf16.msra.mxu0 0
  %3185 = vmatprep.mubr.bf16.mxu0 0
  %3186 = vmatmul.mubr.bf16.gmra.mrb[0].mxu0 %v2903
  %v3187 = vpop.f32.mrb[0].mxu0
  %v3188 = vadd.f32 0.0, %v3187
  %v3189 = vpop.f32.mrb[0].mxu0
  %v3190 = vpop.f32.mrb[0].mxu0
  %v3191 = vpop.f32.mrb[0].mxu0
  %3192 = vdwg.mxu0
  %3194 = vrot.lane.b32.xlu0 %v3152, 32
  %v3195 = vpop.permute.xlu0 %3194
  %v3197 = vsel %vm85, %v3195, 0
  %3199 = vmatprep.subr.bf16.mxu0 0
  %3200 = vmatpush1.bf16.msra.mxu0 %v273
  %3201 = vmatprep.subr.bf16.mxu0 0
  %3202 = vmatpush1.bf16.msra.mxu0 %v274
  %3203 = vmatprep.subr.bf16.mxu0 0
  %3204 = vmatpush1.bf16.msra.mxu0 0
  %3205 = vmatprep.subr.bf16.mxu0 0
  %3206 = vmatpush1.bf16.msra.mxu0 0
  %3207 = vmatprep.subr.bf16.mxu0 0
  %3208 = vmatpush1.bf16.msra.mxu0 0
  %3209 = vmatprep.subr.bf16.mxu0 0
  %3210 = vmatpush1.bf16.msra.mxu0 0
  %3211 = vmatprep.subr.bf16.mxu0 0
  %3212 = vmatpush1.bf16.msra.mxu0 0
  %3213 = vmatprep.subr.bf16.mxu0 0
  %3214 = vmatpush1.bf16.msra.mxu0 0
  %3215 = vmatprep.subr.bf16.mxu0 0
  %3216 = vmatpush1.bf16.msra.mxu0 0
  %3217 = vmatprep.subr.bf16.mxu0 0
  %3218 = vmatpush1.bf16.msra.mxu0 0
  %3219 = vmatprep.subr.bf16.mxu0 0
  %3220 = vmatpush1.bf16.msra.mxu0 0
  %3221 = vmatprep.subr.bf16.mxu0 0
  %3222 = vmatpush1.bf16.msra.mxu0 0
  %3223 = vmatprep.subr.bf16.mxu0 0
  %3224 = vmatpush1.bf16.msra.mxu0 0
  %3225 = vmatprep.subr.bf16.mxu0 0
  %3226 = vmatpush1.bf16.msra.mxu0 0
  %3227 = vmatprep.subr.bf16.mxu0 0
  %3228 = vmatpush1.bf16.msra.mxu0 0
  %3229 = vmatprep.subr.bf16.mxu0 0
  %3230 = vmatpush1.bf16.msra.mxu0 0
  %3231 = vmatprep.mubr.bf16.mxu0 0
  %3232 = vmatmul.mubr.bf16.gmra.mrb[0].mxu0 %v3197
  %v3233 = vpop.f32.mrb[0].mxu0
  %v3234 = vadd.f32 %v3188, %v3233
  %v3235 = vpop.f32.mrb[0].mxu0
  %v3236 = vpop.f32.mrb[0].mxu0
  %v3237 = vpop.f32.mrb[0].mxu0
  %3238 = vdwg.mxu0
  %v3239 = vadd.f32 %v3234, %v323
  %v3240 = vtanh.pop %v3239
  %v3241 = vmul.f32 %v3240, 0.5
  %v3242 = vadd.f32 %v3241, 0.5
  %v3243 = vmul.f32 %v3242, %v2891
  %3245 = vrot.lane.b32.xlu0 %v3240, 64
  %v3246 = vpop.permute.xlu0 %3245
  %v3248 = vmul.f32 %v3242, %v3246
  %3250 = vrot.lane.b32.xlu0 %v3248, 32
  %v3251 = vpop.permute.xlu0 %3250
  %v3253 = vadd.f32 %v3243, %v3251
  %v3254 = vtanh.pop %v3253
  %3256 = vrot.lane.b32.xlu0 %v3254, 64
  %v3257 = vpop.permute.xlu0 %3256
  %v3259 = vmul.f32 %v3242, %v3257
  %v3260 = vpack.c.bf16 %v3259, %v3259
  %3262 = vrot.lane.b32.xlu0 %v3260, 32
  %v3263 = vpop.permute.xlu0 %3262
  %v3265 = vsel %vm85, %v3263, 0
  %3267 = vmatprep.subr.bf16.mxu0 0
  %3268 = vmatpush1.bf16.msra.mxu0 %v365
  %3269 = vmatprep.subr.bf16.mxu0 0
  %3270 = vmatpush1.bf16.msra.mxu0 %v366
  %3271 = vmatprep.subr.bf16.mxu0 0
  %3272 = vmatpush1.bf16.msra.mxu0 0
  %3273 = vmatprep.subr.bf16.mxu0 0
  %3274 = vmatpush1.bf16.msra.mxu0 0
  %3275 = vmatprep.subr.bf16.mxu0 0
  %3276 = vmatpush1.bf16.msra.mxu0 0
  %3277 = vmatprep.subr.bf16.mxu0 0
  %3278 = vmatpush1.bf16.msra.mxu0 0
  %3279 = vmatprep.subr.bf16.mxu0 0
  %3280 = vmatpush1.bf16.msra.mxu0 0
  %3281 = vmatprep.subr.bf16.mxu0 0
  %3282 = vmatpush1.bf16.msra.mxu0 0
  %3283 = vmatprep.subr.bf16.mxu0 0
  %3284 = vmatpush1.bf16.msra.mxu0 0
  %3285 = vmatprep.subr.bf16.mxu0 0
  %3286 = vmatpush1.bf16.msra.mxu0 0
  %3287 = vmatprep.subr.bf16.mxu0 0
  %3288 = vmatpush1.bf16.msra.mxu0 0
  %3289 = vmatprep.subr.bf16.mxu0 0
  %3290 = vmatpush1.bf16.msra.mxu0 0
  %3291 = vmatprep.subr.bf16.mxu0 0
  %3292 = vmatpush1.bf16.msra.mxu0 0
  %3293 = vmatprep.subr.bf16.mxu0 0
  %3294 = vmatpush1.bf16.msra.mxu0 0
  %3295 = vmatprep.subr.bf16.mxu0 0
  %3296 = vmatpush1.bf16.msra.mxu0 0
  %3297 = vmatprep.subr.bf16.mxu0 0
  %3298 = vmatpush1.bf16.msra.mxu0 0
  %3299 = vmatprep.mubr.bf16.mxu0 0
  %3300 = vmatmul.mubr.bf16.gmra.mrb[0].mxu0 %v3265
  %v3301 = vpop.f32.mrb[0].mxu0
  %v3302 = vadd.f32 %v353, %v3301
  %v3303 = vpop.f32.mrb[0].mxu0
  %v3304 = vpop.f32.mrb[0].mxu0
  %v3305 = vpop.f32.mrb[0].mxu0
  %3306 = vdwg.mxu0
  %3308 = vrot.lane.b32.xlu0 %v3302, 8
  %v3309 = vpop.permute.xlu0 %3308
  %3312 = vrot.lane.b32.xlu0 %v2961, 24
  %v3313 = vpop.permute.xlu0 %3312
  %v3315 = vsel %vm69, %v3039, %v3309
  %vm3316 = vcmask 130048
  %v3317 = vsel %vm3316, %v3315, %v3309
  %vm3318 = vcmask 195584
  %v3319 = vsel %vm3318, %v3317, %v3313
  %vm3320 = vcmask 203776
  %3321 = vst.msk [vmem:[%s3] sm:$0xff] %vm3320, %v3319
  // Predicated region
  $region14: #{fbsde_forward.1} parent=0 // pred_check
    _
  $region15: #{fbsde_forward.1} parent=0 // pred_check_branch
    %3323 = sbr.rel (0) target = $region17
  $region16: #{fbsde_forward.1} parent=0 // pred_region
    _
  $region17: #{fbsde_forward.1} parent=0 // pred_fallthru
    _
  // Predicated region
  $region18: #{fbsde_forward.1} parent=0 // pred_check
    _
  $region19: #{fbsde_forward.1} parent=0 // pred_check_branch
    %3325 = sbr.rel (0) target = $region21
  $region20: #{fbsde_forward.1} parent=0 // pred_region
    _
  $region21: #{fbsde_forward.1} parent=0 // pred_fallthru
    _
  // Predicated region
  $region22: #{fbsde_forward.1} parent=0 // pred_check
    _
  $region23: #{fbsde_forward.1} parent=0 // pred_check_branch
    %3327 = sbr.rel (0) target = $region25
  $region24: #{fbsde_forward.1} parent=0 // pred_region
    _
  $region25: #{fbsde_forward.1} parent=0 // pred_fallthru
    _
  // Predicated region
  $region26: #{fbsde_forward.1} parent=0 // pred_check
    _
  $region27: #{fbsde_forward.1} parent=0 // pred_check_branch
    %3329 = sbr.rel (0) target = $region29
  $region28: #{fbsde_forward.1} parent=0 // pred_region
    _
  $region29: #{fbsde_forward.1} parent=0 // pred_fallthru
    _
  // Predicated region
  $region30: #{fbsde_forward.1} parent=0 // pred_check
    _
  $region31: #{fbsde_forward.1} parent=0 // pred_check_branch
    %3331 = sbr.rel (0) target = $region33
  $region32: #{fbsde_forward.1} parent=0 // pred_region
    _
  $region33: #{fbsde_forward.1} parent=0 // pred_fallthru
    _
  // Predicated region
  $region34: #{fbsde_forward.1} parent=0 // pred_check
    _
  $region35: #{fbsde_forward.1} parent=0 // pred_check_branch
    %3333 = sbr.rel (0) target = $region37
  $region36: #{fbsde_forward.1} parent=0 // pred_region
    _
  $region37: #{fbsde_forward.1} parent=0 // pred_fallthru
    _

</llo_original>
